<compile_context>
chip_gen: v5e
topology: v5e:2x2
jax: 0.10.0
libtpu: 0.0.40
codegen_flags: <defaults>
</compile_context>

<pallas_src>
import jax
import jax.numpy as jnp
from jax.experimental import pallas as pl
from jax.experimental.pallas import tpu as pltpu

# ----------------------------- model config ---------------------------------
BATCH = 2
SEQ = 8
HIDDEN = 32
NUM_HEADS = 4
HEAD_DIM = HIDDEN // NUM_HEADS
INTERMEDIATE = 64
NUM_LAYERS = 2
VOCAB = 100
MAX_POS = 16
NUM_CLASSES = 3
CLASSES_PAD = 128          # lane-dense width for the classifier output store
LN_EPS = 1e-12             # BERT default


# ----------------------------- kernel helpers --------------------------------
def _layernorm(x, gamma, beta):
    mean = jnp.mean(x, axis=-1, keepdims=True)
    c = x - mean
    var = jnp.mean(c * c, axis=-1, keepdims=True)
    return c * jax.lax.rsqrt(var + LN_EPS) * gamma + beta


def _gelu(x):
    # TODO(synk): HF BERT uses exact erf-GELU; tanh approximation used here
    # since erf lowering is not guaranteed in Mosaic.
    c = jnp.float32(0.7978845608028654)  # sqrt(2/pi)
    return 0.5 * x * (1.0 + jnp.tanh(c * (x + 0.044715 * x * x * x)))


# ----------------------------- fused model kernel ----------------------------
def _roberta_kernel(emb_ref, maskb_ref, embln_ref,
                    wqkv_ref, bqkv_ref, wo_ref, bo_ref, ln1_ref,
                    wi_ref, bi_ref, wf_ref, bf_ref, ln2_ref,
                    wp_ref, bp_ref, wc_ref, bc_ref,
                    out_ref):
    f32 = jnp.float32
    scale = f32(1.0 / (HEAD_DIM ** 0.5))

    # Embedding LayerNorm.
    embln = embln_ref[...]
    x = _layernorm(emb_ref[...].astype(f32), embln[0:1, :], embln[1:2, :])

    # Encoder layers (static unroll: NUM_LAYERS == 2).
    for l in range(NUM_LAYERS):
        wqkv = wqkv_ref[l]        # [H, 3H]
        bqkv = bqkv_ref[l]        # [1, 3H]
        wo = wo_ref[l]            # [H, H]
        bo = bo_ref[l]            # [1, H]
        ln1 = ln1_ref[l]          # [2, H] (gamma, beta)
        wi = wi_ref[l]            # [H, I]
        bi = bi_ref[l]            # [1, I]
        wf = wf_ref[l]            # [I, H]
        bf = bf_ref[l]            # [1, H]
        ln2 = ln2_ref[l]          # [2, H]

        # Fused Q/K/V projection: one [M, H] @ [H, 3H] matmul.
        qkv = jnp.dot(x, wqkv, preferred_element_type=f32) + bqkv   # [M, 3H]

        # Attention + output projection, per (batch, head).  Heads are static
        # column slices — no head-split transposes.
        attn_rows = []
        for b in range(BATCH):
            rows = slice(b * SEQ, (b + 1) * SEQ)
            qb = qkv[rows, 0 * HIDDEN:1 * HIDDEN]                   # [S, H]
            kb = qkv[rows, 1 * HIDDEN:2 * HIDDEN]
            vb = qkv[rows, 2 * HIDDEN:3 * HIDDEN]
            bias = maskb_ref[b:b + 1, :]                            # [1, S]
            acc = None
            for h in range(NUM_HEADS):
                cols = slice(h * HEAD_DIM, (h + 1) * HEAD_DIM)
                qh = qb[:, cols]                                    # [S, Dh]
                kh = kb[:, cols]
                vh = vb[:, cols]
                # scores = qh @ kh^T  (contract last dims on both sides)
                s = jax.lax.dot_general(
                    qh, kh, (((1,), (1,)), ((), ())),
                    preferred_element_type=f32) * scale + bias      # [S, S]
                s = s - jnp.max(s, axis=-1, keepdims=True)
                p = jnp.exp(s)
                p = p * pl.reciprocal(
                    jnp.sum(p, axis=-1, keepdims=True), approx=True)
                ch = jnp.dot(p, vh, preferred_element_type=f32)     # [S, Dh]
                # Fold the output projection: ctx_h @ Wo[h*Dh:(h+1)*Dh, :]
                contrib = jnp.dot(ch, wo[cols, :],
                                  preferred_element_type=f32)       # [S, H]
                acc = contrib if acc is None else acc + contrib
            attn_rows.append(acc)
        attn_out = jnp.concatenate(attn_rows, axis=0) + bo          # [M, H]
        x = _layernorm(attn_out + x, ln1[0:1, :], ln1[1:2, :])

        # FFN: wi + GELU + wf + residual + LayerNorm, all fused.
        inter = _gelu(jnp.dot(x, wi, preferred_element_type=f32) + bi)
        ffn = jnp.dot(inter, wf, preferred_element_type=f32) + bf
        x = _layernorm(ffn + x, ln2[0:1, :], ln2[1:2, :])

    # Pooler (dense + tanh) + classifier.  Applied to all rows (still a single
    # sub-tile of MXU work — free) and the [CLS] rows are stored lane-dense
    # into the 128-wide padded output.
    pooled = jnp.tanh(jnp.dot(x, wp_ref[...], preferred_element_type=jnp.float32)
                      + bp_ref[...])                                # [M, H]
    logits = jnp.dot(pooled, wc_ref[...],
                     preferred_element_type=jnp.float32) + bc_ref[...]  # [M, Cp]
    for b in range(BATCH):
        out_ref[b:b + 1, :] = logits[b * SEQ:b * SEQ + 1, :].astype(out_ref.dtype)


# ----------------------------- parameters -----------------------------------
def init_params(key):
    def normal(k, shape, std=0.02):
        return (std * jax.random.normal(k, shape)).astype(jnp.float32)

    keys = jax.random.split(key, 6 + NUM_LAYERS)
    ones = jnp.ones((HIDDEN,), jnp.float32)
    zeros = jnp.zeros((HIDDEN,), jnp.float32)

    params = {
        "word_emb": normal(keys[0], (VOCAB, HIDDEN)),
        "pos_emb": normal(keys[1], (MAX_POS, HIDDEN)),
        "tok_emb": normal(keys[2], (2, HIDDEN)),
        "emb_ln": jnp.stack([ones, zeros]),                          # [2, H]
        "wp": normal(keys[3], (HIDDEN, HIDDEN)),
        "bp": jnp.zeros((1, HIDDEN), jnp.float32),
        # Classifier zero-padded to CLASSES_PAD columns (lane-dense store).
        "wc": jnp.pad(normal(keys[4], (HIDDEN, NUM_CLASSES)),
                      ((0, 0), (0, CLASSES_PAD - NUM_CLASSES))),
        "bc": jnp.zeros((1, CLASSES_PAD), jnp.float32),
    }

    wqkv, bqkv, wo, bo, ln1 = [], [], [], [], []
    wi, bi, wf, bf, ln2 = [], [], [], [], []
    for l in range(NUM_LAYERS):
        lk = jax.random.split(keys[6 + l], 6)
        wqkv.append(jnp.concatenate([normal(lk[0], (HIDDEN, HIDDEN)),
                                     normal(lk[1], (HIDDEN, HIDDEN)),
                                     normal(lk[2], (HIDDEN, HIDDEN))], axis=1))
        bqkv.append(jnp.zeros((1, 3 * HIDDEN), jnp.float32))
        wo.append(normal(lk[3], (HIDDEN, HIDDEN)))
        bo.append(jnp.zeros((1, HIDDEN), jnp.float32))
        ln1.append(jnp.stack([ones, zeros]))
        wi.append(normal(lk[4], (HIDDEN, INTERMEDIATE)))
        bi.append(jnp.zeros((1, INTERMEDIATE), jnp.float32))
        wf.append(normal(lk[5], (INTERMEDIATE, HIDDEN)))
        bf.append(jnp.zeros((1, HIDDEN), jnp.float32))
        ln2.append(jnp.stack([ones, zeros]))

    params.update({
        "wqkv": jnp.stack(wqkv), "bqkv": jnp.stack(bqkv),
        "wo": jnp.stack(wo), "bo": jnp.stack(bo), "ln1": jnp.stack(ln1),
        "wi": jnp.stack(wi), "bi": jnp.stack(bi),
        "wf": jnp.stack(wf), "bf": jnp.stack(bf), "ln2": jnp.stack(ln2),
    })
    return params


# ----------------------------- forward pass ----------------------------------
def _full_spec(a):
    if a.ndim == 2:
        return pl.BlockSpec(a.shape, lambda i: (0, 0))
    assert a.ndim == 3
    return pl.BlockSpec(a.shape, lambda i: (0, 0, 0))


def roberta_classifier_forward(params, input_ids, attention_mask):
    B, S = input_ids.shape
    M, H = B * S, HIDDEN

    # Embedding gather + sum (glue); LayerNorm happens inside the kernel.
    # Positions 0..S-1 BERT-style (token_type_ids == 0), as in the reference.
    word = jnp.take(params["word_emb"], input_ids, axis=0)          # [B, S, H]
    pos = params["pos_emb"][:S][None, :, :]
    tok = params["tok_emb"][0][None, None, :]
    emb = (word + pos + tok).reshape(M, H).astype(jnp.float32)

    # Additive mask (HF convention), kept at [B, S]; broadcast inside kernel.
    maskb = (1.0 - attention_mask.astype(jnp.float32)) * -10000.0   # [B, S]

    inputs = [
        emb, maskb, params["emb_ln"],
        params["wqkv"], params["bqkv"], params["wo"], params["bo"], params["ln1"],
        params["wi"], params["bi"], params["wf"], params["bf"], params["ln2"],
        params["wp"], params["bp"], params["wc"], params["bc"],
    ]

    logits_pad = pl.pallas_call(
        _roberta_kernel,
        grid=(1,),
        in_specs=[_full_spec(a) for a in inputs],
        out_specs=pl.BlockSpec((B, CLASSES_PAD), lambda i: (0, 0)),
        out_shape=jax.ShapeDtypeStruct((B, CLASSES_PAD), jnp.float32),
        compiler_params=pltpu.CompilerParams(
            dimension_semantics=("arbitrary",)),
    )(*inputs)

    return logits_pad[:, :NUM_CLASSES]                              # [B, 3]


# ----------------------------- main ------------------------------------------
if __name__ == "__main__":
    key = jax.random.PRNGKey(0)
    kp, ki = jax.random.split(key)

    params = init_params(kp)
    input_ids = jax.random.randint(ki, (BATCH, SEQ), 0, VOCAB, dtype=jnp.int32)
    attention_mask = jnp.array(
        [[1, 1, 1, 1, 1, 1, 1, 1],
         [1, 1, 1, 1, 1, 0, 0, 0]], dtype=jnp.int32)                # [B, S]

    fwd = jax.jit(roberta_classifier_forward)
    logits = fwd(params, input_ids, attention_mask)
    jax.block_until_ready(logits)

    assert logits.shape == (BATCH, NUM_CLASSES)
    assert bool(jnp.all(jnp.isfinite(logits)))
    print("KERNEL_OK")
</pallas_src>

<mosaic_0001>
module attributes {stable_mosaic.version = 11 : i64} {
  func.func @_roberta_kernel(%arg0: i32, %arg1: memref<16x32xf32, #tpu.memory_space<vmem>>, %arg2: memref<2x8xf32, #tpu.memory_space<vmem>>, %arg3: memref<2x32xf32, #tpu.memory_space<vmem>>, %arg4: memref<2x32x96xf32, #tpu.memory_space<vmem>>, %arg5: memref<2x1x96xf32, #tpu.memory_space<vmem>>, %arg6: memref<2x32x32xf32, #tpu.memory_space<vmem>>, %arg7: memref<2x1x32xf32, #tpu.memory_space<vmem>>, %arg8: memref<2x2x32xf32, #tpu.memory_space<vmem>>, %arg9: memref<2x32x64xf32, #tpu.memory_space<vmem>>, %arg10: memref<2x1x64xf32, #tpu.memory_space<vmem>>, %arg11: memref<2x64x32xf32, #tpu.memory_space<vmem>>, %arg12: memref<2x1x32xf32, #tpu.memory_space<vmem>>, %arg13: memref<2x2x32xf32, #tpu.memory_space<vmem>>, %arg14: memref<32x32xf32, #tpu.memory_space<vmem>>, %arg15: memref<1x32xf32, #tpu.memory_space<vmem>>, %arg16: memref<32x128xf32, #tpu.memory_space<vmem>>, %arg17: memref<1x128xf32, #tpu.memory_space<vmem>>, %arg18: memref<2x128xf32, #tpu.memory_space<vmem>>) attributes {dimension_semantics = [#tpu.dimension_semantics<arbitrary>], iteration_bounds = array<i64: 1>, scalar_prefetch = 0 : i64, scratch_operands = 0 : i64, tpu.core_type = #tpu.core_type<tc>, window_params = [{pipeline_mode = #tpu.pipeline_mode<synchronous>, transform_indices = @transform_0, window_bounds = array<i64: 16, 32>}, {pipeline_mode = #tpu.pipeline_mode<synchronous>, transform_indices = @transform_1, window_bounds = array<i64: 2, 8>}, {pipeline_mode = #tpu.pipeline_mode<synchronous>, transform_indices = @transform_2, window_bounds = array<i64: 2, 32>}, {pipeline_mode = #tpu.pipeline_mode<synchronous>, transform_indices = @transform_3, window_bounds = array<i64: 2, 32, 96>}, {pipeline_mode = #tpu.pipeline_mode<synchronous>, transform_indices = @transform_4, window_bounds = array<i64: 2, 1, 96>}, {pipeline_mode = #tpu.pipeline_mode<synchronous>, transform_indices = @transform_5, window_bounds = array<i64: 2, 32, 32>}, {pipeline_mode = #tpu.pipeline_mode<synchronous>, transform_indices = @transform_6, window_bounds = array<i64: 2, 1, 32>}, {pipeline_mode = #tpu.pipeline_mode<synchronous>, transform_indices = @transform_7, window_bounds = array<i64: 2, 2, 32>}, {pipeline_mode = #tpu.pipeline_mode<synchronous>, transform_indices = @transform_8, window_bounds = array<i64: 2, 32, 64>}, {pipeline_mode = #tpu.pipeline_mode<synchronous>, transform_indices = @transform_9, window_bounds = array<i64: 2, 1, 64>}, {pipeline_mode = #tpu.pipeline_mode<synchronous>, transform_indices = @transform_10, window_bounds = array<i64: 2, 64, 32>}, {pipeline_mode = #tpu.pipeline_mode<synchronous>, transform_indices = @transform_11, window_bounds = array<i64: 2, 1, 32>}, {pipeline_mode = #tpu.pipeline_mode<synchronous>, transform_indices = @transform_12, window_bounds = array<i64: 2, 2, 32>}, {pipeline_mode = #tpu.pipeline_mode<synchronous>, transform_indices = @transform_13, window_bounds = array<i64: 32, 32>}, {pipeline_mode = #tpu.pipeline_mode<synchronous>, transform_indices = @transform_14, window_bounds = array<i64: 1, 32>}, {pipeline_mode = #tpu.pipeline_mode<synchronous>, transform_indices = @transform_15, window_bounds = array<i64: 32, 128>}, {pipeline_mode = #tpu.pipeline_mode<synchronous>, transform_indices = @transform_16, window_bounds = array<i64: 1, 128>}, {pipeline_mode = #tpu.pipeline_mode<synchronous>, transform_indices = @transform_17, window_bounds = array<i64: 2, 128>}]} {
    %c0 = arith.constant 0 : index
    %c0_0 = arith.constant 0 : index
    %0 = vector.load %arg3[%c0, %c0_0] : memref<2x32xf32, #tpu.memory_space<vmem>>, vector<2x32xf32>
    %c0_1 = arith.constant 0 : index
    %c0_2 = arith.constant 0 : index
    %1 = vector.load %arg1[%c0_1, %c0_2] : memref<16x32xf32, #tpu.memory_space<vmem>>, vector<16x32xf32>
    %2 = vector.extract_strided_slice %0 {offsets = [0, 0], sizes = [1, 32], strides = [1, 1]} : vector<2x32xf32> to vector<1x32xf32>
    %3 = vector.extract_strided_slice %0 {offsets = [1, 0], sizes = [1, 32], strides = [1, 1]} : vector<2x32xf32> to vector<1x32xf32>
    %cst = arith.constant dense<0.000000e+00> : vector<16xf32>
    %4 = vector.multi_reduction <add>, %1, %cst [1] : vector<16x32xf32> to vector<16xf32>
    %5 = vector.shape_cast %4 : vector<16xf32> to vector<16x1xf32>
    %cst_3 = arith.constant 3.200000e+01 : f32
    %6 = vector.broadcast %cst_3 : f32 to vector<16x1xf32>
    %7 = arith.divf %5, %6 : vector<16x1xf32>
    %8 = vector.broadcast %7 : vector<16x1xf32> to vector<16x32xf32>
    %9 = arith.subf %1, %8 : vector<16x32xf32>
    %10 = arith.mulf %9, %9 : vector<16x32xf32>
    %cst_4 = arith.constant dense<0.000000e+00> : vector<16xf32>
    %11 = vector.multi_reduction <add>, %10, %cst_4 [1] : vector<16x32xf32> to vector<16xf32>
    %12 = vector.shape_cast %11 : vector<16xf32> to vector<16x1xf32>
    %cst_5 = arith.constant 3.200000e+01 : f32
    %13 = vector.broadcast %cst_5 : f32 to vector<16x1xf32>
    %14 = arith.divf %12, %13 : vector<16x1xf32>
    %cst_6 = arith.constant 9.99999996E-13 : f32
    %15 = vector.broadcast %cst_6 : f32 to vector<16x1xf32>
    %16 = arith.addf %14, %15 : vector<16x1xf32>
    %17 = math.rsqrt %16 : vector<16x1xf32>
    %18 = vector.broadcast %17 : vector<16x1xf32> to vector<16x32xf32>
    %19 = arith.mulf %9, %18 : vector<16x32xf32>
    %20 = vector.broadcast %2 : vector<1x32xf32> to vector<16x32xf32>
    %21 = arith.mulf %19, %20 : vector<16x32xf32>
    %22 = vector.broadcast %3 : vector<1x32xf32> to vector<16x32xf32>
    %23 = arith.addf %21, %22 : vector<16x32xf32>
    %c0_7 = arith.constant 0 : index
    %c0_8 = arith.constant 0 : index
    %c0_9 = arith.constant 0 : index
    %24 = vector.load %arg4[%c0_7, %c0_8, %c0_9] : memref<2x32x96xf32, #tpu.memory_space<vmem>>, vector<1x32x96xf32>
    %25 = vector.shape_cast %24 : vector<1x32x96xf32> to vector<32x96xf32>
    %c0_10 = arith.constant 0 : index
    %c0_11 = arith.constant 0 : index
    %c0_12 = arith.constant 0 : index
    %26 = vector.load %arg5[%c0_10, %c0_11, %c0_12] : memref<2x1x96xf32, #tpu.memory_space<vmem>>, vector<1x1x96xf32>
    %27 = vector.shape_cast %26 : vector<1x1x96xf32> to vector<1x96xf32>
    %c0_13 = arith.constant 0 : index
    %c0_14 = arith.constant 0 : index
    %c0_15 = arith.constant 0 : index
    %28 = vector.load %arg6[%c0_13, %c0_14, %c0_15] : memref<2x32x32xf32, #tpu.memory_space<vmem>>, vector<1x32x32xf32>
    %29 = vector.shape_cast %28 : vector<1x32x32xf32> to vector<32x32xf32>
    %c0_16 = arith.constant 0 : index
    %c0_17 = arith.constant 0 : index
    %c0_18 = arith.constant 0 : index
    %30 = vector.load %arg7[%c0_16, %c0_17, %c0_18] : memref<2x1x32xf32, #tpu.memory_space<vmem>>, vector<1x1x32xf32>
    %31 = vector.shape_cast %30 : vector<1x1x32xf32> to vector<1x32xf32>
    %c0_19 = arith.constant 0 : index
    %c0_20 = arith.constant 0 : index
    %c0_21 = arith.constant 0 : index
    %32 = vector.load %arg8[%c0_19, %c0_20, %c0_21] : memref<2x2x32xf32, #tpu.memory_space<vmem>>, vector<1x2x32xf32>
    %33 = vector.shape_cast %32 : vector<1x2x32xf32> to vector<2x32xf32>
    %c0_22 = arith.constant 0 : index
    %c0_23 = arith.constant 0 : index
    %c0_24 = arith.constant 0 : index
    %34 = vector.load %arg9[%c0_22, %c0_23, %c0_24] : memref<2x32x64xf32, #tpu.memory_space<vmem>>, vector<1x32x64xf32>
    %35 = vector.shape_cast %34 : vector<1x32x64xf32> to vector<32x64xf32>
    %c0_25 = arith.constant 0 : index
    %c0_26 = arith.constant 0 : index
    %c0_27 = arith.constant 0 : index
    %36 = vector.load %arg10[%c0_25, %c0_26, %c0_27] : memref<2x1x64xf32, #tpu.memory_space<vmem>>, vector<1x1x64xf32>
    %37 = vector.shape_cast %36 : vector<1x1x64xf32> to vector<1x64xf32>
    %c0_28 = arith.constant 0 : index
    %c0_29 = arith.constant 0 : index
    %c0_30 = arith.constant 0 : index
    %38 = vector.load %arg11[%c0_28, %c0_29, %c0_30] : memref<2x64x32xf32, #tpu.memory_space<vmem>>, vector<1x64x32xf32>
    %39 = vector.shape_cast %38 : vector<1x64x32xf32> to vector<64x32xf32>
    %c0_31 = arith.constant 0 : index
    %c0_32 = arith.constant 0 : index
    %c0_33 = arith.constant 0 : index
    %40 = vector.load %arg12[%c0_31, %c0_32, %c0_33] : memref<2x1x32xf32, #tpu.memory_space<vmem>>, vector<1x1x32xf32>
    %41 = vector.shape_cast %40 : vector<1x1x32xf32> to vector<1x32xf32>
    %c0_34 = arith.constant 0 : index
    %c0_35 = arith.constant 0 : index
    %c0_36 = arith.constant 0 : index
    %42 = vector.load %arg13[%c0_34, %c0_35, %c0_36] : memref<2x2x32xf32, #tpu.memory_space<vmem>>, vector<1x2x32xf32>
    %43 = vector.shape_cast %42 : vector<1x2x32xf32> to vector<2x32xf32>
    %cst_37 = arith.constant dense<0.000000e+00> : vector<16x96xf32>
    %44 = tpu.matmul %23, %25, %cst_37 {dimension_numbers = #tpu.dot_dimension_numbers<[1], [0], [0], [1], [0, 0, 1, 1], [], []>} : vector<16x32xf32>, vector<32x96xf32>, vector<16x96xf32> -> vector<16x96xf32>
    %45 = vector.broadcast %27 : vector<1x96xf32> to vector<16x96xf32>
    %46 = arith.addf %44, %45 : vector<16x96xf32>
    %47 = vector.extract_strided_slice %46 {offsets = [0, 0], sizes = [8, 32], strides = [1, 1]} : vector<16x96xf32> to vector<8x32xf32>
    %48 = vector.extract_strided_slice %46 {offsets = [0, 32], sizes = [8, 32], strides = [1, 1]} : vector<16x96xf32> to vector<8x32xf32>
    %49 = vector.extract_strided_slice %46 {offsets = [0, 64], sizes = [8, 32], strides = [1, 1]} : vector<16x96xf32> to vector<8x32xf32>
    %c0_38 = arith.constant 0 : index
    %c0_39 = arith.constant 0 : index
    %50 = vector.load %arg2[%c0_38, %c0_39] : memref<2x8xf32, #tpu.memory_space<vmem>>, vector<1x8xf32>
    %51 = vector.extract_strided_slice %47 {offsets = [0, 0], sizes = [8, 8], strides = [1, 1]} : vector<8x32xf32> to vector<8x8xf32>
    %52 = vector.extract_strided_slice %48 {offsets = [0, 0], sizes = [8, 8], strides = [1, 1]} : vector<8x32xf32> to vector<8x8xf32>
    %53 = vector.extract_strided_slice %49 {offsets = [0, 0], sizes = [8, 8], strides = [1, 1]} : vector<8x32xf32> to vector<8x8xf32>
    %cst_40 = arith.constant dense<0.000000e+00> : vector<8x8xf32>
    %54 = tpu.matmul %51, %52, %cst_40 {dimension_numbers = #tpu.dot_dimension_numbers<[1], [1], [0], [0], [0, 0, 1, 0], [], []>} : vector<8x8xf32>, vector<8x8xf32>, vector<8x8xf32> -> vector<8x8xf32>
    %cst_41 = arith.constant 0.353553385 : f32
    %55 = vector.broadcast %cst_41 : f32 to vector<8x8xf32>
    %56 = arith.mulf %54, %55 : vector<8x8xf32>
    %57 = vector.broadcast %50 : vector<1x8xf32> to vector<8x8xf32>
    %58 = arith.addf %56, %57 : vector<8x8xf32>
    %cst_42 = arith.constant dense<0xFF800000> : vector<8xf32>
    %59 = vector.multi_reduction <maximumf>, %58, %cst_42 [1] : vector<8x8xf32> to vector<8xf32>
    %60 = vector.shape_cast %59 : vector<8xf32> to vector<8x1xf32>
    %61 = vector.broadcast %60 : vector<8x1xf32> to vector<8x8xf32>
    %62 = arith.subf %58, %61 : vector<8x8xf32>
    %63 = math.exp %62 : vector<8x8xf32>
    %cst_43 = arith.constant dense<0.000000e+00> : vector<8xf32>
    %64 = vector.multi_reduction <add>, %63, %cst_43 [1] : vector<8x8xf32> to vector<8xf32>
    %65 = vector.shape_cast %64 : vector<8xf32> to vector<8x1xf32>
    %66 = tpu.reciprocal %65 {approx = true} : vector<8x1xf32> -> vector<8x1xf32>
    %67 = vector.broadcast %66 : vector<8x1xf32> to vector<8x8xf32>
    %68 = arith.mulf %63, %67 : vector<8x8xf32>
    %cst_44 = arith.constant dense<0.000000e+00> : vector<8x8xf32>
    %69 = tpu.matmul %68, %53, %cst_44 {dimension_numbers = #tpu.dot_dimension_numbers<[1], [0], [0], [1], [0, 0, 1, 1], [], []>} : vector<8x8xf32>, vector<8x8xf32>, vector<8x8xf32> -> vector<8x8xf32>
    %70 = vector.extract_strided_slice %29 {offsets = [0, 0], sizes = [8, 32], strides = [1, 1]} : vector<32x32xf32> to vector<8x32xf32>
    %cst_45 = arith.constant dense<0.000000e+00> : vector<8x32xf32>
    %71 = tpu.matmul %69, %70, %cst_45 {dimension_numbers = #tpu.dot_dimension_numbers<[1], [0], [0], [1], [0, 0, 1, 1], [], []>} : vector<8x8xf32>, vector<8x32xf32>, vector<8x32xf32> -> vector<8x32xf32>
    %72 = vector.extract_strided_slice %47 {offsets = [0, 8], sizes = [8, 8], strides = [1, 1]} : vector<8x32xf32> to vector<8x8xf32>
    %73 = vector.extract_strided_slice %48 {offsets = [0, 8], sizes = [8, 8], strides = [1, 1]} : vector<8x32xf32> to vector<8x8xf32>
    %74 = vector.extract_strided_slice %49 {offsets = [0, 8], sizes = [8, 8], strides = [1, 1]} : vector<8x32xf32> to vector<8x8xf32>
    %cst_46 = arith.constant dense<0.000000e+00> : vector<8x8xf32>
    %75 = tpu.matmul %72, %73, %cst_46 {dimension_numbers = #tpu.dot_dimension_numbers<[1], [1], [0], [0], [0, 0, 1, 0], [], []>} : vector<8x8xf32>, vector<8x8xf32>, vector<8x8xf32> -> vector<8x8xf32>
    %cst_47 = arith.constant 0.353553385 : f32
    %76 = vector.broadcast %cst_47 : f32 to vector<8x8xf32>
    %77 = arith.mulf %75, %76 : vector<8x8xf32>
    %78 = vector.broadcast %50 : vector<1x8xf32> to vector<8x8xf32>
    %79 = arith.addf %77, %78 : vector<8x8xf32>
    %cst_48 = arith.constant dense<0xFF800000> : vector<8xf32>
    %80 = vector.multi_reduction <maximumf>, %79, %cst_48 [1] : vector<8x8xf32> to vector<8xf32>
    %81 = vector.shape_cast %80 : vector<8xf32> to vector<8x1xf32>
    %82 = vector.broadcast %81 : vector<8x1xf32> to vector<8x8xf32>
    %83 = arith.subf %79, %82 : vector<8x8xf32>
    %84 = math.exp %83 : vector<8x8xf32>
    %cst_49 = arith.constant dense<0.000000e+00> : vector<8xf32>
    %85 = vector.multi_reduction <add>, %84, %cst_49 [1] : vector<8x8xf32> to vector<8xf32>
    %86 = vector.shape_cast %85 : vector<8xf32> to vector<8x1xf32>
    %87 = tpu.reciprocal %86 {approx = true} : vector<8x1xf32> -> vector<8x1xf32>
    %88 = vector.broadcast %87 : vector<8x1xf32> to vector<8x8xf32>
    %89 = arith.mulf %84, %88 : vector<8x8xf32>
    %cst_50 = arith.constant dense<0.000000e+00> : vector<8x8xf32>
    %90 = tpu.matmul %89, %74, %cst_50 {dimension_numbers = #tpu.dot_dimension_numbers<[1], [0], [0], [1], [0, 0, 1, 1], [], []>} : vector<8x8xf32>, vector<8x8xf32>, vector<8x8xf32> -> vector<8x8xf32>
    %91 = vector.extract_strided_slice %29 {offsets = [8, 0], sizes = [8, 32], strides = [1, 1]} : vector<32x32xf32> to vector<8x32xf32>
    %cst_51 = arith.constant dense<0.000000e+00> : vector<8x32xf32>
    %92 = tpu.matmul %90, %91, %cst_51 {dimension_numbers = #tpu.dot_dimension_numbers<[1], [0], [0], [1], [0, 0, 1, 1], [], []>} : vector<8x8xf32>, vector<8x32xf32>, vector<8x32xf32> -> vector<8x32xf32>
    %93 = arith.addf %71, %92 : vector<8x32xf32>
    %94 = vector.extract_strided_slice %47 {offsets = [0, 16], sizes = [8, 8], strides = [1, 1]} : vector<8x32xf32> to vector<8x8xf32>
    %95 = vector.extract_strided_slice %48 {offsets = [0, 16], sizes = [8, 8], strides = [1, 1]} : vector<8x32xf32> to vector<8x8xf32>
    %96 = vector.extract_strided_slice %49 {offsets = [0, 16], sizes = [8, 8], strides = [1, 1]} : vector<8x32xf32> to vector<8x8xf32>
    %cst_52 = arith.constant dense<0.000000e+00> : vector<8x8xf32>
    %97 = tpu.matmul %94, %95, %cst_52 {dimension_numbers = #tpu.dot_dimension_numbers<[1], [1], [0], [0], [0, 0, 1, 0], [], []>} : vector<8x8xf32>, vector<8x8xf32>, vector<8x8xf32> -> vector<8x8xf32>
    %cst_53 = arith.constant 0.353553385 : f32
    %98 = vector.broadcast %cst_53 : f32 to vector<8x8xf32>
    %99 = arith.mulf %97, %98 : vector<8x8xf32>
    %100 = vector.broadcast %50 : vector<1x8xf32> to vector<8x8xf32>
    %101 = arith.addf %99, %100 : vector<8x8xf32>
    %cst_54 = arith.constant dense<0xFF800000> : vector<8xf32>
    %102 = vector.multi_reduction <maximumf>, %101, %cst_54 [1] : vector<8x8xf32> to vector<8xf32>
    %103 = vector.shape_cast %102 : vector<8xf32> to vector<8x1xf32>
    %104 = vector.broadcast %103 : vector<8x1xf32> to vector<8x8xf32>
    %105 = arith.subf %101, %104 : vector<8x8xf32>
    %106 = math.exp %105 : vector<8x8xf32>
    %cst_55 = arith.constant dense<0.000000e+00> : vector<8xf32>
    %107 = vector.multi_reduction <add>, %106, %cst_55 [1] : vector<8x8xf32> to vector<8xf32>
    %108 = vector.shape_cast %107 : vector<8xf32> to vector<8x1xf32>
    %109 = tpu.reciprocal %108 {approx = true} : vector<8x1xf32> -> vector<8x1xf32>
    %110 = vector.broadcast %109 : vector<8x1xf32> to vector<8x8xf32>
    %111 = arith.mulf %106, %110 : vector<8x8xf32>
    %cst_56 = arith.constant dense<0.000000e+00> : vector<8x8xf32>
    %112 = tpu.matmul %111, %96, %cst_56 {dimension_numbers = #tpu.dot_dimension_numbers<[1], [0], [0], [1], [0, 0, 1, 1], [], []>} : vector<8x8xf32>, vector<8x8xf32>, vector<8x8xf32> -> vector<8x8xf32>
    %113 = vector.extract_strided_slice %29 {offsets = [16, 0], sizes = [8, 32], strides = [1, 1]} : vector<32x32xf32> to vector<8x32xf32>
    %cst_57 = arith.constant dense<0.000000e+00> : vector<8x32xf32>
    %114 = tpu.matmul %112, %113, %cst_57 {dimension_numbers = #tpu.dot_dimension_numbers<[1], [0], [0], [1], [0, 0, 1, 1], [], []>} : vector<8x8xf32>, vector<8x32xf32>, vector<8x32xf32> -> vector<8x32xf32>
    %115 = arith.addf %93, %114 : vector<8x32xf32>
    %116 = vector.extract_strided_slice %47 {offsets = [0, 24], sizes = [8, 8], strides = [1, 1]} : vector<8x32xf32> to vector<8x8xf32>
    %117 = vector.extract_strided_slice %48 {offsets = [0, 24], sizes = [8, 8], strides = [1, 1]} : vector<8x32xf32> to vector<8x8xf32>
    %118 = vector.extract_strided_slice %49 {offsets = [0, 24], sizes = [8, 8], strides = [1, 1]} : vector<8x32xf32> to vector<8x8xf32>
    %cst_58 = arith.constant dense<0.000000e+00> : vector<8x8xf32>
    %119 = tpu.matmul %116, %117, %cst_58 {dimension_numbers = #tpu.dot_dimension_numbers<[1], [1], [0], [0], [0, 0, 1, 0], [], []>} : vector<8x8xf32>, vector<8x8xf32>, vector<8x8xf32> -> vector<8x8xf32>
    %cst_59 = arith.constant 0.353553385 : f32
    %120 = vector.broadcast %cst_59 : f32 to vector<8x8xf32>
    %121 = arith.mulf %119, %120 : vector<8x8xf32>
    %122 = vector.broadcast %50 : vector<1x8xf32> to vector<8x8xf32>
    %123 = arith.addf %121, %122 : vector<8x8xf32>
    %cst_60 = arith.constant dense<0xFF800000> : vector<8xf32>
    %124 = vector.multi_reduction <maximumf>, %123, %cst_60 [1] : vector<8x8xf32> to vector<8xf32>
    %125 = vector.shape_cast %124 : vector<8xf32> to vector<8x1xf32>
    %126 = vector.broadcast %125 : vector<8x1xf32> to vector<8x8xf32>
    %127 = arith.subf %123, %126 : vector<8x8xf32>
    %128 = math.exp %127 : vector<8x8xf32>
    %cst_61 = arith.constant dense<0.000000e+00> : vector<8xf32>
    %129 = vector.multi_reduction <add>, %128, %cst_61 [1] : vector<8x8xf32> to vector<8xf32>
    %130 = vector.shape_cast %129 : vector<8xf32> to vector<8x1xf32>
    %131 = tpu.reciprocal %130 {approx = true} : vector<8x1xf32> -> vector<8x1xf32>
    %132 = vector.broadcast %131 : vector<8x1xf32> to vector<8x8xf32>
    %133 = arith.mulf %128, %132 : vector<8x8xf32>
    %cst_62 = arith.constant dense<0.000000e+00> : vector<8x8xf32>
    %134 = tpu.matmul %133, %118, %cst_62 {dimension_numbers = #tpu.dot_dimension_numbers<[1], [0], [0], [1], [0, 0, 1, 1], [], []>} : vector<8x8xf32>, vector<8x8xf32>, vector<8x8xf32> -> vector<8x8xf32>
    %135 = vector.extract_strided_slice %29 {offsets = [24, 0], sizes = [8, 32], strides = [1, 1]} : vector<32x32xf32> to vector<8x32xf32>
    %cst_63 = arith.constant dense<0.000000e+00> : vector<8x32xf32>
    %136 = tpu.matmul %134, %135, %cst_63 {dimension_numbers = #tpu.dot_dimension_numbers<[1], [0], [0], [1], [0, 0, 1, 1], [], []>} : vector<8x8xf32>, vector<8x32xf32>, vector<8x32xf32> -> vector<8x32xf32>
    %137 = arith.addf %115, %136 : vector<8x32xf32>
    %138 = vector.extract_strided_slice %46 {offsets = [8, 0], sizes = [8, 32], strides = [1, 1]} : vector<16x96xf32> to vector<8x32xf32>
    %139 = vector.extract_strided_slice %46 {offsets = [8, 32], sizes = [8, 32], strides = [1, 1]} : vector<16x96xf32> to vector<8x32xf32>
    %140 = vector.extract_strided_slice %46 {offsets = [8, 64], sizes = [8, 32], strides = [1, 1]} : vector<16x96xf32> to vector<8x32xf32>
    %c1 = arith.constant 1 : index
    %c0_64 = arith.constant 0 : index
    %141 = vector.load %arg2[%c1, %c0_64] : memref<2x8xf32, #tpu.memory_space<vmem>>, vector<1x8xf32>
    %142 = vector.extract_strided_slice %138 {offsets = [0, 0], sizes = [8, 8], strides = [1, 1]} : vector<8x32xf32> to vector<8x8xf32>
    %143 = vector.extract_strided_slice %139 {offsets = [0, 0], sizes = [8, 8], strides = [1, 1]} : vector<8x32xf32> to vector<8x8xf32>
    %144 = vector.extract_strided_slice %140 {offsets = [0, 0], sizes = [8, 8], strides = [1, 1]} : vector<8x32xf32> to vector<8x8xf32>
    %cst_65 = arith.constant dense<0.000000e+00> : vector<8x8xf32>
    %145 = tpu.matmul %142, %143, %cst_65 {dimension_numbers = #tpu.dot_dimension_numbers<[1], [1], [0], [0], [0, 0, 1, 0], [], []>} : vector<8x8xf32>, vector<8x8xf32>, vector<8x8xf32> -> vector<8x8xf32>
    %cst_66 = arith.constant 0.353553385 : f32
    %146 = vector.broadcast %cst_66 : f32 to vector<8x8xf32>
    %147 = arith.mulf %145, %146 : vector<8x8xf32>
    %148 = vector.broadcast %141 : vector<1x8xf32> to vector<8x8xf32>
    %149 = arith.addf %147, %148 : vector<8x8xf32>
    %cst_67 = arith.constant dense<0xFF800000> : vector<8xf32>
    %150 = vector.multi_reduction <maximumf>, %149, %cst_67 [1] : vector<8x8xf32> to vector<8xf32>
    %151 = vector.shape_cast %150 : vector<8xf32> to vector<8x1xf32>
    %152 = vector.broadcast %151 : vector<8x1xf32> to vector<8x8xf32>
    %153 = arith.subf %149, %152 : vector<8x8xf32>
    %154 = math.exp %153 : vector<8x8xf32>
    %cst_68 = arith.constant dense<0.000000e+00> : vector<8xf32>
    %155 = vector.multi_reduction <add>, %154, %cst_68 [1] : vector<8x8xf32> to vector<8xf32>
    %156 = vector.shape_cast %155 : vector<8xf32> to vector<8x1xf32>
    %157 = tpu.reciprocal %156 {approx = true} : vector<8x1xf32> -> vector<8x1xf32>
    %158 = vector.broadcast %157 : vector<8x1xf32> to vector<8x8xf32>
    %159 = arith.mulf %154, %158 : vector<8x8xf32>
    %cst_69 = arith.constant dense<0.000000e+00> : vector<8x8xf32>
    %160 = tpu.matmul %159, %144, %cst_69 {dimension_numbers = #tpu.dot_dimension_numbers<[1], [0], [0], [1], [0, 0, 1, 1], [], []>} : vector<8x8xf32>, vector<8x8xf32>, vector<8x8xf32> -> vector<8x8xf32>
    %161 = vector.extract_strided_slice %29 {offsets = [0, 0], sizes = [8, 32], strides = [1, 1]} : vector<32x32xf32> to vector<8x32xf32>
    %cst_70 = arith.constant dense<0.000000e+00> : vector<8x32xf32>
    %162 = tpu.matmul %160, %161, %cst_70 {dimension_numbers = #tpu.dot_dimension_numbers<[1], [0], [0], [1], [0, 0, 1, 1], [], []>} : vector<8x8xf32>, vector<8x32xf32>, vector<8x32xf32> -> vector<8x32xf32>
    %163 = vector.extract_strided_slice %138 {offsets = [0, 8], sizes = [8, 8], strides = [1, 1]} : vector<8x32xf32> to vector<8x8xf32>
    %164 = vector.extract_strided_slice %139 {offsets = [0, 8], sizes = [8, 8], strides = [1, 1]} : vector<8x32xf32> to vector<8x8xf32>
    %165 = vector.extract_strided_slice %140 {offsets = [0, 8], sizes = [8, 8], strides = [1, 1]} : vector<8x32xf32> to vector<8x8xf32>
    %cst_71 = arith.constant dense<0.000000e+00> : vector<8x8xf32>
    %166 = tpu.matmul %163, %164, %cst_71 {dimension_numbers = #tpu.dot_dimension_numbers<[1], [1], [0], [0], [0, 0, 1, 0], [], []>} : vector<8x8xf32>, vector<8x8xf32>, vector<8x8xf32> -> vector<8x8xf32>
    %cst_72 = arith.constant 0.353553385 : f32
    %167 = vector.broadcast %cst_72 : f32 to vector<8x8xf32>
    %168 = arith.mulf %166, %167 : vector<8x8xf32>
    %169 = vector.broadcast %141 : vector<1x8xf32> to vector<8x8xf32>
    %170 = arith.addf %168, %169 : vector<8x8xf32>
    %cst_73 = arith.constant dense<0xFF800000> : vector<8xf32>
    %171 = vector.multi_reduction <maximumf>, %170, %cst_73 [1] : vector<8x8xf32> to vector<8xf32>
    %172 = vector.shape_cast %171 : vector<8xf32> to vector<8x1xf32>
    %173 = vector.broadcast %172 : vector<8x1xf32> to vector<8x8xf32>
    %174 = arith.subf %170, %173 : vector<8x8xf32>
    %175 = math.exp %174 : vector<8x8xf32>
    %cst_74 = arith.constant dense<0.000000e+00> : vector<8xf32>
    %176 = vector.multi_reduction <add>, %175, %cst_74 [1] : vector<8x8xf32> to vector<8xf32>
    %177 = vector.shape_cast %176 : vector<8xf32> to vector<8x1xf32>
    %178 = tpu.reciprocal %177 {approx = true} : vector<8x1xf32> -> vector<8x1xf32>
    %179 = vector.broadcast %178 : vector<8x1xf32> to vector<8x8xf32>
    %180 = arith.mulf %175, %179 : vector<8x8xf32>
    %cst_75 = arith.constant dense<0.000000e+00> : vector<8x8xf32>
    %181 = tpu.matmul %180, %165, %cst_75 {dimension_numbers = #tpu.dot_dimension_numbers<[1], [0], [0], [1], [0, 0, 1, 1], [], []>} : vector<8x8xf32>, vector<8x8xf32>, vector<8x8xf32> -> vector<8x8xf32>
    %182 = vector.extract_strided_slice %29 {offsets = [8, 0], sizes = [8, 32], strides = [1, 1]} : vector<32x32xf32> to vector<8x32xf32>
    %cst_76 = arith.constant dense<0.000000e+00> : vector<8x32xf32>
    %183 = tpu.matmul %181, %182, %cst_76 {dimension_numbers = #tpu.dot_dimension_numbers<[1], [0], [0], [1], [0, 0, 1, 1], [], []>} : vector<8x8xf32>, vector<8x32xf32>, vector<8x32xf32> -> vector<8x32xf32>
    %184 = arith.addf %162, %183 : vector<8x32xf32>
    %185 = vector.extract_strided_slice %138 {offsets = [0, 16], sizes = [8, 8], strides = [1, 1]} : vector<8x32xf32> to vector<8x8xf32>
    %186 = vector.extract_strided_slice %139 {offsets = [0, 16], sizes = [8, 8], strides = [1, 1]} : vector<8x32xf32> to vector<8x8xf32>
    %187 = vector.extract_strided_slice %140 {offsets = [0, 16], sizes = [8, 8], strides = [1, 1]} : vector<8x32xf32> to vector<8x8xf32>
    %cst_77 = arith.constant dense<0.000000e+00> : vector<8x8xf32>
    %188 = tpu.matmul %185, %186, %cst_77 {dimension_numbers = #tpu.dot_dimension_numbers<[1], [1], [0], [0], [0, 0, 1, 0], [], []>} : vector<8x8xf32>, vector<8x8xf32>, vector<8x8xf32> -> vector<8x8xf32>
    %cst_78 = arith.constant 0.353553385 : f32
    %189 = vector.broadcast %cst_78 : f32 to vector<8x8xf32>
    %190 = arith.mulf %188, %189 : vector<8x8xf32>
    %191 = vector.broadcast %141 : vector<1x8xf32> to vector<8x8xf32>
    %192 = arith.addf %190, %191 : vector<8x8xf32>
    %cst_79 = arith.constant dense<0xFF800000> : vector<8xf32>
    %193 = vector.multi_reduction <maximumf>, %192, %cst_79 [1] : vector<8x8xf32> to vector<8xf32>
    %194 = vector.shape_cast %193 : vector<8xf32> to vector<8x1xf32>
    %195 = vector.broadcast %194 : vector<8x1xf32> to vector<8x8xf32>
    %196 = arith.subf %192, %195 : vector<8x8xf32>
    %197 = math.exp %196 : vector<8x8xf32>
    %cst_80 = arith.constant dense<0.000000e+00> : vector<8xf32>
    %198 = vector.multi_reduction <add>, %197, %cst_80 [1] : vector<8x8xf32> to vector<8xf32>
    %199 = vector.shape_cast %198 : vector<8xf32> to vector<8x1xf32>
    %200 = tpu.reciprocal %199 {approx = true} : vector<8x1xf32> -> vector<8x1xf32>
    %201 = vector.broadcast %200 : vector<8x1xf32> to vector<8x8xf32>
    %202 = arith.mulf %197, %201 : vector<8x8xf32>
    %cst_81 = arith.constant dense<0.000000e+00> : vector<8x8xf32>
    %203 = tpu.matmul %202, %187, %cst_81 {dimension_numbers = #tpu.dot_dimension_numbers<[1], [0], [0], [1], [0, 0, 1, 1], [], []>} : vector<8x8xf32>, vector<8x8xf32>, vector<8x8xf32> -> vector<8x8xf32>
    %204 = vector.extract_strided_slice %29 {offsets = [16, 0], sizes = [8, 32], strides = [1, 1]} : vector<32x32xf32> to vector<8x32xf32>
    %cst_82 = arith.constant dense<0.000000e+00> : vector<8x32xf32>
    %205 = tpu.matmul %203, %204, %cst_82 {dimension_numbers = #tpu.dot_dimension_numbers<[1], [0], [0], [1], [0, 0, 1, 1], [], []>} : vector<8x8xf32>, vector<8x32xf32>, vector<8x32xf32> -> vector<8x32xf32>
    %206 = arith.addf %184, %205 : vector<8x32xf32>
    %207 = vector.extract_strided_slice %138 {offsets = [0, 24], sizes = [8, 8], strides = [1, 1]} : vector<8x32xf32> to vector<8x8xf32>
    %208 = vector.extract_strided_slice %139 {offsets = [0, 24], sizes = [8, 8], strides = [1, 1]} : vector<8x32xf32> to vector<8x8xf32>
    %209 = vector.extract_strided_slice %140 {offsets = [0, 24], sizes = [8, 8], strides = [1, 1]} : vector<8x32xf32> to vector<8x8xf32>
    %cst_83 = arith.constant dense<0.000000e+00> : vector<8x8xf32>
    %210 = tpu.matmul %207, %208, %cst_83 {dimension_numbers = #tpu.dot_dimension_numbers<[1], [1], [0], [0], [0, 0, 1, 0], [], []>} : vector<8x8xf32>, vector<8x8xf32>, vector<8x8xf32> -> vector<8x8xf32>
    %cst_84 = arith.constant 0.353553385 : f32
    %211 = vector.broadcast %cst_84 : f32 to vector<8x8xf32>
    %212 = arith.mulf %210, %211 : vector<8x8xf32>
    %213 = vector.broadcast %141 : vector<1x8xf32> to vector<8x8xf32>
    %214 = arith.addf %212, %213 : vector<8x8xf32>
    %cst_85 = arith.constant dense<0xFF800000> : vector<8xf32>
    %215 = vector.multi_reduction <maximumf>, %214, %cst_85 [1] : vector<8x8xf32> to vector<8xf32>
    %216 = vector.shape_cast %215 : vector<8xf32> to vector<8x1xf32>
    %217 = vector.broadcast %216 : vector<8x1xf32> to vector<8x8xf32>
    %218 = arith.subf %214, %217 : vector<8x8xf32>
    %219 = math.exp %218 : vector<8x8xf32>
    %cst_86 = arith.constant dense<0.000000e+00> : vector<8xf32>
    %220 = vector.multi_reduction <add>, %219, %cst_86 [1] : vector<8x8xf32> to vector<8xf32>
    %221 = vector.shape_cast %220 : vector<8xf32> to vector<8x1xf32>
    %222 = tpu.reciprocal %221 {approx = true} : vector<8x1xf32> -> vector<8x1xf32>
    %223 = vector.broadcast %222 : vector<8x1xf32> to vector<8x8xf32>
    %224 = arith.mulf %219, %223 : vector<8x8xf32>
    %cst_87 = arith.constant dense<0.000000e+00> : vector<8x8xf32>
    %225 = tpu.matmul %224, %209, %cst_87 {dimension_numbers = #tpu.dot_dimension_numbers<[1], [0], [0], [1], [0, 0, 1, 1], [], []>} : vector<8x8xf32>, vector<8x8xf32>, vector<8x8xf32> -> vector<8x8xf32>
    %226 = vector.extract_strided_slice %29 {offsets = [24, 0], sizes = [8, 32], strides = [1, 1]} : vector<32x32xf32> to vector<8x32xf32>
    %cst_88 = arith.constant dense<0.000000e+00> : vector<8x32xf32>
    %227 = tpu.matmul %225, %226, %cst_88 {dimension_numbers = #tpu.dot_dimension_numbers<[1], [0], [0], [1], [0, 0, 1, 1], [], []>} : vector<8x8xf32>, vector<8x32xf32>, vector<8x32xf32> -> vector<8x32xf32>
    %228 = arith.addf %206, %227 : vector<8x32xf32>
    %229 = tpu.concatenate %137, %228 in 0 : vector<8x32xf32>, vector<8x32xf32> -> vector<16x32xf32>
    %230 = vector.broadcast %31 : vector<1x32xf32> to vector<16x32xf32>
    %231 = arith.addf %229, %230 : vector<16x32xf32>
    %232 = arith.addf %231, %23 : vector<16x32xf32>
    %233 = vector.extract_strided_slice %33 {offsets = [0, 0], sizes = [1, 32], strides = [1, 1]} : vector<2x32xf32> to vector<1x32xf32>
    %234 = vector.extract_strided_slice %33 {offsets = [1, 0], sizes = [1, 32], strides = [1, 1]} : vector<2x32xf32> to vector<1x32xf32>
    %cst_89 = arith.constant dense<0.000000e+00> : vector<16xf32>
    %235 = vector.multi_reduction <add>, %232, %cst_89 [1] : vector<16x32xf32> to vector<16xf32>
    %236 = vector.shape_cast %235 : vector<16xf32> to vector<16x1xf32>
    %cst_90 = arith.constant 3.200000e+01 : f32
    %237 = vector.broadcast %cst_90 : f32 to vector<16x1xf32>
    %238 = arith.divf %236, %237 : vector<16x1xf32>
    %239 = vector.broadcast %238 : vector<16x1xf32> to vector<16x32xf32>
    %240 = arith.subf %232, %239 : vector<16x32xf32>
    %241 = arith.mulf %240, %240 : vector<16x32xf32>
    %cst_91 = arith.constant dense<0.000000e+00> : vector<16xf32>
    %242 = vector.multi_reduction <add>, %241, %cst_91 [1] : vector<16x32xf32> to vector<16xf32>
    %243 = vector.shape_cast %242 : vector<16xf32> to vector<16x1xf32>
    %cst_92 = arith.constant 3.200000e+01 : f32
    %244 = vector.broadcast %cst_92 : f32 to vector<16x1xf32>
    %245 = arith.divf %243, %244 : vector<16x1xf32>
    %cst_93 = arith.constant 9.99999996E-13 : f32
    %246 = vector.broadcast %cst_93 : f32 to vector<16x1xf32>
    %247 = arith.addf %245, %246 : vector<16x1xf32>
    %248 = math.rsqrt %247 : vector<16x1xf32>
    %249 = vector.broadcast %248 : vector<16x1xf32> to vector<16x32xf32>
    %250 = arith.mulf %240, %249 : vector<16x32xf32>
    %251 = vector.broadcast %233 : vector<1x32xf32> to vector<16x32xf32>
    %252 = arith.mulf %250, %251 : vector<16x32xf32>
    %253 = vector.broadcast %234 : vector<1x32xf32> to vector<16x32xf32>
    %254 = arith.addf %252, %253 : vector<16x32xf32>
    %cst_94 = arith.constant dense<0.000000e+00> : vector<16x64xf32>
    %255 = tpu.matmul %254, %35, %cst_94 {dimension_numbers = #tpu.dot_dimension_numbers<[1], [0], [0], [1], [0, 0, 1, 1], [], []>} : vector<16x32xf32>, vector<32x64xf32>, vector<16x64xf32> -> vector<16x64xf32>
    %256 = vector.broadcast %37 : vector<1x64xf32> to vector<16x64xf32>
    %257 = arith.addf %255, %256 : vector<16x64xf32>
    %cst_95 = arith.constant 5.000000e-01 : f32
    %258 = vector.broadcast %cst_95 : f32 to vector<16x64xf32>
    %259 = arith.mulf %258, %257 : vector<16x64xf32>
    %cst_96 = arith.constant 4.471500e-02 : f32
    %260 = vector.broadcast %cst_96 : f32 to vector<16x64xf32>
    %261 = arith.mulf %260, %257 : vector<16x64xf32>
    %262 = arith.mulf %261, %257 : vector<16x64xf32>
    %263 = arith.mulf %262, %257 : vector<16x64xf32>
    %264 = arith.addf %257, %263 : vector<16x64xf32>
    %cst_97 = arith.constant 0.797884583 : f32
    %265 = vector.broadcast %cst_97 : f32 to vector<16x64xf32>
    %266 = arith.mulf %265, %264 : vector<16x64xf32>
    %267 = math.tanh %266 : vector<16x64xf32>
    %cst_98 = arith.constant 1.000000e+00 : f32
    %268 = vector.broadcast %cst_98 : f32 to vector<16x64xf32>
    %269 = arith.addf %268, %267 : vector<16x64xf32>
    %270 = arith.mulf %259, %269 : vector<16x64xf32>
    %cst_99 = arith.constant dense<0.000000e+00> : vector<16x32xf32>
    %271 = tpu.matmul %270, %39, %cst_99 {dimension_numbers = #tpu.dot_dimension_numbers<[1], [0], [0], [1], [0, 0, 1, 1], [], []>} : vector<16x64xf32>, vector<64x32xf32>, vector<16x32xf32> -> vector<16x32xf32>
    %272 = vector.broadcast %41 : vector<1x32xf32> to vector<16x32xf32>
    %273 = arith.addf %271, %272 : vector<16x32xf32>
    %274 = arith.addf %273, %254 : vector<16x32xf32>
    %275 = vector.extract_strided_slice %43 {offsets = [0, 0], sizes = [1, 32], strides = [1, 1]} : vector<2x32xf32> to vector<1x32xf32>
    %276 = vector.extract_strided_slice %43 {offsets = [1, 0], sizes = [1, 32], strides = [1, 1]} : vector<2x32xf32> to vector<1x32xf32>
    %cst_100 = arith.constant dense<0.000000e+00> : vector<16xf32>
    %277 = vector.multi_reduction <add>, %274, %cst_100 [1] : vector<16x32xf32> to vector<16xf32>
    %278 = vector.shape_cast %277 : vector<16xf32> to vector<16x1xf32>
    %cst_101 = arith.constant 3.200000e+01 : f32
    %279 = vector.broadcast %cst_101 : f32 to vector<16x1xf32>
    %280 = arith.divf %278, %279 : vector<16x1xf32>
    %281 = vector.broadcast %280 : vector<16x1xf32> to vector<16x32xf32>
    %282 = arith.subf %274, %281 : vector<16x32xf32>
    %283 = arith.mulf %282, %282 : vector<16x32xf32>
    %cst_102 = arith.constant dense<0.000000e+00> : vector<16xf32>
    %284 = vector.multi_reduction <add>, %283, %cst_102 [1] : vector<16x32xf32> to vector<16xf32>
    %285 = vector.shape_cast %284 : vector<16xf32> to vector<16x1xf32>
    %cst_103 = arith.constant 3.200000e+01 : f32
    %286 = vector.broadcast %cst_103 : f32 to vector<16x1xf32>
    %287 = arith.divf %285, %286 : vector<16x1xf32>
    %cst_104 = arith.constant 9.99999996E-13 : f32
    %288 = vector.broadcast %cst_104 : f32 to vector<16x1xf32>
    %289 = arith.addf %287, %288 : vector<16x1xf32>
    %290 = math.rsqrt %289 : vector<16x1xf32>
    %291 = vector.broadcast %290 : vector<16x1xf32> to vector<16x32xf32>
    %292 = arith.mulf %282, %291 : vector<16x32xf32>
    %293 = vector.broadcast %275 : vector<1x32xf32> to vector<16x32xf32>
    %294 = arith.mulf %292, %293 : vector<16x32xf32>
    %295 = vector.broadcast %276 : vector<1x32xf32> to vector<16x32xf32>
    %296 = arith.addf %294, %295 : vector<16x32xf32>
    %c1_105 = arith.constant 1 : index
    %c0_106 = arith.constant 0 : index
    %c0_107 = arith.constant 0 : index
    %297 = vector.load %arg4[%c1_105, %c0_106, %c0_107] : memref<2x32x96xf32, #tpu.memory_space<vmem>>, vector<1x32x96xf32>
    %298 = vector.shape_cast %297 : vector<1x32x96xf32> to vector<32x96xf32>
    %c1_108 = arith.constant 1 : index
    %c0_109 = arith.constant 0 : index
    %c0_110 = arith.constant 0 : index
    %299 = vector.load %arg5[%c1_108, %c0_109, %c0_110] : memref<2x1x96xf32, #tpu.memory_space<vmem>>, vector<1x1x96xf32>
    %300 = vector.shape_cast %299 : vector<1x1x96xf32> to vector<1x96xf32>
    %c1_111 = arith.constant 1 : index
    %c0_112 = arith.constant 0 : index
    %c0_113 = arith.constant 0 : index
    %301 = vector.load %arg6[%c1_111, %c0_112, %c0_113] : memref<2x32x32xf32, #tpu.memory_space<vmem>>, vector<1x32x32xf32>
    %302 = vector.shape_cast %301 : vector<1x32x32xf32> to vector<32x32xf32>
    %c1_114 = arith.constant 1 : index
    %c0_115 = arith.constant 0 : index
    %c0_116 = arith.constant 0 : index
    %303 = vector.load %arg7[%c1_114, %c0_115, %c0_116] : memref<2x1x32xf32, #tpu.memory_space<vmem>>, vector<1x1x32xf32>
    %304 = vector.shape_cast %303 : vector<1x1x32xf32> to vector<1x32xf32>
    %c1_117 = arith.constant 1 : index
    %c0_118 = arith.constant 0 : index
    %c0_119 = arith.constant 0 : index
    %305 = vector.load %arg8[%c1_117, %c0_118, %c0_119] : memref<2x2x32xf32, #tpu.memory_space<vmem>>, vector<1x2x32xf32>
    %306 = vector.shape_cast %305 : vector<1x2x32xf32> to vector<2x32xf32>
    %c1_120 = arith.constant 1 : index
    %c0_121 = arith.constant 0 : index
    %c0_122 = arith.constant 0 : index
    %307 = vector.load %arg9[%c1_120, %c0_121, %c0_122] : memref<2x32x64xf32, #tpu.memory_space<vmem>>, vector<1x32x64xf32>
    %308 = vector.shape_cast %307 : vector<1x32x64xf32> to vector<32x64xf32>
    %c1_123 = arith.constant 1 : index
    %c0_124 = arith.constant 0 : index
    %c0_125 = arith.constant 0 : index
    %309 = vector.load %arg10[%c1_123, %c0_124, %c0_125] : memref<2x1x64xf32, #tpu.memory_space<vmem>>, vector<1x1x64xf32>
    %310 = vector.shape_cast %309 : vector<1x1x64xf32> to vector<1x64xf32>
    %c1_126 = arith.constant 1 : index
    %c0_127 = arith.constant 0 : index
    %c0_128 = arith.constant 0 : index
    %311 = vector.load %arg11[%c1_126, %c0_127, %c0_128] : memref<2x64x32xf32, #tpu.memory_space<vmem>>, vector<1x64x32xf32>
    %312 = vector.shape_cast %311 : vector<1x64x32xf32> to vector<64x32xf32>
    %c1_129 = arith.constant 1 : index
    %c0_130 = arith.constant 0 : index
    %c0_131 = arith.constant 0 : index
    %313 = vector.load %arg12[%c1_129, %c0_130, %c0_131] : memref<2x1x32xf32, #tpu.memory_space<vmem>>, vector<1x1x32xf32>
    %314 = vector.shape_cast %313 : vector<1x1x32xf32> to vector<1x32xf32>
    %c1_132 = arith.constant 1 : index
    %c0_133 = arith.constant 0 : index
    %c0_134 = arith.constant 0 : index
    %315 = vector.load %arg13[%c1_132, %c0_133, %c0_134] : memref<2x2x32xf32, #tpu.memory_space<vmem>>, vector<1x2x32xf32>
    %316 = vector.shape_cast %315 : vector<1x2x32xf32> to vector<2x32xf32>
    %cst_135 = arith.constant dense<0.000000e+00> : vector<16x96xf32>
    %317 = tpu.matmul %296, %298, %cst_135 {dimension_numbers = #tpu.dot_dimension_numbers<[1], [0], [0], [1], [0, 0, 1, 1], [], []>} : vector<16x32xf32>, vector<32x96xf32>, vector<16x96xf32> -> vector<16x96xf32>
    %318 = vector.broadcast %300 : vector<1x96xf32> to vector<16x96xf32>
    %319 = arith.addf %317, %318 : vector<16x96xf32>
    %320 = vector.extract_strided_slice %319 {offsets = [0, 0], sizes = [8, 32], strides = [1, 1]} : vector<16x96xf32> to vector<8x32xf32>
    %321 = vector.extract_strided_slice %319 {offsets = [0, 32], sizes = [8, 32], strides = [1, 1]} : vector<16x96xf32> to vector<8x32xf32>
    %322 = vector.extract_strided_slice %319 {offsets = [0, 64], sizes = [8, 32], strides = [1, 1]} : vector<16x96xf32> to vector<8x32xf32>
    %c0_136 = arith.constant 0 : index
    %c0_137 = arith.constant 0 : index
    %323 = vector.load %arg2[%c0_136, %c0_137] : memref<2x8xf32, #tpu.memory_space<vmem>>, vector<1x8xf32>
    %324 = vector.extract_strided_slice %320 {offsets = [0, 0], sizes = [8, 8], strides = [1, 1]} : vector<8x32xf32> to vector<8x8xf32>
    %325 = vector.extract_strided_slice %321 {offsets = [0, 0], sizes = [8, 8], strides = [1, 1]} : vector<8x32xf32> to vector<8x8xf32>
    %326 = vector.extract_strided_slice %322 {offsets = [0, 0], sizes = [8, 8], strides = [1, 1]} : vector<8x32xf32> to vector<8x8xf32>
    %cst_138 = arith.constant dense<0.000000e+00> : vector<8x8xf32>
    %327 = tpu.matmul %324, %325, %cst_138 {dimension_numbers = #tpu.dot_dimension_numbers<[1], [1], [0], [0], [0, 0, 1, 0], [], []>} : vector<8x8xf32>, vector<8x8xf32>, vector<8x8xf32> -> vector<8x8xf32>
    %cst_139 = arith.constant 0.353553385 : f32
    %328 = vector.broadcast %cst_139 : f32 to vector<8x8xf32>
    %329 = arith.mulf %327, %328 : vector<8x8xf32>
    %330 = vector.broadcast %323 : vector<1x8xf32> to vector<8x8xf32>
    %331 = arith.addf %329, %330 : vector<8x8xf32>
    %cst_140 = arith.constant dense<0xFF800000> : vector<8xf32>
    %332 = vector.multi_reduction <maximumf>, %331, %cst_140 [1] : vector<8x8xf32> to vector<8xf32>
    %333 = vector.shape_cast %332 : vector<8xf32> to vector<8x1xf32>
    %334 = vector.broadcast %333 : vector<8x1xf32> to vector<8x8xf32>
    %335 = arith.subf %331, %334 : vector<8x8xf32>
    %336 = math.exp %335 : vector<8x8xf32>
    %cst_141 = arith.constant dense<0.000000e+00> : vector<8xf32>
    %337 = vector.multi_reduction <add>, %336, %cst_141 [1] : vector<8x8xf32> to vector<8xf32>
    %338 = vector.shape_cast %337 : vector<8xf32> to vector<8x1xf32>
    %339 = tpu.reciprocal %338 {approx = true} : vector<8x1xf32> -> vector<8x1xf32>
    %340 = vector.broadcast %339 : vector<8x1xf32> to vector<8x8xf32>
    %341 = arith.mulf %336, %340 : vector<8x8xf32>
    %cst_142 = arith.constant dense<0.000000e+00> : vector<8x8xf32>
    %342 = tpu.matmul %341, %326, %cst_142 {dimension_numbers = #tpu.dot_dimension_numbers<[1], [0], [0], [1], [0, 0, 1, 1], [], []>} : vector<8x8xf32>, vector<8x8xf32>, vector<8x8xf32> -> vector<8x8xf32>
    %343 = vector.extract_strided_slice %302 {offsets = [0, 0], sizes = [8, 32], strides = [1, 1]} : vector<32x32xf32> to vector<8x32xf32>
    %cst_143 = arith.constant dense<0.000000e+00> : vector<8x32xf32>
    %344 = tpu.matmul %342, %343, %cst_143 {dimension_numbers = #tpu.dot_dimension_numbers<[1], [0], [0], [1], [0, 0, 1, 1], [], []>} : vector<8x8xf32>, vector<8x32xf32>, vector<8x32xf32> -> vector<8x32xf32>
    %345 = vector.extract_strided_slice %320 {offsets = [0, 8], sizes = [8, 8], strides = [1, 1]} : vector<8x32xf32> to vector<8x8xf32>
    %346 = vector.extract_strided_slice %321 {offsets = [0, 8], sizes = [8, 8], strides = [1, 1]} : vector<8x32xf32> to vector<8x8xf32>
    %347 = vector.extract_strided_slice %322 {offsets = [0, 8], sizes = [8, 8], strides = [1, 1]} : vector<8x32xf32> to vector<8x8xf32>
    %cst_144 = arith.constant dense<0.000000e+00> : vector<8x8xf32>
    %348 = tpu.matmul %345, %346, %cst_144 {dimension_numbers = #tpu.dot_dimension_numbers<[1], [1], [0], [0], [0, 0, 1, 0], [], []>} : vector<8x8xf32>, vector<8x8xf32>, vector<8x8xf32> -> vector<8x8xf32>
    %cst_145 = arith.constant 0.353553385 : f32
    %349 = vector.broadcast %cst_145 : f32 to vector<8x8xf32>
    %350 = arith.mulf %348, %349 : vector<8x8xf32>
    %351 = vector.broadcast %323 : vector<1x8xf32> to vector<8x8xf32>
    %352 = arith.addf %350, %351 : vector<8x8xf32>
    %cst_146 = arith.constant dense<0xFF800000> : vector<8xf32>
    %353 = vector.multi_reduction <maximumf>, %352, %cst_146 [1] : vector<8x8xf32> to vector<8xf32>
    %354 = vector.shape_cast %353 : vector<8xf32> to vector<8x1xf32>
    %355 = vector.broadcast %354 : vector<8x1xf32> to vector<8x8xf32>
    %356 = arith.subf %352, %355 : vector<8x8xf32>
    %357 = math.exp %356 : vector<8x8xf32>
    %cst_147 = arith.constant dense<0.000000e+00> : vector<8xf32>
    %358 = vector.multi_reduction <add>, %357, %cst_147 [1] : vector<8x8xf32> to vector<8xf32>
    %359 = vector.shape_cast %358 : vector<8xf32> to vector<8x1xf32>
    %360 = tpu.reciprocal %359 {approx = true} : vector<8x1xf32> -> vector<8x1xf32>
    %361 = vector.broadcast %360 : vector<8x1xf32> to vector<8x8xf32>
    %362 = arith.mulf %357, %361 : vector<8x8xf32>
    %cst_148 = arith.constant dense<0.000000e+00> : vector<8x8xf32>
    %363 = tpu.matmul %362, %347, %cst_148 {dimension_numbers = #tpu.dot_dimension_numbers<[1], [0], [0], [1], [0, 0, 1, 1], [], []>} : vector<8x8xf32>, vector<8x8xf32>, vector<8x8xf32> -> vector<8x8xf32>
    %364 = vector.extract_strided_slice %302 {offsets = [8, 0], sizes = [8, 32], strides = [1, 1]} : vector<32x32xf32> to vector<8x32xf32>
    %cst_149 = arith.constant dense<0.000000e+00> : vector<8x32xf32>
    %365 = tpu.matmul %363, %364, %cst_149 {dimension_numbers = #tpu.dot_dimension_numbers<[1], [0], [0], [1], [0, 0, 1, 1], [], []>} : vector<8x8xf32>, vector<8x32xf32>, vector<8x32xf32> -> vector<8x32xf32>
    %366 = arith.addf %344, %365 : vector<8x32xf32>
    %367 = vector.extract_strided_slice %320 {offsets = [0, 16], sizes = [8, 8], strides = [1, 1]} : vector<8x32xf32> to vector<8x8xf32>
    %368 = vector.extract_strided_slice %321 {offsets = [0, 16], sizes = [8, 8], strides = [1, 1]} : vector<8x32xf32> to vector<8x8xf32>
    %369 = vector.extract_strided_slice %322 {offsets = [0, 16], sizes = [8, 8], strides = [1, 1]} : vector<8x32xf32> to vector<8x8xf32>
    %cst_150 = arith.constant dense<0.000000e+00> : vector<8x8xf32>
    %370 = tpu.matmul %367, %368, %cst_150 {dimension_numbers = #tpu.dot_dimension_numbers<[1], [1], [0], [0], [0, 0, 1, 0], [], []>} : vector<8x8xf32>, vector<8x8xf32>, vector<8x8xf32> -> vector<8x8xf32>
    %cst_151 = arith.constant 0.353553385 : f32
    %371 = vector.broadcast %cst_151 : f32 to vector<8x8xf32>
    %372 = arith.mulf %370, %371 : vector<8x8xf32>
    %373 = vector.broadcast %323 : vector<1x8xf32> to vector<8x8xf32>
    %374 = arith.addf %372, %373 : vector<8x8xf32>
    %cst_152 = arith.constant dense<0xFF800000> : vector<8xf32>
    %375 = vector.multi_reduction <maximumf>, %374, %cst_152 [1] : vector<8x8xf32> to vector<8xf32>
    %376 = vector.shape_cast %375 : vector<8xf32> to vector<8x1xf32>
    %377 = vector.broadcast %376 : vector<8x1xf32> to vector<8x8xf32>
    %378 = arith.subf %374, %377 : vector<8x8xf32>
    %379 = math.exp %378 : vector<8x8xf32>
    %cst_153 = arith.constant dense<0.000000e+00> : vector<8xf32>
    %380 = vector.multi_reduction <add>, %379, %cst_153 [1] : vector<8x8xf32> to vector<8xf32>
    %381 = vector.shape_cast %380 : vector<8xf32> to vector<8x1xf32>
    %382 = tpu.reciprocal %381 {approx = true} : vector<8x1xf32> -> vector<8x1xf32>
    %383 = vector.broadcast %382 : vector<8x1xf32> to vector<8x8xf32>
    %384 = arith.mulf %379, %383 : vector<8x8xf32>
    %cst_154 = arith.constant dense<0.000000e+00> : vector<8x8xf32>
    %385 = tpu.matmul %384, %369, %cst_154 {dimension_numbers = #tpu.dot_dimension_numbers<[1], [0], [0], [1], [0, 0, 1, 1], [], []>} : vector<8x8xf32>, vector<8x8xf32>, vector<8x8xf32> -> vector<8x8xf32>
    %386 = vector.extract_strided_slice %302 {offsets = [16, 0], sizes = [8, 32], strides = [1, 1]} : vector<32x32xf32> to vector<8x32xf32>
    %cst_155 = arith.constant dense<0.000000e+00> : vector<8x32xf32>
    %387 = tpu.matmul %385, %386, %cst_155 {dimension_numbers = #tpu.dot_dimension_numbers<[1], [0], [0], [1], [0, 0, 1, 1], [], []>} : vector<8x8xf32>, vector<8x32xf32>, vector<8x32xf32> -> vector<8x32xf32>
    %388 = arith.addf %366, %387 : vector<8x32xf32>
    %389 = vector.extract_strided_slice %320 {offsets = [0, 24], sizes = [8, 8], strides = [1, 1]} : vector<8x32xf32> to vector<8x8xf32>
    %390 = vector.extract_strided_slice %321 {offsets = [0, 24], sizes = [8, 8], strides = [1, 1]} : vector<8x32xf32> to vector<8x8xf32>
    %391 = vector.extract_strided_slice %322 {offsets = [0, 24], sizes = [8, 8], strides = [1, 1]} : vector<8x32xf32> to vector<8x8xf32>
    %cst_156 = arith.constant dense<0.000000e+00> : vector<8x8xf32>
    %392 = tpu.matmul %389, %390, %cst_156 {dimension_numbers = #tpu.dot_dimension_numbers<[1], [1], [0], [0], [0, 0, 1, 0], [], []>} : vector<8x8xf32>, vector<8x8xf32>, vector<8x8xf32> -> vector<8x8xf32>
    %cst_157 = arith.constant 0.353553385 : f32
    %393 = vector.broadcast %cst_157 : f32 to vector<8x8xf32>
    %394 = arith.mulf %392, %393 : vector<8x8xf32>
    %395 = vector.broadcast %323 : vector<1x8xf32> to vector<8x8xf32>
    %396 = arith.addf %394, %395 : vector<8x8xf32>
    %cst_158 = arith.constant dense<0xFF800000> : vector<8xf32>
    %397 = vector.multi_reduction <maximumf>, %396, %cst_158 [1] : vector<8x8xf32> to vector<8xf32>
    %398 = vector.shape_cast %397 : vector<8xf32> to vector<8x1xf32>
    %399 = vector.broadcast %398 : vector<8x1xf32> to vector<8x8xf32>
    %400 = arith.subf %396, %399 : vector<8x8xf32>
    %401 = math.exp %400 : vector<8x8xf32>
    %cst_159 = arith.constant dense<0.000000e+00> : vector<8xf32>
    %402 = vector.multi_reduction <add>, %401, %cst_159 [1] : vector<8x8xf32> to vector<8xf32>
    %403 = vector.shape_cast %402 : vector<8xf32> to vector<8x1xf32>
    %404 = tpu.reciprocal %403 {approx = true} : vector<8x1xf32> -> vector<8x1xf32>
    %405 = vector.broadcast %404 : vector<8x1xf32> to vector<8x8xf32>
    %406 = arith.mulf %401, %405 : vector<8x8xf32>
    %cst_160 = arith.constant dense<0.000000e+00> : vector<8x8xf32>
    %407 = tpu.matmul %406, %391, %cst_160 {dimension_numbers = #tpu.dot_dimension_numbers<[1], [0], [0], [1], [0, 0, 1, 1], [], []>} : vector<8x8xf32>, vector<8x8xf32>, vector<8x8xf32> -> vector<8x8xf32>
    %408 = vector.extract_strided_slice %302 {offsets = [24, 0], sizes = [8, 32], strides = [1, 1]} : vector<32x32xf32> to vector<8x32xf32>
    %cst_161 = arith.constant dense<0.000000e+00> : vector<8x32xf32>
    %409 = tpu.matmul %407, %408, %cst_161 {dimension_numbers = #tpu.dot_dimension_numbers<[1], [0], [0], [1], [0, 0, 1, 1], [], []>} : vector<8x8xf32>, vector<8x32xf32>, vector<8x32xf32> -> vector<8x32xf32>
    %410 = arith.addf %388, %409 : vector<8x32xf32>
    %411 = vector.extract_strided_slice %319 {offsets = [8, 0], sizes = [8, 32], strides = [1, 1]} : vector<16x96xf32> to vector<8x32xf32>
    %412 = vector.extract_strided_slice %319 {offsets = [8, 32], sizes = [8, 32], strides = [1, 1]} : vector<16x96xf32> to vector<8x32xf32>
    %413 = vector.extract_strided_slice %319 {offsets = [8, 64], sizes = [8, 32], strides = [1, 1]} : vector<16x96xf32> to vector<8x32xf32>
    %c1_162 = arith.constant 1 : index
    %c0_163 = arith.constant 0 : index
    %414 = vector.load %arg2[%c1_162, %c0_163] : memref<2x8xf32, #tpu.memory_space<vmem>>, vector<1x8xf32>
    %415 = vector.extract_strided_slice %411 {offsets = [0, 0], sizes = [8, 8], strides = [1, 1]} : vector<8x32xf32> to vector<8x8xf32>
    %416 = vector.extract_strided_slice %412 {offsets = [0, 0], sizes = [8, 8], strides = [1, 1]} : vector<8x32xf32> to vector<8x8xf32>
    %417 = vector.extract_strided_slice %413 {offsets = [0, 0], sizes = [8, 8], strides = [1, 1]} : vector<8x32xf32> to vector<8x8xf32>
    %cst_164 = arith.constant dense<0.000000e+00> : vector<8x8xf32>
    %418 = tpu.matmul %415, %416, %cst_164 {dimension_numbers = #tpu.dot_dimension_numbers<[1], [1], [0], [0], [0, 0, 1, 0], [], []>} : vector<8x8xf32>, vector<8x8xf32>, vector<8x8xf32> -> vector<8x8xf32>
    %cst_165 = arith.constant 0.353553385 : f32
    %419 = vector.broadcast %cst_165 : f32 to vector<8x8xf32>
    %420 = arith.mulf %418, %419 : vector<8x8xf32>
    %421 = vector.broadcast %414 : vector<1x8xf32> to vector<8x8xf32>
    %422 = arith.addf %420, %421 : vector<8x8xf32>
    %cst_166 = arith.constant dense<0xFF800000> : vector<8xf32>
    %423 = vector.multi_reduction <maximumf>, %422, %cst_166 [1] : vector<8x8xf32> to vector<8xf32>
    %424 = vector.shape_cast %423 : vector<8xf32> to vector<8x1xf32>
    %425 = vector.broadcast %424 : vector<8x1xf32> to vector<8x8xf32>
    %426 = arith.subf %422, %425 : vector<8x8xf32>
    %427 = math.exp %426 : vector<8x8xf32>
    %cst_167 = arith.constant dense<0.000000e+00> : vector<8xf32>
    %428 = vector.multi_reduction <add>, %427, %cst_167 [1] : vector<8x8xf32> to vector<8xf32>
    %429 = vector.shape_cast %428 : vector<8xf32> to vector<8x1xf32>
    %430 = tpu.reciprocal %429 {approx = true} : vector<8x1xf32> -> vector<8x1xf32>
    %431 = vector.broadcast %430 : vector<8x1xf32> to vector<8x8xf32>
    %432 = arith.mulf %427, %431 : vector<8x8xf32>
    %cst_168 = arith.constant dense<0.000000e+00> : vector<8x8xf32>
    %433 = tpu.matmul %432, %417, %cst_168 {dimension_numbers = #tpu.dot_dimension_numbers<[1], [0], [0], [1], [0, 0, 1, 1], [], []>} : vector<8x8xf32>, vector<8x8xf32>, vector<8x8xf32> -> vector<8x8xf32>
    %434 = vector.extract_strided_slice %302 {offsets = [0, 0], sizes = [8, 32], strides = [1, 1]} : vector<32x32xf32> to vector<8x32xf32>
    %cst_169 = arith.constant dense<0.000000e+00> : vector<8x32xf32>
    %435 = tpu.matmul %433, %434, %cst_169 {dimension_numbers = #tpu.dot_dimension_numbers<[1], [0], [0], [1], [0, 0, 1, 1], [], []>} : vector<8x8xf32>, vector<8x32xf32>, vector<8x32xf32> -> vector<8x32xf32>
    %436 = vector.extract_strided_slice %411 {offsets = [0, 8], sizes = [8, 8], strides = [1, 1]} : vector<8x32xf32> to vector<8x8xf32>
    %437 = vector.extract_strided_slice %412 {offsets = [0, 8], sizes = [8, 8], strides = [1, 1]} : vector<8x32xf32> to vector<8x8xf32>
    %438 = vector.extract_strided_slice %413 {offsets = [0, 8], sizes = [8, 8], strides = [1, 1]} : vector<8x32xf32> to vector<8x8xf32>
    %cst_170 = arith.constant dense<0.000000e+00> : vector<8x8xf32>
    %439 = tpu.matmul %436, %437, %cst_170 {dimension_numbers = #tpu.dot_dimension_numbers<[1], [1], [0], [0], [0, 0, 1, 0], [], []>} : vector<8x8xf32>, vector<8x8xf32>, vector<8x8xf32> -> vector<8x8xf32>
    %cst_171 = arith.constant 0.353553385 : f32
    %440 = vector.broadcast %cst_171 : f32 to vector<8x8xf32>
    %441 = arith.mulf %439, %440 : vector<8x8xf32>
    %442 = vector.broadcast %414 : vector<1x8xf32> to vector<8x8xf32>
    %443 = arith.addf %441, %442 : vector<8x8xf32>
    %cst_172 = arith.constant dense<0xFF800000> : vector<8xf32>
    %444 = vector.multi_reduction <maximumf>, %443, %cst_172 [1] : vector<8x8xf32> to vector<8xf32>
    %445 = vector.shape_cast %444 : vector<8xf32> to vector<8x1xf32>
    %446 = vector.broadcast %445 : vector<8x1xf32> to vector<8x8xf32>
    %447 = arith.subf %443, %446 : vector<8x8xf32>
    %448 = math.exp %447 : vector<8x8xf32>
    %cst_173 = arith.constant dense<0.000000e+00> : vector<8xf32>
    %449 = vector.multi_reduction <add>, %448, %cst_173 [1] : vector<8x8xf32> to vector<8xf32>
    %450 = vector.shape_cast %449 : vector<8xf32> to vector<8x1xf32>
    %451 = tpu.reciprocal %450 {approx = true} : vector<8x1xf32> -> vector<8x1xf32>
    %452 = vector.broadcast %451 : vector<8x1xf32> to vector<8x8xf32>
    %453 = arith.mulf %448, %452 : vector<8x8xf32>
    %cst_174 = arith.constant dense<0.000000e+00> : vector<8x8xf32>
    %454 = tpu.matmul %453, %438, %cst_174 {dimension_numbers = #tpu.dot_dimension_numbers<[1], [0], [0], [1], [0, 0, 1, 1], [], []>} : vector<8x8xf32>, vector<8x8xf32>, vector<8x8xf32> -> vector<8x8xf32>
    %455 = vector.extract_strided_slice %302 {offsets = [8, 0], sizes = [8, 32], strides = [1, 1]} : vector<32x32xf32> to vector<8x32xf32>
    %cst_175 = arith.constant dense<0.000000e+00> : vector<8x32xf32>
    %456 = tpu.matmul %454, %455, %cst_175 {dimension_numbers = #tpu.dot_dimension_numbers<[1], [0], [0], [1], [0, 0, 1, 1], [], []>} : vector<8x8xf32>, vector<8x32xf32>, vector<8x32xf32> -> vector<8x32xf32>
    %457 = arith.addf %435, %456 : vector<8x32xf32>
    %458 = vector.extract_strided_slice %411 {offsets = [0, 16], sizes = [8, 8], strides = [1, 1]} : vector<8x32xf32> to vector<8x8xf32>
    %459 = vector.extract_strided_slice %412 {offsets = [0, 16], sizes = [8, 8], strides = [1, 1]} : vector<8x32xf32> to vector<8x8xf32>
    %460 = vector.extract_strided_slice %413 {offsets = [0, 16], sizes = [8, 8], strides = [1, 1]} : vector<8x32xf32> to vector<8x8xf32>
    %cst_176 = arith.constant dense<0.000000e+00> : vector<8x8xf32>
    %461 = tpu.matmul %458, %459, %cst_176 {dimension_numbers = #tpu.dot_dimension_numbers<[1], [1], [0], [0], [0, 0, 1, 0], [], []>} : vector<8x8xf32>, vector<8x8xf32>, vector<8x8xf32> -> vector<8x8xf32>
    %cst_177 = arith.constant 0.353553385 : f32
    %462 = vector.broadcast %cst_177 : f32 to vector<8x8xf32>
    %463 = arith.mulf %461, %462 : vector<8x8xf32>
    %464 = vector.broadcast %414 : vector<1x8xf32> to vector<8x8xf32>
    %465 = arith.addf %463, %464 : vector<8x8xf32>
    %cst_178 = arith.constant dense<0xFF800000> : vector<8xf32>
    %466 = vector.multi_reduction <maximumf>, %465, %cst_178 [1] : vector<8x8xf32> to vector<8xf32>
    %467 = vector.shape_cast %466 : vector<8xf32> to vector<8x1xf32>
    %468 = vector.broadcast %467 : vector<8x1xf32> to vector<8x8xf32>
    %469 = arith.subf %465, %468 : vector<8x8xf32>
    %470 = math.exp %469 : vector<8x8xf32>
    %cst_179 = arith.constant dense<0.000000e+00> : vector<8xf32>
    %471 = vector.multi_reduction <add>, %470, %cst_179 [1] : vector<8x8xf32> to vector<8xf32>
    %472 = vector.shape_cast %471 : vector<8xf32> to vector<8x1xf32>
    %473 = tpu.reciprocal %472 {approx = true} : vector<8x1xf32> -> vector<8x1xf32>
    %474 = vector.broadcast %473 : vector<8x1xf32> to vector<8x8xf32>
    %475 = arith.mulf %470, %474 : vector<8x8xf32>
    %cst_180 = arith.constant dense<0.000000e+00> : vector<8x8xf32>
    %476 = tpu.matmul %475, %460, %cst_180 {dimension_numbers = #tpu.dot_dimension_numbers<[1], [0], [0], [1], [0, 0, 1, 1], [], []>} : vector<8x8xf32>, vector<8x8xf32>, vector<8x8xf32> -> vector<8x8xf32>
    %477 = vector.extract_strided_slice %302 {offsets = [16, 0], sizes = [8, 32], strides = [1, 1]} : vector<32x32xf32> to vector<8x32xf32>
    %cst_181 = arith.constant dense<0.000000e+00> : vector<8x32xf32>
    %478 = tpu.matmul %476, %477, %cst_181 {dimension_numbers = #tpu.dot_dimension_numbers<[1], [0], [0], [1], [0, 0, 1, 1], [], []>} : vector<8x8xf32>, vector<8x32xf32>, vector<8x32xf32> -> vector<8x32xf32>
    %479 = arith.addf %457, %478 : vector<8x32xf32>
    %480 = vector.extract_strided_slice %411 {offsets = [0, 24], sizes = [8, 8], strides = [1, 1]} : vector<8x32xf32> to vector<8x8xf32>
    %481 = vector.extract_strided_slice %412 {offsets = [0, 24], sizes = [8, 8], strides = [1, 1]} : vector<8x32xf32> to vector<8x8xf32>
    %482 = vector.extract_strided_slice %413 {offsets = [0, 24], sizes = [8, 8], strides = [1, 1]} : vector<8x32xf32> to vector<8x8xf32>
    %cst_182 = arith.constant dense<0.000000e+00> : vector<8x8xf32>
    %483 = tpu.matmul %480, %481, %cst_182 {dimension_numbers = #tpu.dot_dimension_numbers<[1], [1], [0], [0], [0, 0, 1, 0], [], []>} : vector<8x8xf32>, vector<8x8xf32>, vector<8x8xf32> -> vector<8x8xf32>
    %cst_183 = arith.constant 0.353553385 : f32
    %484 = vector.broadcast %cst_183 : f32 to vector<8x8xf32>
    %485 = arith.mulf %483, %484 : vector<8x8xf32>
    %486 = vector.broadcast %414 : vector<1x8xf32> to vector<8x8xf32>
    %487 = arith.addf %485, %486 : vector<8x8xf32>
    %cst_184 = arith.constant dense<0xFF800000> : vector<8xf32>
    %488 = vector.multi_reduction <maximumf>, %487, %cst_184 [1] : vector<8x8xf32> to vector<8xf32>
    %489 = vector.shape_cast %488 : vector<8xf32> to vector<8x1xf32>
    %490 = vector.broadcast %489 : vector<8x1xf32> to vector<8x8xf32>
    %491 = arith.subf %487, %490 : vector<8x8xf32>
    %492 = math.exp %491 : vector<8x8xf32>
    %cst_185 = arith.constant dense<0.000000e+00> : vector<8xf32>
    %493 = vector.multi_reduction <add>, %492, %cst_185 [1] : vector<8x8xf32> to vector<8xf32>
    %494 = vector.shape_cast %493 : vector<8xf32> to vector<8x1xf32>
    %495 = tpu.reciprocal %494 {approx = true} : vector<8x1xf32> -> vector<8x1xf32>
    %496 = vector.broadcast %495 : vector<8x1xf32> to vector<8x8xf32>
    %497 = arith.mulf %492, %496 : vector<8x8xf32>
    %cst_186 = arith.constant dense<0.000000e+00> : vector<8x8xf32>
    %498 = tpu.matmul %497, %482, %cst_186 {dimension_numbers = #tpu.dot_dimension_numbers<[1], [0], [0], [1], [0, 0, 1, 1], [], []>} : vector<8x8xf32>, vector<8x8xf32>, vector<8x8xf32> -> vector<8x8xf32>
    %499 = vector.extract_strided_slice %302 {offsets = [24, 0], sizes = [8, 32], strides = [1, 1]} : vector<32x32xf32> to vector<8x32xf32>
    %cst_187 = arith.constant dense<0.000000e+00> : vector<8x32xf32>
    %500 = tpu.matmul %498, %499, %cst_187 {dimension_numbers = #tpu.dot_dimension_numbers<[1], [0], [0], [1], [0, 0, 1, 1], [], []>} : vector<8x8xf32>, vector<8x32xf32>, vector<8x32xf32> -> vector<8x32xf32>
    %501 = arith.addf %479, %500 : vector<8x32xf32>
    %502 = tpu.concatenate %410, %501 in 0 : vector<8x32xf32>, vector<8x32xf32> -> vector<16x32xf32>
    %503 = vector.broadcast %304 : vector<1x32xf32> to vector<16x32xf32>
    %504 = arith.addf %502, %503 : vector<16x32xf32>
    %505 = arith.addf %504, %296 : vector<16x32xf32>
    %506 = vector.extract_strided_slice %306 {offsets = [0, 0], sizes = [1, 32], strides = [1, 1]} : vector<2x32xf32> to vector<1x32xf32>
    %507 = vector.extract_strided_slice %306 {offsets = [1, 0], sizes = [1, 32], strides = [1, 1]} : vector<2x32xf32> to vector<1x32xf32>
    %cst_188 = arith.constant dense<0.000000e+00> : vector<16xf32>
    %508 = vector.multi_reduction <add>, %505, %cst_188 [1] : vector<16x32xf32> to vector<16xf32>
    %509 = vector.shape_cast %508 : vector<16xf32> to vector<16x1xf32>
    %cst_189 = arith.constant 3.200000e+01 : f32
    %510 = vector.broadcast %cst_189 : f32 to vector<16x1xf32>
    %511 = arith.divf %509, %510 : vector<16x1xf32>
    %512 = vector.broadcast %511 : vector<16x1xf32> to vector<16x32xf32>
    %513 = arith.subf %505, %512 : vector<16x32xf32>
    %514 = arith.mulf %513, %513 : vector<16x32xf32>
    %cst_190 = arith.constant dense<0.000000e+00> : vector<16xf32>
    %515 = vector.multi_reduction <add>, %514, %cst_190 [1] : vector<16x32xf32> to vector<16xf32>
    %516 = vector.shape_cast %515 : vector<16xf32> to vector<16x1xf32>
    %cst_191 = arith.constant 3.200000e+01 : f32
    %517 = vector.broadcast %cst_191 : f32 to vector<16x1xf32>
    %518 = arith.divf %516, %517 : vector<16x1xf32>
    %cst_192 = arith.constant 9.99999996E-13 : f32
    %519 = vector.broadcast %cst_192 : f32 to vector<16x1xf32>
    %520 = arith.addf %518, %519 : vector<16x1xf32>
    %521 = math.rsqrt %520 : vector<16x1xf32>
    %522 = vector.broadcast %521 : vector<16x1xf32> to vector<16x32xf32>
    %523 = arith.mulf %513, %522 : vector<16x32xf32>
    %524 = vector.broadcast %506 : vector<1x32xf32> to vector<16x32xf32>
    %525 = arith.mulf %523, %524 : vector<16x32xf32>
    %526 = vector.broadcast %507 : vector<1x32xf32> to vector<16x32xf32>
    %527 = arith.addf %525, %526 : vector<16x32xf32>
    %cst_193 = arith.constant dense<0.000000e+00> : vector<16x64xf32>
    %528 = tpu.matmul %527, %308, %cst_193 {dimension_numbers = #tpu.dot_dimension_numbers<[1], [0], [0], [1], [0, 0, 1, 1], [], []>} : vector<16x32xf32>, vector<32x64xf32>, vector<16x64xf32> -> vector<16x64xf32>
    %529 = vector.broadcast %310 : vector<1x64xf32> to vector<16x64xf32>
    %530 = arith.addf %528, %529 : vector<16x64xf32>
    %cst_194 = arith.constant 5.000000e-01 : f32
    %531 = vector.broadcast %cst_194 : f32 to vector<16x64xf32>
    %532 = arith.mulf %531, %530 : vector<16x64xf32>
    %cst_195 = arith.constant 4.471500e-02 : f32
    %533 = vector.broadcast %cst_195 : f32 to vector<16x64xf32>
    %534 = arith.mulf %533, %530 : vector<16x64xf32>
    %535 = arith.mulf %534, %530 : vector<16x64xf32>
    %536 = arith.mulf %535, %530 : vector<16x64xf32>
    %537 = arith.addf %530, %536 : vector<16x64xf32>
    %cst_196 = arith.constant 0.797884583 : f32
    %538 = vector.broadcast %cst_196 : f32 to vector<16x64xf32>
    %539 = arith.mulf %538, %537 : vector<16x64xf32>
    %540 = math.tanh %539 : vector<16x64xf32>
    %cst_197 = arith.constant 1.000000e+00 : f32
    %541 = vector.broadcast %cst_197 : f32 to vector<16x64xf32>
    %542 = arith.addf %541, %540 : vector<16x64xf32>
    %543 = arith.mulf %532, %542 : vector<16x64xf32>
    %cst_198 = arith.constant dense<0.000000e+00> : vector<16x32xf32>
    %544 = tpu.matmul %543, %312, %cst_198 {dimension_numbers = #tpu.dot_dimension_numbers<[1], [0], [0], [1], [0, 0, 1, 1], [], []>} : vector<16x64xf32>, vector<64x32xf32>, vector<16x32xf32> -> vector<16x32xf32>
    %545 = vector.broadcast %314 : vector<1x32xf32> to vector<16x32xf32>
    %546 = arith.addf %544, %545 : vector<16x32xf32>
    %547 = arith.addf %546, %527 : vector<16x32xf32>
    %548 = vector.extract_strided_slice %316 {offsets = [0, 0], sizes = [1, 32], strides = [1, 1]} : vector<2x32xf32> to vector<1x32xf32>
    %549 = vector.extract_strided_slice %316 {offsets = [1, 0], sizes = [1, 32], strides = [1, 1]} : vector<2x32xf32> to vector<1x32xf32>
    %cst_199 = arith.constant dense<0.000000e+00> : vector<16xf32>
    %550 = vector.multi_reduction <add>, %547, %cst_199 [1] : vector<16x32xf32> to vector<16xf32>
    %551 = vector.shape_cast %550 : vector<16xf32> to vector<16x1xf32>
    %cst_200 = arith.constant 3.200000e+01 : f32
    %552 = vector.broadcast %cst_200 : f32 to vector<16x1xf32>
    %553 = arith.divf %551, %552 : vector<16x1xf32>
    %554 = vector.broadcast %553 : vector<16x1xf32> to vector<16x32xf32>
    %555 = arith.subf %547, %554 : vector<16x32xf32>
    %556 = arith.mulf %555, %555 : vector<16x32xf32>
    %cst_201 = arith.constant dense<0.000000e+00> : vector<16xf32>
    %557 = vector.multi_reduction <add>, %556, %cst_201 [1] : vector<16x32xf32> to vector<16xf32>
    %558 = vector.shape_cast %557 : vector<16xf32> to vector<16x1xf32>
    %cst_202 = arith.constant 3.200000e+01 : f32
    %559 = vector.broadcast %cst_202 : f32 to vector<16x1xf32>
    %560 = arith.divf %558, %559 : vector<16x1xf32>
    %cst_203 = arith.constant 9.99999996E-13 : f32
    %561 = vector.broadcast %cst_203 : f32 to vector<16x1xf32>
    %562 = arith.addf %560, %561 : vector<16x1xf32>
    %563 = math.rsqrt %562 : vector<16x1xf32>
    %564 = vector.broadcast %563 : vector<16x1xf32> to vector<16x32xf32>
    %565 = arith.mulf %555, %564 : vector<16x32xf32>
    %566 = vector.broadcast %548 : vector<1x32xf32> to vector<16x32xf32>
    %567 = arith.mulf %565, %566 : vector<16x32xf32>
    %568 = vector.broadcast %549 : vector<1x32xf32> to vector<16x32xf32>
    %569 = arith.addf %567, %568 : vector<16x32xf32>
    %c0_204 = arith.constant 0 : index
    %c0_205 = arith.constant 0 : index
    %570 = vector.load %arg14[%c0_204, %c0_205] : memref<32x32xf32, #tpu.memory_space<vmem>>, vector<32x32xf32>
    %cst_206 = arith.constant dense<0.000000e+00> : vector<16x32xf32>
    %571 = tpu.matmul %569, %570, %cst_206 {dimension_numbers = #tpu.dot_dimension_numbers<[1], [0], [0], [1], [0, 0, 1, 1], [], []>} : vector<16x32xf32>, vector<32x32xf32>, vector<16x32xf32> -> vector<16x32xf32>
    %c0_207 = arith.constant 0 : index
    %c0_208 = arith.constant 0 : index
    %572 = vector.load %arg15[%c0_207, %c0_208] : memref<1x32xf32, #tpu.memory_space<vmem>>, vector<1x32xf32>
    %573 = vector.broadcast %572 : vector<1x32xf32> to vector<16x32xf32>
    %574 = arith.addf %571, %573 : vector<16x32xf32>
    %575 = math.tanh %574 : vector<16x32xf32>
    %c0_209 = arith.constant 0 : index
    %c0_210 = arith.constant 0 : index
    %576 = vector.load %arg16[%c0_209, %c0_210] : memref<32x128xf32, #tpu.memory_space<vmem>>, vector<32x128xf32>
    %cst_211 = arith.constant dense<0.000000e+00> : vector<16x128xf32>
    %577 = tpu.matmul %575, %576, %cst_211 {dimension_numbers = #tpu.dot_dimension_numbers<[1], [0], [0], [1], [0, 0, 1, 1], [], []>} : vector<16x32xf32>, vector<32x128xf32>, vector<16x128xf32> -> vector<16x128xf32>
    %c0_212 = arith.constant 0 : index
    %c0_213 = arith.constant 0 : index
    %578 = vector.load %arg17[%c0_212, %c0_213] : memref<1x128xf32, #tpu.memory_space<vmem>>, vector<1x128xf32>
    %579 = vector.broadcast %578 : vector<1x128xf32> to vector<16x128xf32>
    %580 = arith.addf %577, %579 : vector<16x128xf32>
    %581 = vector.extract_strided_slice %580 {offsets = [0, 0], sizes = [1, 128], strides = [1, 1]} : vector<16x128xf32> to vector<1x128xf32>
    %c0_214 = arith.constant 0 : index
    %c0_215 = arith.constant 0 : index
    %582 = vector.load %arg18[%c0_214, %c0_215] : memref<2x128xf32, #tpu.memory_space<vmem>>, vector<1x128xf32>
    tpu.vector_store %arg18[%c0_214, %c0_215], %581 {strides = array<i32>} : memref<2x128xf32, #tpu.memory_space<vmem>>, vector<1x128xf32>,
    %583 = vector.extract_strided_slice %580 {offsets = [8, 0], sizes = [1, 128], strides = [1, 1]} : vector<16x128xf32> to vector<1x128xf32>
    %c1_216 = arith.constant 1 : index
    %c0_217 = arith.constant 0 : index
    %584 = vector.load %arg18[%c1_216, %c0_217] : memref<2x128xf32, #tpu.memory_space<vmem>>, vector<1x128xf32>
    tpu.vector_store %arg18[%c1_216, %c0_217], %583 {strides = array<i32>} : memref<2x128xf32, #tpu.memory_space<vmem>>, vector<1x128xf32>,
    return
  }
  func.func @transform_0(%arg0: i32) -> (i32, i32) {
    %c0_i32 = arith.constant 0 : i32
    %c0_i32_0 = arith.constant 0 : i32
    %c0_i32_1 = arith.constant 0 : i32
    return %c0_i32, %c0_i32_0 : i32, i32
  }
  func.func @transform_1(%arg0: i32) -> (i32, i32) {
    %c0_i32 = arith.constant 0 : i32
    %c0_i32_0 = arith.constant 0 : i32
    %c0_i32_1 = arith.constant 0 : i32
    return %c0_i32, %c0_i32_0 : i32, i32
  }
  func.func @transform_2(%arg0: i32) -> (i32, i32) {
    %c0_i32 = arith.constant 0 : i32
    %c0_i32_0 = arith.constant 0 : i32
    %c0_i32_1 = arith.constant 0 : i32
    return %c0_i32, %c0_i32_0 : i32, i32
  }
  func.func @transform_3(%arg0: i32) -> (i32, i32, i32) {
    %c0_i32 = arith.constant 0 : i32
    %c0_i32_0 = arith.constant 0 : i32
    %c0_i32_1 = arith.constant 0 : i32
    %c0_i32_2 = arith.constant 0 : i32
    return %c0_i32, %c0_i32_0, %c0_i32_1 : i32, i32, i32
  }
  func.func @transform_4(%arg0: i32) -> (i32, i32, i32) {
    %c0_i32 = arith.constant 0 : i32
    %c0_i32_0 = arith.constant 0 : i32
    %c0_i32_1 = arith.constant 0 : i32
    %c0_i32_2 = arith.constant 0 : i32
    return %c0_i32, %c0_i32_0, %c0_i32_1 : i32, i32, i32
  }
  func.func @transform_5(%arg0: i32) -> (i32, i32, i32) {
    %c0_i32 = arith.constant 0 : i32
    %c0_i32_0 = arith.constant 0 : i32
    %c0_i32_1 = arith.constant 0 : i32
    %c0_i32_2 = arith.constant 0 : i32
    return %c0_i32, %c0_i32_0, %c0_i32_1 : i32, i32, i32
  }
  func.func @transform_6(%arg0: i32) -> (i32, i32, i32) {
    %c0_i32 = arith.constant 0 : i32
    %c0_i32_0 = arith.constant 0 : i32
    %c0_i32_1 = arith.constant 0 : i32
    %c0_i32_2 = arith.constant 0 : i32
    return %c0_i32, %c0_i32_0, %c0_i32_1 : i32, i32, i32
  }
  func.func @transform_7(%arg0: i32) -> (i32, i32, i32) {
    %c0_i32 = arith.constant 0 : i32
    %c0_i32_0 = arith.constant 0 : i32
    %c0_i32_1 = arith.constant 0 : i32
    %c0_i32_2 = arith.constant 0 : i32
    return %c0_i32, %c0_i32_0, %c0_i32_1 : i32, i32, i32
  }
  func.func @transform_8(%arg0: i32) -> (i32, i32, i32) {
    %c0_i32 = arith.constant 0 : i32
    %c0_i32_0 = arith.constant 0 : i32
    %c0_i32_1 = arith.constant 0 : i32
    %c0_i32_2 = arith.constant 0 : i32
    return %c0_i32, %c0_i32_0, %c0_i32_1 : i32, i32, i32
  }
  func.func @transform_9(%arg0: i32) -> (i32, i32, i32) {
    %c0_i32 = arith.constant 0 : i32
    %c0_i32_0 = arith.constant 0 : i32
    %c0_i32_1 = arith.constant 0 : i32
    %c0_i32_2 = arith.constant 0 : i32
    return %c0_i32, %c0_i32_0, %c0_i32_1 : i32, i32, i32
  }
  func.func @transform_10(%arg0: i32) -> (i32, i32, i32) {
    %c0_i32 = arith.constant 0 : i32
    %c0_i32_0 = arith.constant 0 : i32
    %c0_i32_1 = arith.constant 0 : i32
    %c0_i32_2 = arith.constant 0 : i32
    return %c0_i32, %c0_i32_0, %c0_i32_1 : i32, i32, i32
  }
  func.func @transform_11(%arg0: i32) -> (i32, i32, i32) {
    %c0_i32 = arith.constant 0 : i32
    %c0_i32_0 = arith.constant 0 : i32
    %c0_i32_1 = arith.constant 0 : i32
    %c0_i32_2 = arith.constant 0 : i32
    return %c0_i32, %c0_i32_0, %c0_i32_1 : i32, i32, i32
  }
  func.func @transform_12(%arg0: i32) -> (i32, i32, i32) {
    %c0_i32 = arith.constant 0 : i32
    %c0_i32_0 = arith.constant 0 : i32
    %c0_i32_1 = arith.constant 0 : i32
    %c0_i32_2 = arith.constant 0 : i32
    return %c0_i32, %c0_i32_0, %c0_i32_1 : i32, i32, i32
  }
  func.func @transform_13(%arg0: i32) -> (i32, i32) {
    %c0_i32 = arith.constant 0 : i32
    %c0_i32_0 = arith.constant 0 : i32
    %c0_i32_1 = arith.constant 0 : i32
    return %c0_i32, %c0_i32_0 : i32, i32
  }
  func.func @transform_14(%arg0: i32) -> (i32, i32) {
    %c0_i32 = arith.constant 0 : i32
    %c0_i32_0 = arith.constant 0 : i32
    %c0_i32_1 = arith.constant 0 : i32
    return %c0_i32, %c0_i32_0 : i32, i32
  }
  func.func @transform_15(%arg0: i32) -> (i32, i32) {
    %c0_i32 = arith.constant 0 : i32
    %c0_i32_0 = arith.constant 0 : i32
    %c0_i32_1 = arith.constant 0 : i32
    return %c0_i32, %c0_i32_0 : i32, i32
  }
  func.func @transform_16(%arg0: i32) -> (i32, i32) {
    %c0_i32 = arith.constant 0 : i32
    %c0_i32_0 = arith.constant 0 : i32
    %c0_i32_1 = arith.constant 0 : i32
    return %c0_i32, %c0_i32_0 : i32, i32
  }
  func.func @transform_17(%arg0: i32) -> (i32, i32) {
    %c0_i32 = arith.constant 0 : i32
    %c0_i32_0 = arith.constant 0 : i32
    %c0_i32_1 = arith.constant 0 : i32
    return %c0_i32, %c0_i32_0 : i32, i32
  }
}

</mosaic_0001>

<llo_original>
// kernel: roberta_classifier_forward.1
$region0: #{roberta_classifier_forward.1}
  #allocation0 [shape = 'u32[]', space=smem, size = 0x4, offset = 0x4, fixed_abs, tag = 'smem constant byte address 0x4 - core index']
  #allocation1 [shape = 'u32[72,128]{1,0:T(1,128)}', space=vmem, size = 0x9000, scoped, tag = 'internal scratch']
  %s0 = inlined_call_operand.vmem [shape: f32[16,32], index: 0, kind: input, shape index: {}]
  %s1 = inlined_call_operand.vmem [shape: f32[2,8], index: 1, kind: input, shape index: {}]
  %s2 = inlined_call_operand.vmem [shape: f32[2,32], index: 2, kind: input, shape index: {}]
  %s3 = inlined_call_operand.vmem [shape: f32[2,32,96], index: 3, kind: input, shape index: {}]
  %s4 = inlined_call_operand.vmem [shape: f32[2,1,96], index: 4, kind: input, shape index: {}]
  %s5 = inlined_call_operand.vmem [shape: f32[2,32,32], index: 5, kind: input, shape index: {}]
  %s6 = inlined_call_operand.vmem [shape: f32[2,1,32], index: 6, kind: input, shape index: {}]
  %s7 = inlined_call_operand.vmem [shape: f32[2,2,32], index: 7, kind: input, shape index: {}]
  %s8 = inlined_call_operand.vmem [shape: f32[2,32,64], index: 8, kind: input, shape index: {}]
  %s9 = inlined_call_operand.vmem [shape: f32[2,1,64], index: 9, kind: input, shape index: {}]
  %s10 = inlined_call_operand.vmem [shape: f32[2,64,32], index: 10, kind: input, shape index: {}]
  %s11 = inlined_call_operand.vmem [shape: f32[2,1,32], index: 11, kind: input, shape index: {}]
  %s12 = inlined_call_operand.vmem [shape: f32[2,2,32], index: 12, kind: input, shape index: {}]
  %s13 = inlined_call_operand.vmem [shape: f32[32,32], index: 13, kind: input, shape index: {}]
  %s14 = inlined_call_operand.vmem [shape: f32[1,32], index: 14, kind: input, shape index: {}]
  %s15 = inlined_call_operand.vmem [shape: f32[32,128], index: 15, kind: input, shape index: {}]
  %s16 = inlined_call_operand.vmem [shape: f32[1,128], index: 16, kind: input, shape index: {}]
  %s17 = inlined_call_operand.hbm [shape: f32[2,128], index: 17, kind: output, shape index: {}]
  %s18 = sld [smem:[#allocation0]]
  $region78: #{roberta_classifier_forward.1} parent=0
    _
  %s20 = ssub.s32 1, %s18
  %s21 = scalar_select 0, %s20, %s18
  $region1: #{roberta_classifier_forward.1} parent=0
    #allocation2 [shape = 'u8[1024]{0}', space=vmem, size = 0x400, scoped, tag = 'output window, operand 0, single buffered']
    #allocation3 [shape = 's32[1]{0}', space=sflag, size = 0x4, scoped, tag = 'scoped memory for roberta_classifier_forward.1']
    %22 = vsyncpa [#allocation3], 0
    // Predicated region
    $region2: #{roberta_classifier_forward.1} parent=1 // pred_check
      _
    $region3: #{roberta_classifier_forward.1} parent=1 // pred_check_branch
      %24 = sbr.rel (0) target = $region5
    $region4: #{roberta_classifier_forward.1} parent=1 // pred_region
      _
    $region5: #{roberta_classifier_forward.1} parent=1 // pred_fallthru
      _
    // Predicated region
    $region6: #{roberta_classifier_forward.1} parent=1 // pred_check
      _
    $region7: #{roberta_classifier_forward.1} parent=1 // pred_check_branch
      %26 = sbr.rel (0) target = $region9
    $region8: #{roberta_classifier_forward.1} parent=1 // pred_region
      _
    $region9: #{roberta_classifier_forward.1} parent=1 // pred_fallthru
      _
    // Predicated region
    $region10: #{roberta_classifier_forward.1} parent=1 // pred_check
      _
    $region11: #{roberta_classifier_forward.1} parent=1 // pred_check_branch
      %28 = sbr.rel (0) target = $region13
    $region12: #{roberta_classifier_forward.1} parent=1 // pred_region
      _
    $region13: #{roberta_classifier_forward.1} parent=1 // pred_fallthru
      _
    // Predicated region
    $region14: #{roberta_classifier_forward.1} parent=1 // pred_check
      _
    $region15: #{roberta_classifier_forward.1} parent=1 // pred_check_branch
      %30 = sbr.rel (0) target = $region17
    $region16: #{roberta_classifier_forward.1} parent=1 // pred_region
      _
    $region17: #{roberta_classifier_forward.1} parent=1 // pred_fallthru
      _
    // Predicated region
    $region18: #{roberta_classifier_forward.1} parent=1 // pred_check
      _
    $region19: #{roberta_classifier_forward.1} parent=1 // pred_check_branch
      %32 = sbr.rel (0) target = $region21
    $region20: #{roberta_classifier_forward.1} parent=1 // pred_region
      _
    $region21: #{roberta_classifier_forward.1} parent=1 // pred_fallthru
      _
    // Predicated region
    $region22: #{roberta_classifier_forward.1} parent=1 // pred_check
      _
    $region23: #{roberta_classifier_forward.1} parent=1 // pred_check_branch
      %34 = sbr.rel (0) target = $region25
    $region24: #{roberta_classifier_forward.1} parent=1 // pred_region
      _
    $region25: #{roberta_classifier_forward.1} parent=1 // pred_fallthru
      _
    // Predicated region
    $region26: #{roberta_classifier_forward.1} parent=1 // pred_check
      _
    $region27: #{roberta_classifier_forward.1} parent=1 // pred_check_branch
      %36 = sbr.rel (0) target = $region29
    $region28: #{roberta_classifier_forward.1} parent=1 // pred_region
      _
    $region29: #{roberta_classifier_forward.1} parent=1 // pred_fallthru
      _
    // Predicated region
    $region30: #{roberta_classifier_forward.1} parent=1 // pred_check
      _
    $region31: #{roberta_classifier_forward.1} parent=1 // pred_check_branch
      %38 = sbr.rel (0) target = $region33
    $region32: #{roberta_classifier_forward.1} parent=1 // pred_region
      _
    $region33: #{roberta_classifier_forward.1} parent=1 // pred_fallthru
      _
    // Predicated region
    $region34: #{roberta_classifier_forward.1} parent=1 // pred_check
      _
    $region35: #{roberta_classifier_forward.1} parent=1 // pred_check_branch
      %40 = sbr.rel (0) target = $region37
    $region36: #{roberta_classifier_forward.1} parent=1 // pred_region
      _
    $region37: #{roberta_classifier_forward.1} parent=1 // pred_fallthru
      _
    // Predicated region
    $region38: #{roberta_classifier_forward.1} parent=1 // pred_check
      _
    $region39: #{roberta_classifier_forward.1} parent=1 // pred_check_branch
      %42 = sbr.rel (0) target = $region41
    $region40: #{roberta_classifier_forward.1} parent=1 // pred_region
      _
    $region41: #{roberta_classifier_forward.1} parent=1 // pred_fallthru
      _
    // Predicated region
    $region42: #{roberta_classifier_forward.1} parent=1 // pred_check
      _
    $region43: #{roberta_classifier_forward.1} parent=1 // pred_check_branch
      %44 = sbr.rel (0) target = $region45
    $region44: #{roberta_classifier_forward.1} parent=1 // pred_region
      _
    $region45: #{roberta_classifier_forward.1} parent=1 // pred_fallthru
      _
    // Predicated region
    $region46: #{roberta_classifier_forward.1} parent=1 // pred_check
      _
    $region47: #{roberta_classifier_forward.1} parent=1 // pred_check_branch
      %46 = sbr.rel (0) target = $region49
    $region48: #{roberta_classifier_forward.1} parent=1 // pred_region
      _
    $region49: #{roberta_classifier_forward.1} parent=1 // pred_fallthru
      _
    // Predicated region
    $region50: #{roberta_classifier_forward.1} parent=1 // pred_check
      _
    $region51: #{roberta_classifier_forward.1} parent=1 // pred_check_branch
      %48 = sbr.rel (0) target = $region53
    $region52: #{roberta_classifier_forward.1} parent=1 // pred_region
      _
    $region53: #{roberta_classifier_forward.1} parent=1 // pred_fallthru
      _
    // Predicated region
    $region54: #{roberta_classifier_forward.1} parent=1 // pred_check
      _
    $region55: #{roberta_classifier_forward.1} parent=1 // pred_check_branch
      %50 = sbr.rel (0) target = $region57
    $region56: #{roberta_classifier_forward.1} parent=1 // pred_region
      _
    $region57: #{roberta_classifier_forward.1} parent=1 // pred_fallthru
      _
    // Predicated region
    $region58: #{roberta_classifier_forward.1} parent=1 // pred_check
      _
    $region59: #{roberta_classifier_forward.1} parent=1 // pred_check_branch
      %52 = sbr.rel (0) target = $region61
    $region60: #{roberta_classifier_forward.1} parent=1 // pred_region
      _
    $region61: #{roberta_classifier_forward.1} parent=1 // pred_fallthru
      _
    // Predicated region
    $region62: #{roberta_classifier_forward.1} parent=1 // pred_check
      _
    $region63: #{roberta_classifier_forward.1} parent=1 // pred_check_branch
      %54 = sbr.rel (0) target = $region65
    $region64: #{roberta_classifier_forward.1} parent=1 // pred_region
      _
    $region65: #{roberta_classifier_forward.1} parent=1 // pred_fallthru
      _
    // Predicated region
    $region66: #{roberta_classifier_forward.1} parent=1 // pred_check
      _
    $region67: #{roberta_classifier_forward.1} parent=1 // pred_check_branch
      %56 = sbr.rel (0) target = $region69
    $region68: #{roberta_classifier_forward.1} parent=1 // pred_region
      _
    $region69: #{roberta_classifier_forward.1} parent=1 // pred_fallthru
      _
    %v57 = vld [vmem:[%s2] sm:$0x3]
    %v58 = vld [vmem:[%s0] sm:$0xff]
    %v59 = vld [vmem:[%s0 + $0x8] sm:$0xff]
    %vm60 = vcmask 261120
    %v61 = vsel %vm60, %v58, 0.0
    %62 = vadd.xlane.f32.xlu0 %v61
    %v63 = vpop.xlane.xlu0 %62
    %v64 = vsel %vm60, %v59, 0.0
    %65 = vadd.xlane.f32.xlu0 %v64
    %v66 = vpop.xlane.xlu0 %65
    %v67 = vrcp.pop 32.0
    %v68 = vmul.f32 32.0, %v67
    %v69 = vsub.f32 1.0, %v68
    %v70 = vmul.f32 %v67, %v69
    %v71 = vadd.f32 %v67, %v70
    %vm72 = vweird.f32 %v67
    %v73 = vsel %vm72, %v67, %v71
    %v74 = vmul.f32 %v63, %v73
    %v75 = vmul.f32 %v66, %v73
    %v76 = vsub.f32 %v58, %v74
    %v77 = vsub.f32 %v59, %v75
    %v78 = vmul.f32 %v76, %v76
    %v79 = vmul.f32 %v77, %v77
    %v80 = vsel %vm60, %v78, 0.0
    %81 = vadd.xlane.f32.xlu0 %v80
    %v82 = vpop.xlane.xlu0 %81
    %v83 = vsel %vm60, %v79, 0.0
    %84 = vadd.xlane.f32.xlu0 %v83
    %v85 = vpop.xlane.xlu0 %84
    %v86 = vmul.f32 %v82, %v73
    %v87 = vmul.f32 %v85, %v73
    %v88 = vadd.f32 %v86, 1e-12
    %v89 = vadd.f32 %v87, 1e-12
    %v90 = vrsqrt.pop %v88
    %v91 = vmul.f32 %v90, %v88
    %v92 = vmul.f32 %v91, %v90
    %v93 = vmul.f32 0.5, %v92
    %v94 = vsub.f32 1.5, %v93
    %v95 = vmul.f32 %v90, %v94
    %vm96 = vweird.f32 %v88
    %vm97 = vweird.f32 %v90
    %vm98 = vmor %vm96, %vm97
    %v99 = vsel %vm98, %v90, %v95
    %v100 = vrsqrt.pop %v89
    %v101 = vmul.f32 %v100, %v89
    %v102 = vmul.f32 %v101, %v100
    %v103 = vmul.f32 0.5, %v102
    %v104 = vsub.f32 1.5, %v103
    %v105 = vmul.f32 %v100, %v104
    %vm106 = vweird.f32 %v89
    %vm107 = vweird.f32 %v100
    %vm108 = vmor %vm106, %vm107
    %v109 = vsel %vm108, %v100, %v105
    %v110 = vmul.f32 %v76, %v99
    %v111 = vmul.f32 %v77, %v109
    %v112 = vperm.slane %v57, 0
    %v113 = vmul.f32 %v110, %v112
    %v114 = vmul.f32 %v111, %v112
    %v115 = vperm.slane %v57, 1
    %v116 = vadd.f32 %v113, %v115
    %v117 = vadd.f32 %v114, %v115
    %v118 = vld [vmem:[%s3] sm:$0xff]
    %v119 = vld [vmem:[%s3 + $0x8] sm:$0xff]
    %v120 = vld [vmem:[%s3 + $0x10] sm:$0xff]
    %v121 = vld [vmem:[%s3 + $0x18] sm:$0xff]
    %v122 = vld [vmem:[%s4] sm:$0x1]
    %v123 = vld [vmem:[%s5] sm:$0xff]
    %v124 = vld [vmem:[%s5 + $0x8] sm:$0xff]
    %v125 = vld [vmem:[%s5 + $0x10] sm:$0xff]
    %v126 = vld [vmem:[%s5 + $0x18] sm:$0xff]
    %v127 = vld [vmem:[%s6] sm:$0x1]
    %v128 = vld [vmem:[%s7] sm:$0x3]
    %v129 = vld [vmem:[%s8] sm:$0xff]
    %v130 = vld [vmem:[%s8 + $0x8] sm:$0xff]
    %v131 = vld [vmem:[%s8 + $0x10] sm:$0xff]
    %v132 = vld [vmem:[%s8 + $0x18] sm:$0xff]
    %v133 = vld [vmem:[%s9] sm:$0x1]
    %v134 = vld [vmem:[%s10] sm:$0xff]
    %v135 = vld [vmem:[%s10 + $0x8] sm:$0xff]
    %v136 = vld [vmem:[%s10 + $0x10] sm:$0xff]
    %v137 = vld [vmem:[%s10 + $0x18] sm:$0xff]
    %v138 = vld [vmem:[%s10 + $0x20] sm:$0xff]
    %v139 = vld [vmem:[%s10 + $0x28] sm:$0xff]
    %v140 = vld [vmem:[%s10 + $0x30] sm:$0xff]
    %v141 = vld [vmem:[%s10 + $0x38] sm:$0xff]
    %v142 = vld [vmem:[%s11] sm:$0x1]
    %v143 = vld [vmem:[%s12] sm:$0x3]
    %v145 = vperm.slane %v122, 0
    %v148 = vsel %vm60, %v116, 0
    %v151 = vsel %vm60, %v117, 0
    %153 = vmatpush.msra.mxu0 0.0
    %154 = vmatpush.msra.mxu0 0.0
    %155 = vmatpush.msra.mxu0 0.0
    %156 = vmatpush.msra.mxu0 0.0
    %157 = vmatpush.msra.mxu0 0.0
    %158 = vmatpush.msra.mxu0 0.0
    %159 = vmatpush.msra.mxu0 0.0
    %160 = vmatpush.msra.mxu0 0.0
    %161 = vmatpush.msra.mxu0 0.0
    %162 = vmatpush.msra.mxu0 0.0
    %163 = vmatpush.msra.mxu0 0.0
    %164 = vmatpush.msra.mxu0 0.0
    %165 = vmatpush.msra.mxu0 %v121
    %166 = vmatpush.msra.mxu0 %v120
    %167 = vmatpush.msra.mxu0 %v119
    %168 = vmatpush.msra.mxu0 %v118
    %169 = vmatmul.f32.gmra.mxu0 %v148
    %v170 = vpop.f32.mrf.mxu0
    %v171 = vadd.f32 %v145, %v170
    %172 = vmatmul.f32.gmra.mxu0 %v151
    %v173 = vpop.f32.mrf.mxu0
    %v174 = vadd.f32 %v145, %v173
    %175 = vdwg.mxu0
    %v176 = vld [vmem:[%s1] sm:$0x1]
    %178 = vrot.lane.b32.xlu0 %v171, 96
    %v179 = vpop.permute.xlu0 %178
    %vm180 = vcmask 64512
    %v181 = vsel %vm180, %v171, 0
    %v183 = vsel %vm180, %v179, 0
    %185 = vmatpush.xpose.msra.mxu0 0.0
    %186 = vmatpush.xpose.msra.mxu0 0.0
    %187 = vmatpush.xpose.msra.mxu0 0.0
    %188 = vmatpush.xpose.msra.mxu0 0.0
    %189 = vmatpush.xpose.msra.mxu0 0.0
    %190 = vmatpush.xpose.msra.mxu0 0.0
    %191 = vmatpush.xpose.msra.mxu0 0.0
    %192 = vmatpush.xpose.msra.mxu0 0.0
    %193 = vmatpush.xpose.msra.mxu0 0.0
    %194 = vmatpush.xpose.msra.mxu0 0.0
    %195 = vmatpush.xpose.msra.mxu0 0.0
    %196 = vmatpush.xpose.msra.mxu0 0.0
    %197 = vmatpush.xpose.msra.mxu0 0.0
    %198 = vmatpush.xpose.msra.mxu0 0.0
    %199 = vmatpush.xpose.msra.mxu0 0.0
    %200 = vmatpush.xpose.msra.mxu0 %v183
    %201 = vmatmul.f32.gmra.mxu0 %v181
    %v202 = vpop.f32.mrf.mxu0
    %v203 = vadd.f32 0.0, %v202
    %204 = vdwg.mxu0
    %v205 = vmul.f32 %v203, 0.35355338
    %v206 = vperm.slane %v176, 0
    %v207 = vadd.f32 %v205, %v206
    %v208 = vsel %vm180, %v207, -inf
    %209 = vmax.xlane.f32.xlu0 %v208
    %v210 = vpop.xlane.xlu0 %209
    %v211 = vsub.f32 %v207, %v210
    %v212 = vmul.f32 %v211, 1.442695
    %v213 = vpow.pop %v212
    %v214 = vsel %vm180, %v213, 0.0
    %215 = vadd.xlane.f32.xlu0 %v214
    %v216 = vpop.xlane.xlu0 %215
    %v217 = vrcp.pop %v216
    %v218 = vmul.f32 %v213, %v217
    %219 = vrot.lane.b32.xlu0 %v171, 64
    %v220 = vpop.permute.xlu0 %219
    %v223 = vsel %vm180, %v218, 0
    %225 = vmatpush.msra.mxu0 0.0
    %226 = vmatpush.msra.mxu0 0.0
    %227 = vmatpush.msra.mxu0 0.0
    %228 = vmatpush.msra.mxu0 0.0
    %229 = vmatpush.msra.mxu0 0.0
    %230 = vmatpush.msra.mxu0 0.0
    %231 = vmatpush.msra.mxu0 0.0
    %232 = vmatpush.msra.mxu0 0.0
    %233 = vmatpush.msra.mxu0 0.0
    %234 = vmatpush.msra.mxu0 0.0
    %235 = vmatpush.msra.mxu0 0.0
    %236 = vmatpush.msra.mxu0 0.0
    %237 = vmatpush.msra.mxu0 0.0
    %238 = vmatpush.msra.mxu0 0.0
    %239 = vmatpush.msra.mxu0 0.0
    %240 = vmatpush.msra.mxu0 %v220
    %241 = vmatmul.f32.gmra.mxu0 %v223
    %v242 = vpop.f32.mrf.mxu0
    %v243 = vadd.f32 0.0, %v242
    %244 = vdwg.mxu0
    %245 = vrot.lane.b32.xlu0 %v171, 120
    %v246 = vpop.permute.xlu0 %245
    %247 = vrot.lane.b32.xlu0 %v171, 88
    %v248 = vpop.permute.xlu0 %247
    %v249 = vsel %vm180, %v246, 0
    %v251 = vsel %vm180, %v248, 0
    %253 = vmatpush.xpose.msra.mxu0 0.0
    %254 = vmatpush.xpose.msra.mxu0 0.0
    %255 = vmatpush.xpose.msra.mxu0 0.0
    %256 = vmatpush.xpose.msra.mxu0 0.0
    %257 = vmatpush.xpose.msra.mxu0 0.0
    %258 = vmatpush.xpose.msra.mxu0 0.0
    %259 = vmatpush.xpose.msra.mxu0 0.0
    %260 = vmatpush.xpose.msra.mxu0 0.0
    %261 = vmatpush.xpose.msra.mxu0 0.0
    %262 = vmatpush.xpose.msra.mxu0 0.0
    %263 = vmatpush.xpose.msra.mxu0 0.0
    %264 = vmatpush.xpose.msra.mxu0 0.0
    %265 = vmatpush.xpose.msra.mxu0 0.0
    %266 = vmatpush.xpose.msra.mxu0 0.0
    %267 = vmatpush.xpose.msra.mxu0 0.0
    %268 = vmatpush.xpose.msra.mxu0 %v251
    %269 = vmatmul.f32.gmra.mxu0 %v249
    %v270 = vpop.f32.mrf.mxu0
    %v271 = vadd.f32 0.0, %v270
    %272 = vdwg.mxu0
    %v273 = vmul.f32 %v271, 0.35355338
    %v274 = vadd.f32 %v273, %v206
    %v275 = vsel %vm180, %v274, -inf
    %276 = vmax.xlane.f32.xlu0 %v275
    %v277 = vpop.xlane.xlu0 %276
    %v278 = vsub.f32 %v274, %v277
    %v279 = vmul.f32 %v278, 1.442695
    %v280 = vpow.pop %v279
    %v281 = vsel %vm180, %v280, 0.0
    %282 = vadd.xlane.f32.xlu0 %v281
    %v283 = vpop.xlane.xlu0 %282
    %v284 = vrcp.pop %v283
    %v285 = vmul.f32 %v280, %v284
    %286 = vrot.lane.b32.xlu0 %v171, 56
    %v287 = vpop.permute.xlu0 %286
    %v290 = vsel %vm180, %v285, 0
    %292 = vmatpush.msra.mxu0 0.0
    %293 = vmatpush.msra.mxu0 0.0
    %294 = vmatpush.msra.mxu0 0.0
    %295 = vmatpush.msra.mxu0 0.0
    %296 = vmatpush.msra.mxu0 0.0
    %297 = vmatpush.msra.mxu0 0.0
    %298 = vmatpush.msra.mxu0 0.0
    %299 = vmatpush.msra.mxu0 0.0
    %300 = vmatpush.msra.mxu0 0.0
    %301 = vmatpush.msra.mxu0 0.0
    %302 = vmatpush.msra.mxu0 0.0
    %303 = vmatpush.msra.mxu0 0.0
    %304 = vmatpush.msra.mxu0 0.0
    %305 = vmatpush.msra.mxu0 0.0
    %306 = vmatpush.msra.mxu0 0.0
    %307 = vmatpush.msra.mxu0 %v287
    %308 = vmatmul.f32.gmra.mxu0 %v290
    %v309 = vpop.f32.mrf.mxu0
    %v310 = vadd.f32 0.0, %v309
    %311 = vdwg.mxu0
    %v313 = vsel %vm180, %v310, 0
    %315 = vmatpush.msra.mxu0 0.0
    %316 = vmatpush.msra.mxu0 0.0
    %317 = vmatpush.msra.mxu0 0.0
    %318 = vmatpush.msra.mxu0 0.0
    %319 = vmatpush.msra.mxu0 0.0
    %320 = vmatpush.msra.mxu0 0.0
    %321 = vmatpush.msra.mxu0 0.0
    %322 = vmatpush.msra.mxu0 0.0
    %323 = vmatpush.msra.mxu0 0.0
    %324 = vmatpush.msra.mxu0 0.0
    %325 = vmatpush.msra.mxu0 0.0
    %326 = vmatpush.msra.mxu0 0.0
    %327 = vmatpush.msra.mxu0 0.0
    %328 = vmatpush.msra.mxu0 0.0
    %329 = vmatpush.msra.mxu0 0.0
    %330 = vmatpush.msra.mxu0 %v124
    %331 = vmatmul.f32.gmra.mxu0 %v313
    %v332 = vpop.f32.mrf.mxu0
    %v333 = vadd.f32 0.0, %v332
    %334 = vdwg.mxu0
    %v336 = vsel %vm180, %v243, 0
    %338 = vmatpush.msra.mxu0 0.0
    %339 = vmatpush.msra.mxu0 0.0
    %340 = vmatpush.msra.mxu0 0.0
    %341 = vmatpush.msra.mxu0 0.0
    %342 = vmatpush.msra.mxu0 0.0
    %343 = vmatpush.msra.mxu0 0.0
    %344 = vmatpush.msra.mxu0 0.0
    %345 = vmatpush.msra.mxu0 0.0
    %346 = vmatpush.msra.mxu0 0.0
    %347 = vmatpush.msra.mxu0 0.0
    %348 = vmatpush.msra.mxu0 0.0
    %349 = vmatpush.msra.mxu0 0.0
    %350 = vmatpush.msra.mxu0 0.0
    %351 = vmatpush.msra.mxu0 0.0
    %352 = vmatpush.msra.mxu0 0.0
    %353 = vmatpush.msra.mxu0 %v123
    %354 = vmatmul.f32.gmra.mxu0 %v336
    %v355 = vpop.f32.mrf.mxu0
    %v356 = vadd.f32 %v333, %v355
    %357 = vdwg.mxu0
    %358 = vrot.lane.b32.xlu0 %v171, 112
    %v359 = vpop.permute.xlu0 %358
    %360 = vrot.lane.b32.xlu0 %v171, 80
    %v361 = vpop.permute.xlu0 %360
    %v362 = vsel %vm180, %v359, 0
    %v364 = vsel %vm180, %v361, 0
    %366 = vmatpush.xpose.msra.mxu0 0.0
    %367 = vmatpush.xpose.msra.mxu0 0.0
    %368 = vmatpush.xpose.msra.mxu0 0.0
    %369 = vmatpush.xpose.msra.mxu0 0.0
    %370 = vmatpush.xpose.msra.mxu0 0.0
    %371 = vmatpush.xpose.msra.mxu0 0.0
    %372 = vmatpush.xpose.msra.mxu0 0.0
    %373 = vmatpush.xpose.msra.mxu0 0.0
    %374 = vmatpush.xpose.msra.mxu0 0.0
    %375 = vmatpush.xpose.msra.mxu0 0.0
    %376 = vmatpush.xpose.msra.mxu0 0.0
    %377 = vmatpush.xpose.msra.mxu0 0.0
    %378 = vmatpush.xpose.msra.mxu0 0.0
    %379 = vmatpush.xpose.msra.mxu0 0.0
    %380 = vmatpush.xpose.msra.mxu0 0.0
    %381 = vmatpush.xpose.msra.mxu0 %v364
    %382 = vmatmul.f32.gmra.mxu0 %v362
    %v383 = vpop.f32.mrf.mxu0
    %v384 = vadd.f32 0.0, %v383
    %385 = vdwg.mxu0
    %v386 = vmul.f32 %v384, 0.35355338
    %v387 = vadd.f32 %v386, %v206
    %v388 = vsel %vm180, %v387, -inf
    %389 = vmax.xlane.f32.xlu0 %v388
    %v390 = vpop.xlane.xlu0 %389
    %v391 = vsub.f32 %v387, %v390
    %v392 = vmul.f32 %v391, 1.442695
    %v393 = vpow.pop %v392
    %v394 = vsel %vm180, %v393, 0.0
    %395 = vadd.xlane.f32.xlu0 %v394
    %v396 = vpop.xlane.xlu0 %395
    %v397 = vrcp.pop %v396
    %v398 = vmul.f32 %v393, %v397
    %399 = vrot.lane.b32.xlu0 %v171, 48
    %v400 = vpop.permute.xlu0 %399
    %v403 = vsel %vm180, %v398, 0
    %405 = vmatpush.msra.mxu0 0.0
    %406 = vmatpush.msra.mxu0 0.0
    %407 = vmatpush.msra.mxu0 0.0
    %408 = vmatpush.msra.mxu0 0.0
    %409 = vmatpush.msra.mxu0 0.0
    %410 = vmatpush.msra.mxu0 0.0
    %411 = vmatpush.msra.mxu0 0.0
    %412 = vmatpush.msra.mxu0 0.0
    %413 = vmatpush.msra.mxu0 0.0
    %414 = vmatpush.msra.mxu0 0.0
    %415 = vmatpush.msra.mxu0 0.0
    %416 = vmatpush.msra.mxu0 0.0
    %417 = vmatpush.msra.mxu0 0.0
    %418 = vmatpush.msra.mxu0 0.0
    %419 = vmatpush.msra.mxu0 0.0
    %420 = vmatpush.msra.mxu0 %v400
    %421 = vmatmul.f32.gmra.mxu0 %v403
    %v422 = vpop.f32.mrf.mxu0
    %v423 = vadd.f32 0.0, %v422
    %424 = vdwg.mxu0
    %v426 = vsel %vm180, %v423, 0
    %428 = vmatpush.msra.mxu0 0.0
    %429 = vmatpush.msra.mxu0 0.0
    %430 = vmatpush.msra.mxu0 0.0
    %431 = vmatpush.msra.mxu0 0.0
    %432 = vmatpush.msra.mxu0 0.0
    %433 = vmatpush.msra.mxu0 0.0
    %434 = vmatpush.msra.mxu0 0.0
    %435 = vmatpush.msra.mxu0 0.0
    %436 = vmatpush.msra.mxu0 0.0
    %437 = vmatpush.msra.mxu0 0.0
    %438 = vmatpush.msra.mxu0 0.0
    %439 = vmatpush.msra.mxu0 0.0
    %440 = vmatpush.msra.mxu0 0.0
    %441 = vmatpush.msra.mxu0 0.0
    %442 = vmatpush.msra.mxu0 0.0
    %443 = vmatpush.msra.mxu0 %v125
    %444 = vmatmul.f32.gmra.mxu0 %v426
    %v445 = vpop.f32.mrf.mxu0
    %v446 = vadd.f32 0.0, %v445
    %447 = vdwg.mxu0
    %v448 = vadd.f32 %v356, %v446
    %449 = vrot.lane.b32.xlu0 %v171, 104
    %v450 = vpop.permute.xlu0 %449
    %451 = vrot.lane.b32.xlu0 %v171, 72
    %v452 = vpop.permute.xlu0 %451
    %v453 = vsel %vm180, %v450, 0
    %v455 = vsel %vm180, %v452, 0
    %457 = vmatpush.xpose.msra.mxu0 0.0
    %458 = vmatpush.xpose.msra.mxu0 0.0
    %459 = vmatpush.xpose.msra.mxu0 0.0
    %460 = vmatpush.xpose.msra.mxu0 0.0
    %461 = vmatpush.xpose.msra.mxu0 0.0
    %462 = vmatpush.xpose.msra.mxu0 0.0
    %463 = vmatpush.xpose.msra.mxu0 0.0
    %464 = vmatpush.xpose.msra.mxu0 0.0
    %465 = vmatpush.xpose.msra.mxu0 0.0
    %466 = vmatpush.xpose.msra.mxu0 0.0
    %467 = vmatpush.xpose.msra.mxu0 0.0
    %468 = vmatpush.xpose.msra.mxu0 0.0
    %469 = vmatpush.xpose.msra.mxu0 0.0
    %470 = vmatpush.xpose.msra.mxu0 0.0
    %471 = vmatpush.xpose.msra.mxu0 0.0
    %472 = vmatpush.xpose.msra.mxu0 %v455
    %473 = vmatmul.f32.gmra.mxu0 %v453
    %v474 = vpop.f32.mrf.mxu0
    %v475 = vadd.f32 0.0, %v474
    %476 = vdwg.mxu0
    %v477 = vmul.f32 %v475, 0.35355338
    %v478 = vadd.f32 %v477, %v206
    %v479 = vsel %vm180, %v478, -inf
    %480 = vmax.xlane.f32.xlu0 %v479
    %v481 = vpop.xlane.xlu0 %480
    %v482 = vsub.f32 %v478, %v481
    %v483 = vmul.f32 %v482, 1.442695
    %v484 = vpow.pop %v483
    %v485 = vsel %vm180, %v484, 0.0
    %486 = vadd.xlane.f32.xlu0 %v485
    %v487 = vpop.xlane.xlu0 %486
    %v488 = vrcp.pop %v487
    %v489 = vmul.f32 %v484, %v488
    %490 = vrot.lane.b32.xlu0 %v171, 40
    %v491 = vpop.permute.xlu0 %490
    %v494 = vsel %vm180, %v489, 0
    %496 = vmatpush.msra.mxu0 0.0
    %497 = vmatpush.msra.mxu0 0.0
    %498 = vmatpush.msra.mxu0 0.0
    %499 = vmatpush.msra.mxu0 0.0
    %500 = vmatpush.msra.mxu0 0.0
    %501 = vmatpush.msra.mxu0 0.0
    %502 = vmatpush.msra.mxu0 0.0
    %503 = vmatpush.msra.mxu0 0.0
    %504 = vmatpush.msra.mxu0 0.0
    %505 = vmatpush.msra.mxu0 0.0
    %506 = vmatpush.msra.mxu0 0.0
    %507 = vmatpush.msra.mxu0 0.0
    %508 = vmatpush.msra.mxu0 0.0
    %509 = vmatpush.msra.mxu0 0.0
    %510 = vmatpush.msra.mxu0 0.0
    %511 = vmatpush.msra.mxu0 %v491
    %512 = vmatmul.f32.gmra.mxu0 %v494
    %v513 = vpop.f32.mrf.mxu0
    %v514 = vadd.f32 0.0, %v513
    %515 = vdwg.mxu0
    %v517 = vsel %vm180, %v514, 0
    %519 = vmatpush.msra.mxu0 0.0
    %520 = vmatpush.msra.mxu0 0.0
    %521 = vmatpush.msra.mxu0 0.0
    %522 = vmatpush.msra.mxu0 0.0
    %523 = vmatpush.msra.mxu0 0.0
    %524 = vmatpush.msra.mxu0 0.0
    %525 = vmatpush.msra.mxu0 0.0
    %526 = vmatpush.msra.mxu0 0.0
    %527 = vmatpush.msra.mxu0 0.0
    %528 = vmatpush.msra.mxu0 0.0
    %529 = vmatpush.msra.mxu0 0.0
    %530 = vmatpush.msra.mxu0 0.0
    %531 = vmatpush.msra.mxu0 0.0
    %532 = vmatpush.msra.mxu0 0.0
    %533 = vmatpush.msra.mxu0 0.0
    %534 = vmatpush.msra.mxu0 %v126
    %535 = vmatmul.f32.gmra.mxu0 %v517
    %v536 = vpop.f32.mrf.mxu0
    %v537 = vadd.f32 0.0, %v536
    %538 = vdwg.mxu0
    %v539 = vadd.f32 %v448, %v537
    %v540 = vld [vmem:[%s1 + $0x1] sm:$0x1]
    %542 = vrot.lane.b32.xlu0 %v174, 96
    %v543 = vpop.permute.xlu0 %542
    %v544 = vsel %vm180, %v174, 0
    %v546 = vsel %vm180, %v543, 0
    %548 = vmatpush.xpose.msra.mxu0 0.0
    %549 = vmatpush.xpose.msra.mxu0 0.0
    %550 = vmatpush.xpose.msra.mxu0 0.0
    %551 = vmatpush.xpose.msra.mxu0 0.0
    %552 = vmatpush.xpose.msra.mxu0 0.0
    %553 = vmatpush.xpose.msra.mxu0 0.0
    %554 = vmatpush.xpose.msra.mxu0 0.0
    %555 = vmatpush.xpose.msra.mxu0 0.0
    %556 = vmatpush.xpose.msra.mxu0 0.0
    %557 = vmatpush.xpose.msra.mxu0 0.0
    %558 = vmatpush.xpose.msra.mxu0 0.0
    %559 = vmatpush.xpose.msra.mxu0 0.0
    %560 = vmatpush.xpose.msra.mxu0 0.0
    %561 = vmatpush.xpose.msra.mxu0 0.0
    %562 = vmatpush.xpose.msra.mxu0 0.0
    %563 = vmatpush.xpose.msra.mxu0 %v546
    %564 = vmatmul.f32.gmra.mxu0 %v544
    %v565 = vpop.f32.mrf.mxu0
    %v566 = vadd.f32 0.0, %v565
    %567 = vdwg.mxu0
    %v568 = vmul.f32 %v566, 0.35355338
    %v569 = vperm.slane %v540, 0
    %v570 = vadd.f32 %v568, %v569
    %v571 = vsel %vm180, %v570, -inf
    %572 = vmax.xlane.f32.xlu0 %v571
    %v573 = vpop.xlane.xlu0 %572
    %v574 = vsub.f32 %v570, %v573
    %v575 = vmul.f32 %v574, 1.442695
    %v576 = vpow.pop %v575
    %v577 = vsel %vm180, %v576, 0.0
    %578 = vadd.xlane.f32.xlu0 %v577
    %v579 = vpop.xlane.xlu0 %578
    %v580 = vrcp.pop %v579
    %v581 = vmul.f32 %v576, %v580
    %582 = vrot.lane.b32.xlu0 %v174, 64
    %v583 = vpop.permute.xlu0 %582
    %v586 = vsel %vm180, %v581, 0
    %588 = vmatpush.msra.mxu0 0.0
    %589 = vmatpush.msra.mxu0 0.0
    %590 = vmatpush.msra.mxu0 0.0
    %591 = vmatpush.msra.mxu0 0.0
    %592 = vmatpush.msra.mxu0 0.0
    %593 = vmatpush.msra.mxu0 0.0
    %594 = vmatpush.msra.mxu0 0.0
    %595 = vmatpush.msra.mxu0 0.0
    %596 = vmatpush.msra.mxu0 0.0
    %597 = vmatpush.msra.mxu0 0.0
    %598 = vmatpush.msra.mxu0 0.0
    %599 = vmatpush.msra.mxu0 0.0
    %600 = vmatpush.msra.mxu0 0.0
    %601 = vmatpush.msra.mxu0 0.0
    %602 = vmatpush.msra.mxu0 0.0
    %603 = vmatpush.msra.mxu0 %v583
    %604 = vmatmul.f32.gmra.mxu0 %v586
    %v605 = vpop.f32.mrf.mxu0
    %v606 = vadd.f32 0.0, %v605
    %607 = vdwg.mxu0
    %608 = vrot.lane.b32.xlu0 %v174, 120
    %v609 = vpop.permute.xlu0 %608
    %610 = vrot.lane.b32.xlu0 %v174, 88
    %v611 = vpop.permute.xlu0 %610
    %v612 = vsel %vm180, %v609, 0
    %v614 = vsel %vm180, %v611, 0
    %616 = vmatpush.xpose.msra.mxu0 0.0
    %617 = vmatpush.xpose.msra.mxu0 0.0
    %618 = vmatpush.xpose.msra.mxu0 0.0
    %619 = vmatpush.xpose.msra.mxu0 0.0
    %620 = vmatpush.xpose.msra.mxu0 0.0
    %621 = vmatpush.xpose.msra.mxu0 0.0
    %622 = vmatpush.xpose.msra.mxu0 0.0
    %623 = vmatpush.xpose.msra.mxu0 0.0
    %624 = vmatpush.xpose.msra.mxu0 0.0
    %625 = vmatpush.xpose.msra.mxu0 0.0
    %626 = vmatpush.xpose.msra.mxu0 0.0
    %627 = vmatpush.xpose.msra.mxu0 0.0
    %628 = vmatpush.xpose.msra.mxu0 0.0
    %629 = vmatpush.xpose.msra.mxu0 0.0
    %630 = vmatpush.xpose.msra.mxu0 0.0
    %631 = vmatpush.xpose.msra.mxu0 %v614
    %632 = vmatmul.f32.gmra.mxu0 %v612
    %v633 = vpop.f32.mrf.mxu0
    %v634 = vadd.f32 0.0, %v633
    %635 = vdwg.mxu0
    %v636 = vmul.f32 %v634, 0.35355338
    %v637 = vadd.f32 %v636, %v569
    %v638 = vsel %vm180, %v637, -inf
    %639 = vmax.xlane.f32.xlu0 %v638
    %v640 = vpop.xlane.xlu0 %639
    %v641 = vsub.f32 %v637, %v640
    %v642 = vmul.f32 %v641, 1.442695
    %v643 = vpow.pop %v642
    %v644 = vsel %vm180, %v643, 0.0
    %645 = vadd.xlane.f32.xlu0 %v644
    %v646 = vpop.xlane.xlu0 %645
    %v647 = vrcp.pop %v646
    %v648 = vmul.f32 %v643, %v647
    %649 = vrot.lane.b32.xlu0 %v174, 56
    %v650 = vpop.permute.xlu0 %649
    %v653 = vsel %vm180, %v648, 0
    %655 = vmatpush.msra.mxu0 0.0
    %656 = vmatpush.msra.mxu0 0.0
    %657 = vmatpush.msra.mxu0 0.0
    %658 = vmatpush.msra.mxu0 0.0
    %659 = vmatpush.msra.mxu0 0.0
    %660 = vmatpush.msra.mxu0 0.0
    %661 = vmatpush.msra.mxu0 0.0
    %662 = vmatpush.msra.mxu0 0.0
    %663 = vmatpush.msra.mxu0 0.0
    %664 = vmatpush.msra.mxu0 0.0
    %665 = vmatpush.msra.mxu0 0.0
    %666 = vmatpush.msra.mxu0 0.0
    %667 = vmatpush.msra.mxu0 0.0
    %668 = vmatpush.msra.mxu0 0.0
    %669 = vmatpush.msra.mxu0 0.0
    %670 = vmatpush.msra.mxu0 %v650
    %671 = vmatmul.f32.gmra.mxu0 %v653
    %v672 = vpop.f32.mrf.mxu0
    %v673 = vadd.f32 0.0, %v672
    %674 = vdwg.mxu0
    %v676 = vsel %vm180, %v673, 0
    %678 = vmatpush.msra.mxu0 0.0
    %679 = vmatpush.msra.mxu0 0.0
    %680 = vmatpush.msra.mxu0 0.0
    %681 = vmatpush.msra.mxu0 0.0
    %682 = vmatpush.msra.mxu0 0.0
    %683 = vmatpush.msra.mxu0 0.0
    %684 = vmatpush.msra.mxu0 0.0
    %685 = vmatpush.msra.mxu0 0.0
    %686 = vmatpush.msra.mxu0 0.0
    %687 = vmatpush.msra.mxu0 0.0
    %688 = vmatpush.msra.mxu0 0.0
    %689 = vmatpush.msra.mxu0 0.0
    %690 = vmatpush.msra.mxu0 0.0
    %691 = vmatpush.msra.mxu0 0.0
    %692 = vmatpush.msra.mxu0 0.0
    %693 = vmatpush.msra.mxu0 %v124
    %694 = vmatmul.f32.gmra.mxu0 %v676
    %v695 = vpop.f32.mrf.mxu0
    %v696 = vadd.f32 0.0, %v695
    %697 = vdwg.mxu0
    %v699 = vsel %vm180, %v606, 0
    %701 = vmatpush.msra.mxu0 0.0
    %702 = vmatpush.msra.mxu0 0.0
    %703 = vmatpush.msra.mxu0 0.0
    %704 = vmatpush.msra.mxu0 0.0
    %705 = vmatpush.msra.mxu0 0.0
    %706 = vmatpush.msra.mxu0 0.0
    %707 = vmatpush.msra.mxu0 0.0
    %708 = vmatpush.msra.mxu0 0.0
    %709 = vmatpush.msra.mxu0 0.0
    %710 = vmatpush.msra.mxu0 0.0
    %711 = vmatpush.msra.mxu0 0.0
    %712 = vmatpush.msra.mxu0 0.0
    %713 = vmatpush.msra.mxu0 0.0
    %714 = vmatpush.msra.mxu0 0.0
    %715 = vmatpush.msra.mxu0 0.0
    %716 = vmatpush.msra.mxu0 %v123
    %717 = vmatmul.f32.gmra.mxu0 %v699
    %v718 = vpop.f32.mrf.mxu0
    %v719 = vadd.f32 %v696, %v718
    %720 = vdwg.mxu0
    %721 = vrot.lane.b32.xlu0 %v174, 112
    %v722 = vpop.permute.xlu0 %721
    %723 = vrot.lane.b32.xlu0 %v174, 80
    %v724 = vpop.permute.xlu0 %723
    %v725 = vsel %vm180, %v722, 0
    %v727 = vsel %vm180, %v724, 0
    %729 = vmatpush.xpose.msra.mxu0 0.0
    %730 = vmatpush.xpose.msra.mxu0 0.0
    %731 = vmatpush.xpose.msra.mxu0 0.0
    %732 = vmatpush.xpose.msra.mxu0 0.0
    %733 = vmatpush.xpose.msra.mxu0 0.0
    %734 = vmatpush.xpose.msra.mxu0 0.0
    %735 = vmatpush.xpose.msra.mxu0 0.0
    %736 = vmatpush.xpose.msra.mxu0 0.0
    %737 = vmatpush.xpose.msra.mxu0 0.0
    %738 = vmatpush.xpose.msra.mxu0 0.0
    %739 = vmatpush.xpose.msra.mxu0 0.0
    %740 = vmatpush.xpose.msra.mxu0 0.0
    %741 = vmatpush.xpose.msra.mxu0 0.0
    %742 = vmatpush.xpose.msra.mxu0 0.0
    %743 = vmatpush.xpose.msra.mxu0 0.0
    %744 = vmatpush.xpose.msra.mxu0 %v727
    %745 = vmatmul.f32.gmra.mxu0 %v725
    %v746 = vpop.f32.mrf.mxu0
    %v747 = vadd.f32 0.0, %v746
    %748 = vdwg.mxu0
    %v749 = vmul.f32 %v747, 0.35355338
    %v750 = vadd.f32 %v749, %v569
    %v751 = vsel %vm180, %v750, -inf
    %752 = vmax.xlane.f32.xlu0 %v751
    %v753 = vpop.xlane.xlu0 %752
    %v754 = vsub.f32 %v750, %v753
    %v755 = vmul.f32 %v754, 1.442695
    %v756 = vpow.pop %v755
    %v757 = vsel %vm180, %v756, 0.0
    %758 = vadd.xlane.f32.xlu0 %v757
    %v759 = vpop.xlane.xlu0 %758
    %v760 = vrcp.pop %v759
    %v761 = vmul.f32 %v756, %v760
    %762 = vrot.lane.b32.xlu0 %v174, 48
    %v763 = vpop.permute.xlu0 %762
    %v766 = vsel %vm180, %v761, 0
    %768 = vmatpush.msra.mxu0 0.0
    %769 = vmatpush.msra.mxu0 0.0
    %770 = vmatpush.msra.mxu0 0.0
    %771 = vmatpush.msra.mxu0 0.0
    %772 = vmatpush.msra.mxu0 0.0
    %773 = vmatpush.msra.mxu0 0.0
    %774 = vmatpush.msra.mxu0 0.0
    %775 = vmatpush.msra.mxu0 0.0
    %776 = vmatpush.msra.mxu0 0.0
    %777 = vmatpush.msra.mxu0 0.0
    %778 = vmatpush.msra.mxu0 0.0
    %779 = vmatpush.msra.mxu0 0.0
    %780 = vmatpush.msra.mxu0 0.0
    %781 = vmatpush.msra.mxu0 0.0
    %782 = vmatpush.msra.mxu0 0.0
    %783 = vmatpush.msra.mxu0 %v763
    %784 = vmatmul.f32.gmra.mxu0 %v766
    %v785 = vpop.f32.mrf.mxu0
    %v786 = vadd.f32 0.0, %v785
    %787 = vdwg.mxu0
    %v789 = vsel %vm180, %v786, 0
    %791 = vmatpush.msra.mxu0 0.0
    %792 = vmatpush.msra.mxu0 0.0
    %793 = vmatpush.msra.mxu0 0.0
    %794 = vmatpush.msra.mxu0 0.0
    %795 = vmatpush.msra.mxu0 0.0
    %796 = vmatpush.msra.mxu0 0.0
    %797 = vmatpush.msra.mxu0 0.0
    %798 = vmatpush.msra.mxu0 0.0
    %799 = vmatpush.msra.mxu0 0.0
    %800 = vmatpush.msra.mxu0 0.0
    %801 = vmatpush.msra.mxu0 0.0
    %802 = vmatpush.msra.mxu0 0.0
    %803 = vmatpush.msra.mxu0 0.0
    %804 = vmatpush.msra.mxu0 0.0
    %805 = vmatpush.msra.mxu0 0.0
    %806 = vmatpush.msra.mxu0 %v125
    %807 = vmatmul.f32.gmra.mxu0 %v789
    %v808 = vpop.f32.mrf.mxu0
    %v809 = vadd.f32 0.0, %v808
    %810 = vdwg.mxu0
    %v811 = vadd.f32 %v719, %v809
    %812 = vrot.lane.b32.xlu0 %v174, 104
    %v813 = vpop.permute.xlu0 %812
    %814 = vrot.lane.b32.xlu0 %v174, 72
    %v815 = vpop.permute.xlu0 %814
    %v816 = vsel %vm180, %v813, 0
    %v818 = vsel %vm180, %v815, 0
    %820 = vmatpush.xpose.msra.mxu0 0.0
    %821 = vmatpush.xpose.msra.mxu0 0.0
    %822 = vmatpush.xpose.msra.mxu0 0.0
    %823 = vmatpush.xpose.msra.mxu0 0.0
    %824 = vmatpush.xpose.msra.mxu0 0.0
    %825 = vmatpush.xpose.msra.mxu0 0.0
    %826 = vmatpush.xpose.msra.mxu0 0.0
    %827 = vmatpush.xpose.msra.mxu0 0.0
    %828 = vmatpush.xpose.msra.mxu0 0.0
    %829 = vmatpush.xpose.msra.mxu0 0.0
    %830 = vmatpush.xpose.msra.mxu0 0.0
    %831 = vmatpush.xpose.msra.mxu0 0.0
    %832 = vmatpush.xpose.msra.mxu0 0.0
    %833 = vmatpush.xpose.msra.mxu0 0.0
    %834 = vmatpush.xpose.msra.mxu0 0.0
    %835 = vmatpush.xpose.msra.mxu0 %v818
    %836 = vmatmul.f32.gmra.mxu0 %v816
    %v837 = vpop.f32.mrf.mxu0
    %v838 = vadd.f32 0.0, %v837
    %839 = vdwg.mxu0
    %v840 = vmul.f32 %v838, 0.35355338
    %v841 = vadd.f32 %v840, %v569
    %v842 = vsel %vm180, %v841, -inf
    %843 = vmax.xlane.f32.xlu0 %v842
    %v844 = vpop.xlane.xlu0 %843
    %v845 = vsub.f32 %v841, %v844
    %v846 = vmul.f32 %v845, 1.442695
    %v847 = vpow.pop %v846
    %v848 = vsel %vm180, %v847, 0.0
    %849 = vadd.xlane.f32.xlu0 %v848
    %v850 = vpop.xlane.xlu0 %849
    %v851 = vrcp.pop %v850
    %v852 = vmul.f32 %v847, %v851
    %853 = vrot.lane.b32.xlu0 %v174, 40
    %v854 = vpop.permute.xlu0 %853
    %v857 = vsel %vm180, %v852, 0
    %859 = vmatpush.msra.mxu0 0.0
    %860 = vmatpush.msra.mxu0 0.0
    %861 = vmatpush.msra.mxu0 0.0
    %862 = vmatpush.msra.mxu0 0.0
    %863 = vmatpush.msra.mxu0 0.0
    %864 = vmatpush.msra.mxu0 0.0
    %865 = vmatpush.msra.mxu0 0.0
    %866 = vmatpush.msra.mxu0 0.0
    %867 = vmatpush.msra.mxu0 0.0
    %868 = vmatpush.msra.mxu0 0.0
    %869 = vmatpush.msra.mxu0 0.0
    %870 = vmatpush.msra.mxu0 0.0
    %871 = vmatpush.msra.mxu0 0.0
    %872 = vmatpush.msra.mxu0 0.0
    %873 = vmatpush.msra.mxu0 0.0
    %874 = vmatpush.msra.mxu0 %v854
    %875 = vmatmul.f32.gmra.mxu0 %v857
    %v876 = vpop.f32.mrf.mxu0
    %v877 = vadd.f32 0.0, %v876
    %878 = vdwg.mxu0
    %v880 = vsel %vm180, %v877, 0
    %882 = vmatpush.msra.mxu0 0.0
    %883 = vmatpush.msra.mxu0 0.0
    %884 = vmatpush.msra.mxu0 0.0
    %885 = vmatpush.msra.mxu0 0.0
    %886 = vmatpush.msra.mxu0 0.0
    %887 = vmatpush.msra.mxu0 0.0
    %888 = vmatpush.msra.mxu0 0.0
    %889 = vmatpush.msra.mxu0 0.0
    %890 = vmatpush.msra.mxu0 0.0
    %891 = vmatpush.msra.mxu0 0.0
    %892 = vmatpush.msra.mxu0 0.0
    %893 = vmatpush.msra.mxu0 0.0
    %894 = vmatpush.msra.mxu0 0.0
    %895 = vmatpush.msra.mxu0 0.0
    %896 = vmatpush.msra.mxu0 0.0
    %897 = vmatpush.msra.mxu0 %v126
    %898 = vmatmul.f32.gmra.mxu0 %v880
    %v899 = vpop.f32.mrf.mxu0
    %v900 = vadd.f32 0.0, %v899
    %901 = vdwg.mxu0
    %v902 = vadd.f32 %v811, %v900
    %v904 = vperm.slane %v127, 0
    %v906 = vadd.f32 %v539, %v904
    %v907 = vadd.f32 %v902, %v904
    %v908 = vadd.f32 %v906, %v116
    %v909 = vadd.f32 %v907, %v117
    %v910 = vsel %vm60, %v908, 0.0
    %911 = vadd.xlane.f32.xlu0 %v910
    %v912 = vpop.xlane.xlu0 %911
    %v913 = vsel %vm60, %v909, 0.0
    %914 = vadd.xlane.f32.xlu0 %v913
    %v915 = vpop.xlane.xlu0 %914
    %v916 = vmul.f32 %v912, %v73
    %v917 = vmul.f32 %v915, %v73
    %v918 = vsub.f32 %v908, %v916
    %v919 = vsub.f32 %v909, %v917
    %v920 = vmul.f32 %v918, %v918
    %v921 = vmul.f32 %v919, %v919
    %v922 = vsel %vm60, %v920, 0.0
    %923 = vadd.xlane.f32.xlu0 %v922
    %v924 = vpop.xlane.xlu0 %923
    %v925 = vsel %vm60, %v921, 0.0
    %926 = vadd.xlane.f32.xlu0 %v925
    %v927 = vpop.xlane.xlu0 %926
    %v928 = vmul.f32 %v924, %v73
    %v929 = vmul.f32 %v927, %v73
    %v930 = vadd.f32 %v928, 1e-12
    %v931 = vadd.f32 %v929, 1e-12
    %v932 = vrsqrt.pop %v930
    %v933 = vmul.f32 %v932, %v930
    %v934 = vmul.f32 %v933, %v932
    %v935 = vmul.f32 0.5, %v934
    %v936 = vsub.f32 1.5, %v935
    %v937 = vmul.f32 %v932, %v936
    %vm938 = vweird.f32 %v930
    %vm939 = vweird.f32 %v932
    %vm940 = vmor %vm938, %vm939
    %v941 = vsel %vm940, %v932, %v937
    %v942 = vrsqrt.pop %v931
    %v943 = vmul.f32 %v942, %v931
    %v944 = vmul.f32 %v943, %v942
    %v945 = vmul.f32 0.5, %v944
    %v946 = vsub.f32 1.5, %v945
    %v947 = vmul.f32 %v942, %v946
    %vm948 = vweird.f32 %v931
    %vm949 = vweird.f32 %v942
    %vm950 = vmor %vm948, %vm949
    %v951 = vsel %vm950, %v942, %v947
    %v952 = vmul.f32 %v918, %v941
    %v953 = vmul.f32 %v919, %v951
    %v954 = vperm.slane %v128, 0
    %v955 = vmul.f32 %v952, %v954
    %v956 = vmul.f32 %v953, %v954
    %v957 = vperm.slane %v128, 1
    %v958 = vadd.f32 %v955, %v957
    %v959 = vadd.f32 %v956, %v957
    %v961 = vperm.slane %v133, 0
    %v964 = vsel %vm60, %v958, 0
    %v967 = vsel %vm60, %v959, 0
    %969 = vmatpush.msra.mxu0 0.0
    %970 = vmatpush.msra.mxu0 0.0
    %971 = vmatpush.msra.mxu0 0.0
    %972 = vmatpush.msra.mxu0 0.0
    %973 = vmatpush.msra.mxu0 0.0
    %974 = vmatpush.msra.mxu0 0.0
    %975 = vmatpush.msra.mxu0 0.0
    %976 = vmatpush.msra.mxu0 0.0
    %977 = vmatpush.msra.mxu0 0.0
    %978 = vmatpush.msra.mxu0 0.0
    %979 = vmatpush.msra.mxu0 0.0
    %980 = vmatpush.msra.mxu0 0.0
    %981 = vmatpush.msra.mxu0 %v132
    %982 = vmatpush.msra.mxu0 %v131
    %983 = vmatpush.msra.mxu0 %v130
    %984 = vmatpush.msra.mxu0 %v129
    %985 = vmatmul.f32.gmra.mxu0 %v964
    %v986 = vpop.f32.mrf.mxu0
    %v987 = vadd.f32 %v961, %v986
    %988 = vmatmul.f32.gmra.mxu0 %v967
    %v989 = vpop.f32.mrf.mxu0
    %v990 = vadd.f32 %v961, %v989
    %991 = vdwg.mxu0
    %v992 = vmul.f32 %v987, 0.5
    %v993 = vmul.f32 %v990, 0.5
    %v994 = vmul.f32 %v987, 0.044715
    %v995 = vmul.f32 %v990, 0.044715
    %v996 = vmul.f32 %v994, %v987
    %v997 = vmul.f32 %v995, %v990
    %v998 = vmul.f32 %v996, %v987
    %v999 = vmul.f32 %v997, %v990
    %v1000 = vadd.f32 %v987, %v998
    %v1001 = vadd.f32 %v990, %v999
    %v1002 = vmul.f32 %v1000, 0.7978846
    %v1003 = vmul.f32 %v1001, 0.7978846
    %v1004 = vtanh.pop %v1002
    %v1005 = vtanh.pop %v1003
    %v1006 = vadd.f32 %v1004, 1.0
    %v1007 = vadd.f32 %v1005, 1.0
    %v1008 = vmul.f32 %v992, %v1006
    %v1009 = vmul.f32 %v993, %v1007
    %v1011 = vperm.slane %v142, 0
    %vm1013 = vcmask 523264
    %v1015 = vsel %vm1013, %v1008, 0
    %v1018 = vsel %vm1013, %v1009, 0
    %1020 = vmatpush.msra.mxu0 0.0
    %1021 = vmatpush.msra.mxu0 0.0
    %1022 = vmatpush.msra.mxu0 0.0
    %1023 = vmatpush.msra.mxu0 0.0
    %1024 = vmatpush.msra.mxu0 0.0
    %1025 = vmatpush.msra.mxu0 0.0
    %1026 = vmatpush.msra.mxu0 0.0
    %1027 = vmatpush.msra.mxu0 0.0
    %1028 = vmatpush.msra.mxu0 %v141
    %1029 = vmatpush.msra.mxu0 %v140
    %1030 = vmatpush.msra.mxu0 %v139
    %1031 = vmatpush.msra.mxu0 %v138
    %1032 = vmatpush.msra.mxu0 %v137
    %1033 = vmatpush.msra.mxu0 %v136
    %1034 = vmatpush.msra.mxu0 %v135
    %1035 = vmatpush.msra.mxu0 %v134
    %1036 = vmatmul.f32.gmra.mxu0 %v1015
    %v1037 = vpop.f32.mrf.mxu0
    %v1038 = vadd.f32 %v1011, %v1037
    %1039 = vmatmul.f32.gmra.mxu0 %v1018
    %v1040 = vpop.f32.mrf.mxu0
    %v1041 = vadd.f32 %v1011, %v1040
    %1042 = vdwg.mxu0
    %v1043 = vadd.f32 %v1038, %v958
    %v1044 = vadd.f32 %v1041, %v959
    %v1045 = vsel %vm60, %v1043, 0.0
    %1046 = vadd.xlane.f32.xlu0 %v1045
    %v1047 = vpop.xlane.xlu0 %1046
    %v1048 = vsel %vm60, %v1044, 0.0
    %1049 = vadd.xlane.f32.xlu0 %v1048
    %v1050 = vpop.xlane.xlu0 %1049
    %v1051 = vmul.f32 %v1047, %v73
    %v1052 = vmul.f32 %v1050, %v73
    %v1053 = vsub.f32 %v1043, %v1051
    %v1054 = vsub.f32 %v1044, %v1052
    %v1055 = vmul.f32 %v1053, %v1053
    %v1056 = vmul.f32 %v1054, %v1054
    %v1057 = vsel %vm60, %v1055, 0.0
    %1058 = vadd.xlane.f32.xlu0 %v1057
    %v1059 = vpop.xlane.xlu0 %1058
    %v1060 = vsel %vm60, %v1056, 0.0
    %1061 = vadd.xlane.f32.xlu0 %v1060
    %v1062 = vpop.xlane.xlu0 %1061
    %v1063 = vmul.f32 %v1059, %v73
    %v1064 = vmul.f32 %v1062, %v73
    %v1065 = vadd.f32 %v1063, 1e-12
    %v1066 = vadd.f32 %v1064, 1e-12
    %v1067 = vrsqrt.pop %v1065
    %v1068 = vmul.f32 %v1067, %v1065
    %v1069 = vmul.f32 %v1068, %v1067
    %v1070 = vmul.f32 0.5, %v1069
    %v1071 = vsub.f32 1.5, %v1070
    %v1072 = vmul.f32 %v1067, %v1071
    %vm1073 = vweird.f32 %v1065
    %vm1074 = vweird.f32 %v1067
    %vm1075 = vmor %vm1073, %vm1074
    %v1076 = vsel %vm1075, %v1067, %v1072
    %v1077 = vrsqrt.pop %v1066
    %v1078 = vmul.f32 %v1077, %v1066
    %v1079 = vmul.f32 %v1078, %v1077
    %v1080 = vmul.f32 0.5, %v1079
    %v1081 = vsub.f32 1.5, %v1080
    %v1082 = vmul.f32 %v1077, %v1081
    %vm1083 = vweird.f32 %v1066
    %vm1084 = vweird.f32 %v1077
    %vm1085 = vmor %vm1083, %vm1084
    %v1086 = vsel %vm1085, %v1077, %v1082
    %v1087 = vmul.f32 %v1053, %v1076
    %v1088 = vmul.f32 %v1054, %v1086
    %v1089 = vperm.slane %v143, 0
    %v1090 = vmul.f32 %v1087, %v1089
    %v1091 = vmul.f32 %v1088, %v1089
    %v1092 = vperm.slane %v143, 1
    %v1093 = vadd.f32 %v1090, %v1092
    %v1094 = vadd.f32 %v1091, %v1092
    %s1095 = scalar_lea.vmem %s3, 32
    %v1096 = vld [vmem:[%s1095] sm:$0xff]
    %v1097 = vld [vmem:[%s1095 + $0x8] sm:$0xff]
    %v1098 = vld [vmem:[%s1095 + $0x10] sm:$0xff]
    %v1099 = vld [vmem:[%s1095 + $0x18] sm:$0xff]
    %s1100 = scalar_lea.vmem %s4, 1
    %v1101 = vld [vmem:[%s1100] sm:$0x1]
    %s1102 = scalar_lea.vmem %s5, 32
    %v1103 = vld [vmem:[%s1102] sm:$0xff]
    %v1104 = vld [vmem:[%s1102 + $0x8] sm:$0xff]
    %v1105 = vld [vmem:[%s1102 + $0x10] sm:$0xff]
    %v1106 = vld [vmem:[%s1102 + $0x18] sm:$0xff]
    %s1107 = scalar_lea.vmem %s6, 1
    %v1108 = vld [vmem:[%s1107] sm:$0x1]
    %s1109 = scalar_lea.vmem %s7, 2
    %v1110 = vld [vmem:[%s1109] sm:$0x3]
    %s1111 = scalar_lea.vmem %s8, 32
    %v1112 = vld [vmem:[%s1111] sm:$0xff]
    %v1113 = vld [vmem:[%s1111 + $0x8] sm:$0xff]
    %v1114 = vld [vmem:[%s1111 + $0x10] sm:$0xff]
    %v1115 = vld [vmem:[%s1111 + $0x18] sm:$0xff]
    %s1116 = scalar_lea.vmem %s9, 1
    %v1117 = vld [vmem:[%s1116] sm:$0x1]
    %s1118 = scalar_lea.vmem %s10, 64
    %v1119 = vld [vmem:[%s1118] sm:$0xff]
    %v1120 = vld [vmem:[%s1118 + $0x8] sm:$0xff]
    %v1121 = vld [vmem:[%s1118 + $0x10] sm:$0xff]
    %v1122 = vld [vmem:[%s1118 + $0x18] sm:$0xff]
    %v1123 = vld [vmem:[%s1118 + $0x20] sm:$0xff]
    %v1124 = vld [vmem:[%s1118 + $0x28] sm:$0xff]
    %v1125 = vld [vmem:[%s1118 + $0x30] sm:$0xff]
    %v1126 = vld [vmem:[%s1118 + $0x38] sm:$0xff]
    %s1127 = scalar_lea.vmem %s11, 1
    %v1128 = vld [vmem:[%s1127] sm:$0x1]
    %s1129 = scalar_lea.vmem %s12, 2
    %v1130 = vld [vmem:[%s1129] sm:$0x3]
    %v1132 = vperm.slane %v1101, 0
    %v1135 = vsel %vm60, %v1093, 0
    %v1138 = vsel %vm60, %v1094, 0
    %1140 = vmatpush.msra.mxu0 0.0
    %1141 = vmatpush.msra.mxu0 0.0
    %1142 = vmatpush.msra.mxu0 0.0
    %1143 = vmatpush.msra.mxu0 0.0
    %1144 = vmatpush.msra.mxu0 0.0
    %1145 = vmatpush.msra.mxu0 0.0
    %1146 = vmatpush.msra.mxu0 0.0
    %1147 = vmatpush.msra.mxu0 0.0
    %1148 = vmatpush.msra.mxu0 0.0
    %1149 = vmatpush.msra.mxu0 0.0
    %1150 = vmatpush.msra.mxu0 0.0
    %1151 = vmatpush.msra.mxu0 0.0
    %1152 = vmatpush.msra.mxu0 %v1099
    %1153 = vmatpush.msra.mxu0 %v1098
    %1154 = vmatpush.msra.mxu0 %v1097
    %1155 = vmatpush.msra.mxu0 %v1096
    %1156 = vmatmul.f32.gmra.mxu0 %v1135
    %v1157 = vpop.f32.mrf.mxu0
    %v1158 = vadd.f32 %v1132, %v1157
    %1159 = vmatmul.f32.gmra.mxu0 %v1138
    %v1160 = vpop.f32.mrf.mxu0
    %v1161 = vadd.f32 %v1132, %v1160
    %1162 = vdwg.mxu0
    %1164 = vrot.lane.b32.xlu0 %v1158, 96
    %v1165 = vpop.permute.xlu0 %1164
    %v1166 = vsel %vm180, %v1158, 0
    %v1168 = vsel %vm180, %v1165, 0
    %1170 = vmatpush.xpose.msra.mxu0 0.0
    %1171 = vmatpush.xpose.msra.mxu0 0.0
    %1172 = vmatpush.xpose.msra.mxu0 0.0
    %1173 = vmatpush.xpose.msra.mxu0 0.0
    %1174 = vmatpush.xpose.msra.mxu0 0.0
    %1175 = vmatpush.xpose.msra.mxu0 0.0
    %1176 = vmatpush.xpose.msra.mxu0 0.0
    %1177 = vmatpush.xpose.msra.mxu0 0.0
    %1178 = vmatpush.xpose.msra.mxu0 0.0
    %1179 = vmatpush.xpose.msra.mxu0 0.0
    %1180 = vmatpush.xpose.msra.mxu0 0.0
    %1181 = vmatpush.xpose.msra.mxu0 0.0
    %1182 = vmatpush.xpose.msra.mxu0 0.0
    %1183 = vmatpush.xpose.msra.mxu0 0.0
    %1184 = vmatpush.xpose.msra.mxu0 0.0
    %1185 = vmatpush.xpose.msra.mxu0 %v1168
    %1186 = vmatmul.f32.gmra.mxu0 %v1166
    %v1187 = vpop.f32.mrf.mxu0
    %v1188 = vadd.f32 0.0, %v1187
    %1189 = vdwg.mxu0
    %v1190 = vmul.f32 %v1188, 0.35355338
    %v1191 = vadd.f32 %v1190, %v206
    %v1192 = vsel %vm180, %v1191, -inf
    %1193 = vmax.xlane.f32.xlu0 %v1192
    %v1194 = vpop.xlane.xlu0 %1193
    %v1195 = vsub.f32 %v1191, %v1194
    %v1196 = vmul.f32 %v1195, 1.442695
    %v1197 = vpow.pop %v1196
    %v1198 = vsel %vm180, %v1197, 0.0
    %1199 = vadd.xlane.f32.xlu0 %v1198
    %v1200 = vpop.xlane.xlu0 %1199
    %v1201 = vrcp.pop %v1200
    %v1202 = vmul.f32 %v1197, %v1201
    %1203 = vrot.lane.b32.xlu0 %v1158, 64
    %v1204 = vpop.permute.xlu0 %1203
    %v1207 = vsel %vm180, %v1202, 0
    %1209 = vmatpush.msra.mxu0 0.0
    %1210 = vmatpush.msra.mxu0 0.0
    %1211 = vmatpush.msra.mxu0 0.0
    %1212 = vmatpush.msra.mxu0 0.0
    %1213 = vmatpush.msra.mxu0 0.0
    %1214 = vmatpush.msra.mxu0 0.0
    %1215 = vmatpush.msra.mxu0 0.0
    %1216 = vmatpush.msra.mxu0 0.0
    %1217 = vmatpush.msra.mxu0 0.0
    %1218 = vmatpush.msra.mxu0 0.0
    %1219 = vmatpush.msra.mxu0 0.0
    %1220 = vmatpush.msra.mxu0 0.0
    %1221 = vmatpush.msra.mxu0 0.0
    %1222 = vmatpush.msra.mxu0 0.0
    %1223 = vmatpush.msra.mxu0 0.0
    %1224 = vmatpush.msra.mxu0 %v1204
    %1225 = vmatmul.f32.gmra.mxu0 %v1207
    %v1226 = vpop.f32.mrf.mxu0
    %v1227 = vadd.f32 0.0, %v1226
    %1228 = vdwg.mxu0
    %1229 = vrot.lane.b32.xlu0 %v1158, 120
    %v1230 = vpop.permute.xlu0 %1229
    %1231 = vrot.lane.b32.xlu0 %v1158, 88
    %v1232 = vpop.permute.xlu0 %1231
    %v1233 = vsel %vm180, %v1230, 0
    %v1235 = vsel %vm180, %v1232, 0
    %1237 = vmatpush.xpose.msra.mxu0 0.0
    %1238 = vmatpush.xpose.msra.mxu0 0.0
    %1239 = vmatpush.xpose.msra.mxu0 0.0
    %1240 = vmatpush.xpose.msra.mxu0 0.0
    %1241 = vmatpush.xpose.msra.mxu0 0.0
    %1242 = vmatpush.xpose.msra.mxu0 0.0
    %1243 = vmatpush.xpose.msra.mxu0 0.0
    %1244 = vmatpush.xpose.msra.mxu0 0.0
    %1245 = vmatpush.xpose.msra.mxu0 0.0
    %1246 = vmatpush.xpose.msra.mxu0 0.0
    %1247 = vmatpush.xpose.msra.mxu0 0.0
    %1248 = vmatpush.xpose.msra.mxu0 0.0
    %1249 = vmatpush.xpose.msra.mxu0 0.0
    %1250 = vmatpush.xpose.msra.mxu0 0.0
    %1251 = vmatpush.xpose.msra.mxu0 0.0
    %1252 = vmatpush.xpose.msra.mxu0 %v1235
    %1253 = vmatmul.f32.gmra.mxu0 %v1233
    %v1254 = vpop.f32.mrf.mxu0
    %v1255 = vadd.f32 0.0, %v1254
    %1256 = vdwg.mxu0
    %v1257 = vmul.f32 %v1255, 0.35355338
    %v1258 = vadd.f32 %v1257, %v206
    %v1259 = vsel %vm180, %v1258, -inf
    %1260 = vmax.xlane.f32.xlu0 %v1259
    %v1261 = vpop.xlane.xlu0 %1260
    %v1262 = vsub.f32 %v1258, %v1261
    %v1263 = vmul.f32 %v1262, 1.442695
    %v1264 = vpow.pop %v1263
    %v1265 = vsel %vm180, %v1264, 0.0
    %1266 = vadd.xlane.f32.xlu0 %v1265
    %v1267 = vpop.xlane.xlu0 %1266
    %v1268 = vrcp.pop %v1267
    %v1269 = vmul.f32 %v1264, %v1268
    %1270 = vrot.lane.b32.xlu0 %v1158, 56
    %v1271 = vpop.permute.xlu0 %1270
    %v1274 = vsel %vm180, %v1269, 0
    %1276 = vmatpush.msra.mxu0 0.0
    %1277 = vmatpush.msra.mxu0 0.0
    %1278 = vmatpush.msra.mxu0 0.0
    %1279 = vmatpush.msra.mxu0 0.0
    %1280 = vmatpush.msra.mxu0 0.0
    %1281 = vmatpush.msra.mxu0 0.0
    %1282 = vmatpush.msra.mxu0 0.0
    %1283 = vmatpush.msra.mxu0 0.0
    %1284 = vmatpush.msra.mxu0 0.0
    %1285 = vmatpush.msra.mxu0 0.0
    %1286 = vmatpush.msra.mxu0 0.0
    %1287 = vmatpush.msra.mxu0 0.0
    %1288 = vmatpush.msra.mxu0 0.0
    %1289 = vmatpush.msra.mxu0 0.0
    %1290 = vmatpush.msra.mxu0 0.0
    %1291 = vmatpush.msra.mxu0 %v1271
    %1292 = vmatmul.f32.gmra.mxu0 %v1274
    %v1293 = vpop.f32.mrf.mxu0
    %v1294 = vadd.f32 0.0, %v1293
    %1295 = vdwg.mxu0
    %v1297 = vsel %vm180, %v1294, 0
    %1299 = vmatpush.msra.mxu0 0.0
    %1300 = vmatpush.msra.mxu0 0.0
    %1301 = vmatpush.msra.mxu0 0.0
    %1302 = vmatpush.msra.mxu0 0.0
    %1303 = vmatpush.msra.mxu0 0.0
    %1304 = vmatpush.msra.mxu0 0.0
    %1305 = vmatpush.msra.mxu0 0.0
    %1306 = vmatpush.msra.mxu0 0.0
    %1307 = vmatpush.msra.mxu0 0.0
    %1308 = vmatpush.msra.mxu0 0.0
    %1309 = vmatpush.msra.mxu0 0.0
    %1310 = vmatpush.msra.mxu0 0.0
    %1311 = vmatpush.msra.mxu0 0.0
    %1312 = vmatpush.msra.mxu0 0.0
    %1313 = vmatpush.msra.mxu0 0.0
    %1314 = vmatpush.msra.mxu0 %v1104
    %1315 = vmatmul.f32.gmra.mxu0 %v1297
    %v1316 = vpop.f32.mrf.mxu0
    %v1317 = vadd.f32 0.0, %v1316
    %1318 = vdwg.mxu0
    %v1320 = vsel %vm180, %v1227, 0
    %1322 = vmatpush.msra.mxu0 0.0
    %1323 = vmatpush.msra.mxu0 0.0
    %1324 = vmatpush.msra.mxu0 0.0
    %1325 = vmatpush.msra.mxu0 0.0
    %1326 = vmatpush.msra.mxu0 0.0
    %1327 = vmatpush.msra.mxu0 0.0
    %1328 = vmatpush.msra.mxu0 0.0
    %1329 = vmatpush.msra.mxu0 0.0
    %1330 = vmatpush.msra.mxu0 0.0
    %1331 = vmatpush.msra.mxu0 0.0
    %1332 = vmatpush.msra.mxu0 0.0
    %1333 = vmatpush.msra.mxu0 0.0
    %1334 = vmatpush.msra.mxu0 0.0
    %1335 = vmatpush.msra.mxu0 0.0
    %1336 = vmatpush.msra.mxu0 0.0
    %1337 = vmatpush.msra.mxu0 %v1103
    %1338 = vmatmul.f32.gmra.mxu0 %v1320
    %v1339 = vpop.f32.mrf.mxu0
    %v1340 = vadd.f32 %v1317, %v1339
    %1341 = vdwg.mxu0
    %1342 = vrot.lane.b32.xlu0 %v1158, 112
    %v1343 = vpop.permute.xlu0 %1342
    %1344 = vrot.lane.b32.xlu0 %v1158, 80
    %v1345 = vpop.permute.xlu0 %1344
    %v1346 = vsel %vm180, %v1343, 0
    %v1348 = vsel %vm180, %v1345, 0
    %1350 = vmatpush.xpose.msra.mxu0 0.0
    %1351 = vmatpush.xpose.msra.mxu0 0.0
    %1352 = vmatpush.xpose.msra.mxu0 0.0
    %1353 = vmatpush.xpose.msra.mxu0 0.0
    %1354 = vmatpush.xpose.msra.mxu0 0.0
    %1355 = vmatpush.xpose.msra.mxu0 0.0
    %1356 = vmatpush.xpose.msra.mxu0 0.0
    %1357 = vmatpush.xpose.msra.mxu0 0.0
    %1358 = vmatpush.xpose.msra.mxu0 0.0
    %1359 = vmatpush.xpose.msra.mxu0 0.0
    %1360 = vmatpush.xpose.msra.mxu0 0.0
    %1361 = vmatpush.xpose.msra.mxu0 0.0
    %1362 = vmatpush.xpose.msra.mxu0 0.0
    %1363 = vmatpush.xpose.msra.mxu0 0.0
    %1364 = vmatpush.xpose.msra.mxu0 0.0
    %1365 = vmatpush.xpose.msra.mxu0 %v1348
    %1366 = vmatmul.f32.gmra.mxu0 %v1346
    %v1367 = vpop.f32.mrf.mxu0
    %v1368 = vadd.f32 0.0, %v1367
    %1369 = vdwg.mxu0
    %v1370 = vmul.f32 %v1368, 0.35355338
    %v1371 = vadd.f32 %v1370, %v206
    %v1372 = vsel %vm180, %v1371, -inf
    %1373 = vmax.xlane.f32.xlu0 %v1372
    %v1374 = vpop.xlane.xlu0 %1373
    %v1375 = vsub.f32 %v1371, %v1374
    %v1376 = vmul.f32 %v1375, 1.442695
    %v1377 = vpow.pop %v1376
    %v1378 = vsel %vm180, %v1377, 0.0
    %1379 = vadd.xlane.f32.xlu0 %v1378
    %v1380 = vpop.xlane.xlu0 %1379
    %v1381 = vrcp.pop %v1380
    %v1382 = vmul.f32 %v1377, %v1381
    %1383 = vrot.lane.b32.xlu0 %v1158, 48
    %v1384 = vpop.permute.xlu0 %1383
    %v1387 = vsel %vm180, %v1382, 0
    %1389 = vmatpush.msra.mxu0 0.0
    %1390 = vmatpush.msra.mxu0 0.0
    %1391 = vmatpush.msra.mxu0 0.0
    %1392 = vmatpush.msra.mxu0 0.0
    %1393 = vmatpush.msra.mxu0 0.0
    %1394 = vmatpush.msra.mxu0 0.0
    %1395 = vmatpush.msra.mxu0 0.0
    %1396 = vmatpush.msra.mxu0 0.0
    %1397 = vmatpush.msra.mxu0 0.0
    %1398 = vmatpush.msra.mxu0 0.0
    %1399 = vmatpush.msra.mxu0 0.0
    %1400 = vmatpush.msra.mxu0 0.0
    %1401 = vmatpush.msra.mxu0 0.0
    %1402 = vmatpush.msra.mxu0 0.0
    %1403 = vmatpush.msra.mxu0 0.0
    %1404 = vmatpush.msra.mxu0 %v1384
    %1405 = vmatmul.f32.gmra.mxu0 %v1387
    %v1406 = vpop.f32.mrf.mxu0
    %v1407 = vadd.f32 0.0, %v1406
    %1408 = vdwg.mxu0
    %v1410 = vsel %vm180, %v1407, 0
    %1412 = vmatpush.msra.mxu0 0.0
    %1413 = vmatpush.msra.mxu0 0.0
    %1414 = vmatpush.msra.mxu0 0.0
    %1415 = vmatpush.msra.mxu0 0.0
    %1416 = vmatpush.msra.mxu0 0.0
    %1417 = vmatpush.msra.mxu0 0.0
    %1418 = vmatpush.msra.mxu0 0.0
    %1419 = vmatpush.msra.mxu0 0.0
    %1420 = vmatpush.msra.mxu0 0.0
    %1421 = vmatpush.msra.mxu0 0.0
    %1422 = vmatpush.msra.mxu0 0.0
    %1423 = vmatpush.msra.mxu0 0.0
    %1424 = vmatpush.msra.mxu0 0.0
    %1425 = vmatpush.msra.mxu0 0.0
    %1426 = vmatpush.msra.mxu0 0.0
    %1427 = vmatpush.msra.mxu0 %v1105
    %1428 = vmatmul.f32.gmra.mxu0 %v1410
    %v1429 = vpop.f32.mrf.mxu0
    %v1430 = vadd.f32 0.0, %v1429
    %1431 = vdwg.mxu0
    %v1432 = vadd.f32 %v1340, %v1430
    %1433 = vrot.lane.b32.xlu0 %v1158, 104
    %v1434 = vpop.permute.xlu0 %1433
    %1435 = vrot.lane.b32.xlu0 %v1158, 72
    %v1436 = vpop.permute.xlu0 %1435
    %v1437 = vsel %vm180, %v1434, 0
    %v1439 = vsel %vm180, %v1436, 0
    %1441 = vmatpush.xpose.msra.mxu0 0.0
    %1442 = vmatpush.xpose.msra.mxu0 0.0
    %1443 = vmatpush.xpose.msra.mxu0 0.0
    %1444 = vmatpush.xpose.msra.mxu0 0.0
    %1445 = vmatpush.xpose.msra.mxu0 0.0
    %1446 = vmatpush.xpose.msra.mxu0 0.0
    %1447 = vmatpush.xpose.msra.mxu0 0.0
    %1448 = vmatpush.xpose.msra.mxu0 0.0
    %1449 = vmatpush.xpose.msra.mxu0 0.0
    %1450 = vmatpush.xpose.msra.mxu0 0.0
    %1451 = vmatpush.xpose.msra.mxu0 0.0
    %1452 = vmatpush.xpose.msra.mxu0 0.0
    %1453 = vmatpush.xpose.msra.mxu0 0.0
    %1454 = vmatpush.xpose.msra.mxu0 0.0
    %1455 = vmatpush.xpose.msra.mxu0 0.0
    %1456 = vmatpush.xpose.msra.mxu0 %v1439
    %1457 = vmatmul.f32.gmra.mxu0 %v1437
    %v1458 = vpop.f32.mrf.mxu0
    %v1459 = vadd.f32 0.0, %v1458
    %1460 = vdwg.mxu0
    %v1461 = vmul.f32 %v1459, 0.35355338
    %v1462 = vadd.f32 %v1461, %v206
    %v1463 = vsel %vm180, %v1462, -inf
    %1464 = vmax.xlane.f32.xlu0 %v1463
    %v1465 = vpop.xlane.xlu0 %1464
    %v1466 = vsub.f32 %v1462, %v1465
    %v1467 = vmul.f32 %v1466, 1.442695
    %v1468 = vpow.pop %v1467
    %v1469 = vsel %vm180, %v1468, 0.0
    %1470 = vadd.xlane.f32.xlu0 %v1469
    %v1471 = vpop.xlane.xlu0 %1470
    %v1472 = vrcp.pop %v1471
    %v1473 = vmul.f32 %v1468, %v1472
    %1474 = vrot.lane.b32.xlu0 %v1158, 40
    %v1475 = vpop.permute.xlu0 %1474
    %v1478 = vsel %vm180, %v1473, 0
    %1480 = vmatpush.msra.mxu0 0.0
    %1481 = vmatpush.msra.mxu0 0.0
    %1482 = vmatpush.msra.mxu0 0.0
    %1483 = vmatpush.msra.mxu0 0.0
    %1484 = vmatpush.msra.mxu0 0.0
    %1485 = vmatpush.msra.mxu0 0.0
    %1486 = vmatpush.msra.mxu0 0.0
    %1487 = vmatpush.msra.mxu0 0.0
    %1488 = vmatpush.msra.mxu0 0.0
    %1489 = vmatpush.msra.mxu0 0.0
    %1490 = vmatpush.msra.mxu0 0.0
    %1491 = vmatpush.msra.mxu0 0.0
    %1492 = vmatpush.msra.mxu0 0.0
    %1493 = vmatpush.msra.mxu0 0.0
    %1494 = vmatpush.msra.mxu0 0.0
    %1495 = vmatpush.msra.mxu0 %v1475
    %1496 = vmatmul.f32.gmra.mxu0 %v1478
    %v1497 = vpop.f32.mrf.mxu0
    %v1498 = vadd.f32 0.0, %v1497
    %1499 = vdwg.mxu0
    %v1501 = vsel %vm180, %v1498, 0
    %1503 = vmatpush.msra.mxu0 0.0
    %1504 = vmatpush.msra.mxu0 0.0
    %1505 = vmatpush.msra.mxu0 0.0
    %1506 = vmatpush.msra.mxu0 0.0
    %1507 = vmatpush.msra.mxu0 0.0
    %1508 = vmatpush.msra.mxu0 0.0
    %1509 = vmatpush.msra.mxu0 0.0
    %1510 = vmatpush.msra.mxu0 0.0
    %1511 = vmatpush.msra.mxu0 0.0
    %1512 = vmatpush.msra.mxu0 0.0
    %1513 = vmatpush.msra.mxu0 0.0
    %1514 = vmatpush.msra.mxu0 0.0
    %1515 = vmatpush.msra.mxu0 0.0
    %1516 = vmatpush.msra.mxu0 0.0
    %1517 = vmatpush.msra.mxu0 0.0
    %1518 = vmatpush.msra.mxu0 %v1106
    %1519 = vmatmul.f32.gmra.mxu0 %v1501
    %v1520 = vpop.f32.mrf.mxu0
    %v1521 = vadd.f32 0.0, %v1520
    %1522 = vdwg.mxu0
    %v1523 = vadd.f32 %v1432, %v1521
    %1525 = vrot.lane.b32.xlu0 %v1161, 96
    %v1526 = vpop.permute.xlu0 %1525
    %v1527 = vsel %vm180, %v1161, 0
    %v1529 = vsel %vm180, %v1526, 0
    %1531 = vmatpush.xpose.msra.mxu0 0.0
    %1532 = vmatpush.xpose.msra.mxu0 0.0
    %1533 = vmatpush.xpose.msra.mxu0 0.0
    %1534 = vmatpush.xpose.msra.mxu0 0.0
    %1535 = vmatpush.xpose.msra.mxu0 0.0
    %1536 = vmatpush.xpose.msra.mxu0 0.0
    %1537 = vmatpush.xpose.msra.mxu0 0.0
    %1538 = vmatpush.xpose.msra.mxu0 0.0
    %1539 = vmatpush.xpose.msra.mxu0 0.0
    %1540 = vmatpush.xpose.msra.mxu0 0.0
    %1541 = vmatpush.xpose.msra.mxu0 0.0
    %1542 = vmatpush.xpose.msra.mxu0 0.0
    %1543 = vmatpush.xpose.msra.mxu0 0.0
    %1544 = vmatpush.xpose.msra.mxu0 0.0
    %1545 = vmatpush.xpose.msra.mxu0 0.0
    %1546 = vmatpush.xpose.msra.mxu0 %v1529
    %1547 = vmatmul.f32.gmra.mxu0 %v1527
    %v1548 = vpop.f32.mrf.mxu0
    %v1549 = vadd.f32 0.0, %v1548
    %1550 = vdwg.mxu0
    %v1551 = vmul.f32 %v1549, 0.35355338
    %v1552 = vadd.f32 %v1551, %v569
    %v1553 = vsel %vm180, %v1552, -inf
    %1554 = vmax.xlane.f32.xlu0 %v1553
    %v1555 = vpop.xlane.xlu0 %1554
    %v1556 = vsub.f32 %v1552, %v1555
    %v1557 = vmul.f32 %v1556, 1.442695
    %v1558 = vpow.pop %v1557
    %v1559 = vsel %vm180, %v1558, 0.0
    %1560 = vadd.xlane.f32.xlu0 %v1559
    %v1561 = vpop.xlane.xlu0 %1560
    %v1562 = vrcp.pop %v1561
    %v1563 = vmul.f32 %v1558, %v1562
    %1564 = vrot.lane.b32.xlu0 %v1161, 64
    %v1565 = vpop.permute.xlu0 %1564
    %v1568 = vsel %vm180, %v1563, 0
    %1570 = vmatpush.msra.mxu0 0.0
    %1571 = vmatpush.msra.mxu0 0.0
    %1572 = vmatpush.msra.mxu0 0.0
    %1573 = vmatpush.msra.mxu0 0.0
    %1574 = vmatpush.msra.mxu0 0.0
    %1575 = vmatpush.msra.mxu0 0.0
    %1576 = vmatpush.msra.mxu0 0.0
    %1577 = vmatpush.msra.mxu0 0.0
    %1578 = vmatpush.msra.mxu0 0.0
    %1579 = vmatpush.msra.mxu0 0.0
    %1580 = vmatpush.msra.mxu0 0.0
    %1581 = vmatpush.msra.mxu0 0.0
    %1582 = vmatpush.msra.mxu0 0.0
    %1583 = vmatpush.msra.mxu0 0.0
    %1584 = vmatpush.msra.mxu0 0.0
    %1585 = vmatpush.msra.mxu0 %v1565
    %1586 = vmatmul.f32.gmra.mxu0 %v1568
    %v1587 = vpop.f32.mrf.mxu0
    %v1588 = vadd.f32 0.0, %v1587
    %1589 = vdwg.mxu0
    %1590 = vrot.lane.b32.xlu0 %v1161, 120
    %v1591 = vpop.permute.xlu0 %1590
    %1592 = vrot.lane.b32.xlu0 %v1161, 88
    %v1593 = vpop.permute.xlu0 %1592
    %v1594 = vsel %vm180, %v1591, 0
    %v1596 = vsel %vm180, %v1593, 0
    %1598 = vmatpush.xpose.msra.mxu0 0.0
    %1599 = vmatpush.xpose.msra.mxu0 0.0
    %1600 = vmatpush.xpose.msra.mxu0 0.0
    %1601 = vmatpush.xpose.msra.mxu0 0.0
    %1602 = vmatpush.xpose.msra.mxu0 0.0
    %1603 = vmatpush.xpose.msra.mxu0 0.0
    %1604 = vmatpush.xpose.msra.mxu0 0.0
    %1605 = vmatpush.xpose.msra.mxu0 0.0
    %1606 = vmatpush.xpose.msra.mxu0 0.0
    %1607 = vmatpush.xpose.msra.mxu0 0.0
    %1608 = vmatpush.xpose.msra.mxu0 0.0
    %1609 = vmatpush.xpose.msra.mxu0 0.0
    %1610 = vmatpush.xpose.msra.mxu0 0.0
    %1611 = vmatpush.xpose.msra.mxu0 0.0
    %1612 = vmatpush.xpose.msra.mxu0 0.0
    %1613 = vmatpush.xpose.msra.mxu0 %v1596
    %1614 = vmatmul.f32.gmra.mxu0 %v1594
    %v1615 = vpop.f32.mrf.mxu0
    %v1616 = vadd.f32 0.0, %v1615
    %1617 = vdwg.mxu0
    %v1618 = vmul.f32 %v1616, 0.35355338
    %v1619 = vadd.f32 %v1618, %v569
    %v1620 = vsel %vm180, %v1619, -inf
    %1621 = vmax.xlane.f32.xlu0 %v1620
    %v1622 = vpop.xlane.xlu0 %1621
    %v1623 = vsub.f32 %v1619, %v1622
    %v1624 = vmul.f32 %v1623, 1.442695
    %v1625 = vpow.pop %v1624
    %v1626 = vsel %vm180, %v1625, 0.0
    %1627 = vadd.xlane.f32.xlu0 %v1626
    %v1628 = vpop.xlane.xlu0 %1627
    %v1629 = vrcp.pop %v1628
    %v1630 = vmul.f32 %v1625, %v1629
    %1631 = vrot.lane.b32.xlu0 %v1161, 56
    %v1632 = vpop.permute.xlu0 %1631
    %v1635 = vsel %vm180, %v1630, 0
    %1637 = vmatpush.msra.mxu0 0.0
    %1638 = vmatpush.msra.mxu0 0.0
    %1639 = vmatpush.msra.mxu0 0.0
    %1640 = vmatpush.msra.mxu0 0.0
    %1641 = vmatpush.msra.mxu0 0.0
    %1642 = vmatpush.msra.mxu0 0.0
    %1643 = vmatpush.msra.mxu0 0.0
    %1644 = vmatpush.msra.mxu0 0.0
    %1645 = vmatpush.msra.mxu0 0.0
    %1646 = vmatpush.msra.mxu0 0.0
    %1647 = vmatpush.msra.mxu0 0.0
    %1648 = vmatpush.msra.mxu0 0.0
    %1649 = vmatpush.msra.mxu0 0.0
    %1650 = vmatpush.msra.mxu0 0.0
    %1651 = vmatpush.msra.mxu0 0.0
    %1652 = vmatpush.msra.mxu0 %v1632
    %1653 = vmatmul.f32.gmra.mxu0 %v1635
    %v1654 = vpop.f32.mrf.mxu0
    %v1655 = vadd.f32 0.0, %v1654
    %1656 = vdwg.mxu0
    %v1658 = vsel %vm180, %v1655, 0
    %1660 = vmatpush.msra.mxu0 0.0
    %1661 = vmatpush.msra.mxu0 0.0
    %1662 = vmatpush.msra.mxu0 0.0
    %1663 = vmatpush.msra.mxu0 0.0
    %1664 = vmatpush.msra.mxu0 0.0
    %1665 = vmatpush.msra.mxu0 0.0
    %1666 = vmatpush.msra.mxu0 0.0
    %1667 = vmatpush.msra.mxu0 0.0
    %1668 = vmatpush.msra.mxu0 0.0
    %1669 = vmatpush.msra.mxu0 0.0
    %1670 = vmatpush.msra.mxu0 0.0
    %1671 = vmatpush.msra.mxu0 0.0
    %1672 = vmatpush.msra.mxu0 0.0
    %1673 = vmatpush.msra.mxu0 0.0
    %1674 = vmatpush.msra.mxu0 0.0
    %1675 = vmatpush.msra.mxu0 %v1104
    %1676 = vmatmul.f32.gmra.mxu0 %v1658
    %v1677 = vpop.f32.mrf.mxu0
    %v1678 = vadd.f32 0.0, %v1677
    %1679 = vdwg.mxu0
    %v1681 = vsel %vm180, %v1588, 0
    %1683 = vmatpush.msra.mxu0 0.0
    %1684 = vmatpush.msra.mxu0 0.0
    %1685 = vmatpush.msra.mxu0 0.0
    %1686 = vmatpush.msra.mxu0 0.0
    %1687 = vmatpush.msra.mxu0 0.0
    %1688 = vmatpush.msra.mxu0 0.0
    %1689 = vmatpush.msra.mxu0 0.0
    %1690 = vmatpush.msra.mxu0 0.0
    %1691 = vmatpush.msra.mxu0 0.0
    %1692 = vmatpush.msra.mxu0 0.0
    %1693 = vmatpush.msra.mxu0 0.0
    %1694 = vmatpush.msra.mxu0 0.0
    %1695 = vmatpush.msra.mxu0 0.0
    %1696 = vmatpush.msra.mxu0 0.0
    %1697 = vmatpush.msra.mxu0 0.0
    %1698 = vmatpush.msra.mxu0 %v1103
    %1699 = vmatmul.f32.gmra.mxu0 %v1681
    %v1700 = vpop.f32.mrf.mxu0
    %v1701 = vadd.f32 %v1678, %v1700
    %1702 = vdwg.mxu0
    %1703 = vrot.lane.b32.xlu0 %v1161, 112
    %v1704 = vpop.permute.xlu0 %1703
    %1705 = vrot.lane.b32.xlu0 %v1161, 80
    %v1706 = vpop.permute.xlu0 %1705
    %v1707 = vsel %vm180, %v1704, 0
    %v1709 = vsel %vm180, %v1706, 0
    %1711 = vmatpush.xpose.msra.mxu0 0.0
    %1712 = vmatpush.xpose.msra.mxu0 0.0
    %1713 = vmatpush.xpose.msra.mxu0 0.0
    %1714 = vmatpush.xpose.msra.mxu0 0.0
    %1715 = vmatpush.xpose.msra.mxu0 0.0
    %1716 = vmatpush.xpose.msra.mxu0 0.0
    %1717 = vmatpush.xpose.msra.mxu0 0.0
    %1718 = vmatpush.xpose.msra.mxu0 0.0
    %1719 = vmatpush.xpose.msra.mxu0 0.0
    %1720 = vmatpush.xpose.msra.mxu0 0.0
    %1721 = vmatpush.xpose.msra.mxu0 0.0
    %1722 = vmatpush.xpose.msra.mxu0 0.0
    %1723 = vmatpush.xpose.msra.mxu0 0.0
    %1724 = vmatpush.xpose.msra.mxu0 0.0
    %1725 = vmatpush.xpose.msra.mxu0 0.0
    %1726 = vmatpush.xpose.msra.mxu0 %v1709
    %1727 = vmatmul.f32.gmra.mxu0 %v1707
    %v1728 = vpop.f32.mrf.mxu0
    %v1729 = vadd.f32 0.0, %v1728
    %1730 = vdwg.mxu0
    %v1731 = vmul.f32 %v1729, 0.35355338
    %v1732 = vadd.f32 %v1731, %v569
    %v1733 = vsel %vm180, %v1732, -inf
    %1734 = vmax.xlane.f32.xlu0 %v1733
    %v1735 = vpop.xlane.xlu0 %1734
    %v1736 = vsub.f32 %v1732, %v1735
    %v1737 = vmul.f32 %v1736, 1.442695
    %v1738 = vpow.pop %v1737
    %v1739 = vsel %vm180, %v1738, 0.0
    %1740 = vadd.xlane.f32.xlu0 %v1739
    %v1741 = vpop.xlane.xlu0 %1740
    %v1742 = vrcp.pop %v1741
    %v1743 = vmul.f32 %v1738, %v1742
    %1744 = vrot.lane.b32.xlu0 %v1161, 48
    %v1745 = vpop.permute.xlu0 %1744
    %v1748 = vsel %vm180, %v1743, 0
    %1750 = vmatpush.msra.mxu0 0.0
    %1751 = vmatpush.msra.mxu0 0.0
    %1752 = vmatpush.msra.mxu0 0.0
    %1753 = vmatpush.msra.mxu0 0.0
    %1754 = vmatpush.msra.mxu0 0.0
    %1755 = vmatpush.msra.mxu0 0.0
    %1756 = vmatpush.msra.mxu0 0.0
    %1757 = vmatpush.msra.mxu0 0.0
    %1758 = vmatpush.msra.mxu0 0.0
    %1759 = vmatpush.msra.mxu0 0.0
    %1760 = vmatpush.msra.mxu0 0.0
    %1761 = vmatpush.msra.mxu0 0.0
    %1762 = vmatpush.msra.mxu0 0.0
    %1763 = vmatpush.msra.mxu0 0.0
    %1764 = vmatpush.msra.mxu0 0.0
    %1765 = vmatpush.msra.mxu0 %v1745
    %1766 = vmatmul.f32.gmra.mxu0 %v1748
    %v1767 = vpop.f32.mrf.mxu0
    %v1768 = vadd.f32 0.0, %v1767
    %1769 = vdwg.mxu0
    %v1771 = vsel %vm180, %v1768, 0
    %1773 = vmatpush.msra.mxu0 0.0
    %1774 = vmatpush.msra.mxu0 0.0
    %1775 = vmatpush.msra.mxu0 0.0
    %1776 = vmatpush.msra.mxu0 0.0
    %1777 = vmatpush.msra.mxu0 0.0
    %1778 = vmatpush.msra.mxu0 0.0
    %1779 = vmatpush.msra.mxu0 0.0
    %1780 = vmatpush.msra.mxu0 0.0
    %1781 = vmatpush.msra.mxu0 0.0
    %1782 = vmatpush.msra.mxu0 0.0
    %1783 = vmatpush.msra.mxu0 0.0
    %1784 = vmatpush.msra.mxu0 0.0
    %1785 = vmatpush.msra.mxu0 0.0
    %1786 = vmatpush.msra.mxu0 0.0
    %1787 = vmatpush.msra.mxu0 0.0
    %1788 = vmatpush.msra.mxu0 %v1105
    %1789 = vmatmul.f32.gmra.mxu0 %v1771
    %v1790 = vpop.f32.mrf.mxu0
    %v1791 = vadd.f32 0.0, %v1790
    %1792 = vdwg.mxu0
    %v1793 = vadd.f32 %v1701, %v1791
    %1794 = vrot.lane.b32.xlu0 %v1161, 104
    %v1795 = vpop.permute.xlu0 %1794
    %1796 = vrot.lane.b32.xlu0 %v1161, 72
    %v1797 = vpop.permute.xlu0 %1796
    %v1798 = vsel %vm180, %v1795, 0
    %v1800 = vsel %vm180, %v1797, 0
    %1802 = vmatpush.xpose.msra.mxu0 0.0
    %1803 = vmatpush.xpose.msra.mxu0 0.0
    %1804 = vmatpush.xpose.msra.mxu0 0.0
    %1805 = vmatpush.xpose.msra.mxu0 0.0
    %1806 = vmatpush.xpose.msra.mxu0 0.0
    %1807 = vmatpush.xpose.msra.mxu0 0.0
    %1808 = vmatpush.xpose.msra.mxu0 0.0
    %1809 = vmatpush.xpose.msra.mxu0 0.0
    %1810 = vmatpush.xpose.msra.mxu0 0.0
    %1811 = vmatpush.xpose.msra.mxu0 0.0
    %1812 = vmatpush.xpose.msra.mxu0 0.0
    %1813 = vmatpush.xpose.msra.mxu0 0.0
    %1814 = vmatpush.xpose.msra.mxu0 0.0
    %1815 = vmatpush.xpose.msra.mxu0 0.0
    %1816 = vmatpush.xpose.msra.mxu0 0.0
    %1817 = vmatpush.xpose.msra.mxu0 %v1800
    %1818 = vmatmul.f32.gmra.mxu0 %v1798
    %v1819 = vpop.f32.mrf.mxu0
    %v1820 = vadd.f32 0.0, %v1819
    %1821 = vdwg.mxu0
    %v1822 = vmul.f32 %v1820, 0.35355338
    %v1823 = vadd.f32 %v1822, %v569
    %v1824 = vsel %vm180, %v1823, -inf
    %1825 = vmax.xlane.f32.xlu0 %v1824
    %v1826 = vpop.xlane.xlu0 %1825
    %v1827 = vsub.f32 %v1823, %v1826
    %v1828 = vmul.f32 %v1827, 1.442695
    %v1829 = vpow.pop %v1828
    %v1830 = vsel %vm180, %v1829, 0.0
    %1831 = vadd.xlane.f32.xlu0 %v1830
    %v1832 = vpop.xlane.xlu0 %1831
    %v1833 = vrcp.pop %v1832
    %v1834 = vmul.f32 %v1829, %v1833
    %1835 = vrot.lane.b32.xlu0 %v1161, 40
    %v1836 = vpop.permute.xlu0 %1835
    %v1839 = vsel %vm180, %v1834, 0
    %1841 = vmatpush.msra.mxu0 0.0
    %1842 = vmatpush.msra.mxu0 0.0
    %1843 = vmatpush.msra.mxu0 0.0
    %1844 = vmatpush.msra.mxu0 0.0
    %1845 = vmatpush.msra.mxu0 0.0
    %1846 = vmatpush.msra.mxu0 0.0
    %1847 = vmatpush.msra.mxu0 0.0
    %1848 = vmatpush.msra.mxu0 0.0
    %1849 = vmatpush.msra.mxu0 0.0
    %1850 = vmatpush.msra.mxu0 0.0
    %1851 = vmatpush.msra.mxu0 0.0
    %1852 = vmatpush.msra.mxu0 0.0
    %1853 = vmatpush.msra.mxu0 0.0
    %1854 = vmatpush.msra.mxu0 0.0
    %1855 = vmatpush.msra.mxu0 0.0
    %1856 = vmatpush.msra.mxu0 %v1836
    %1857 = vmatmul.f32.gmra.mxu0 %v1839
    %v1858 = vpop.f32.mrf.mxu0
    %v1859 = vadd.f32 0.0, %v1858
    %1860 = vdwg.mxu0
    %v1862 = vsel %vm180, %v1859, 0
    %1864 = vmatpush.msra.mxu0 0.0
    %1865 = vmatpush.msra.mxu0 0.0
    %1866 = vmatpush.msra.mxu0 0.0
    %1867 = vmatpush.msra.mxu0 0.0
    %1868 = vmatpush.msra.mxu0 0.0
    %1869 = vmatpush.msra.mxu0 0.0
    %1870 = vmatpush.msra.mxu0 0.0
    %1871 = vmatpush.msra.mxu0 0.0
    %1872 = vmatpush.msra.mxu0 0.0
    %1873 = vmatpush.msra.mxu0 0.0
    %1874 = vmatpush.msra.mxu0 0.0
    %1875 = vmatpush.msra.mxu0 0.0
    %1876 = vmatpush.msra.mxu0 0.0
    %1877 = vmatpush.msra.mxu0 0.0
    %1878 = vmatpush.msra.mxu0 0.0
    %1879 = vmatpush.msra.mxu0 %v1106
    %1880 = vmatmul.f32.gmra.mxu0 %v1862
    %v1881 = vpop.f32.mrf.mxu0
    %v1882 = vadd.f32 0.0, %v1881
    %1883 = vdwg.mxu0
    %v1884 = vadd.f32 %v1793, %v1882
    %v1886 = vperm.slane %v1108, 0
    %v1888 = vadd.f32 %v1523, %v1886
    %v1889 = vadd.f32 %v1884, %v1886
    %v1890 = vadd.f32 %v1888, %v1093
    %v1891 = vadd.f32 %v1889, %v1094
    %v1892 = vsel %vm60, %v1890, 0.0
    %1893 = vadd.xlane.f32.xlu0 %v1892
    %v1894 = vpop.xlane.xlu0 %1893
    %v1895 = vsel %vm60, %v1891, 0.0
    %1896 = vadd.xlane.f32.xlu0 %v1895
    %v1897 = vpop.xlane.xlu0 %1896
    %v1898 = vmul.f32 %v1894, %v73
    %v1899 = vmul.f32 %v1897, %v73
    %v1900 = vsub.f32 %v1890, %v1898
    %v1901 = vsub.f32 %v1891, %v1899
    %v1902 = vmul.f32 %v1900, %v1900
    %v1903 = vmul.f32 %v1901, %v1901
    %v1904 = vsel %vm60, %v1902, 0.0
    %1905 = vadd.xlane.f32.xlu0 %v1904
    %v1906 = vpop.xlane.xlu0 %1905
    %v1907 = vsel %vm60, %v1903, 0.0
    %1908 = vadd.xlane.f32.xlu0 %v1907
    %v1909 = vpop.xlane.xlu0 %1908
    %v1910 = vmul.f32 %v1906, %v73
    %v1911 = vmul.f32 %v1909, %v73
    %v1912 = vadd.f32 %v1910, 1e-12
    %v1913 = vadd.f32 %v1911, 1e-12
    %v1914 = vrsqrt.pop %v1912
    %v1915 = vmul.f32 %v1914, %v1912
    %v1916 = vmul.f32 %v1915, %v1914
    %v1917 = vmul.f32 0.5, %v1916
    %v1918 = vsub.f32 1.5, %v1917
    %v1919 = vmul.f32 %v1914, %v1918
    %vm1920 = vweird.f32 %v1912
    %vm1921 = vweird.f32 %v1914
    %vm1922 = vmor %vm1920, %vm1921
    %v1923 = vsel %vm1922, %v1914, %v1919
    %v1924 = vrsqrt.pop %v1913
    %v1925 = vmul.f32 %v1924, %v1913
    %v1926 = vmul.f32 %v1925, %v1924
    %v1927 = vmul.f32 0.5, %v1926
    %v1928 = vsub.f32 1.5, %v1927
    %v1929 = vmul.f32 %v1924, %v1928
    %vm1930 = vweird.f32 %v1913
    %vm1931 = vweird.f32 %v1924
    %vm1932 = vmor %vm1930, %vm1931
    %v1933 = vsel %vm1932, %v1924, %v1929
    %v1934 = vmul.f32 %v1900, %v1923
    %v1935 = vmul.f32 %v1901, %v1933
    %v1936 = vperm.slane %v1110, 0
    %v1937 = vmul.f32 %v1934, %v1936
    %v1938 = vmul.f32 %v1935, %v1936
    %v1939 = vperm.slane %v1110, 1
    %v1940 = vadd.f32 %v1937, %v1939
    %v1941 = vadd.f32 %v1938, %v1939
    %v1943 = vperm.slane %v1117, 0
    %v1946 = vsel %vm60, %v1940, 0
    %v1949 = vsel %vm60, %v1941, 0
    %1951 = vmatpush.msra.mxu0 0.0
    %1952 = vmatpush.msra.mxu0 0.0
    %1953 = vmatpush.msra.mxu0 0.0
    %1954 = vmatpush.msra.mxu0 0.0
    %1955 = vmatpush.msra.mxu0 0.0
    %1956 = vmatpush.msra.mxu0 0.0
    %1957 = vmatpush.msra.mxu0 0.0
    %1958 = vmatpush.msra.mxu0 0.0
    %1959 = vmatpush.msra.mxu0 0.0
    %1960 = vmatpush.msra.mxu0 0.0
    %1961 = vmatpush.msra.mxu0 0.0
    %1962 = vmatpush.msra.mxu0 0.0
    %1963 = vmatpush.msra.mxu0 %v1115
    %1964 = vmatpush.msra.mxu0 %v1114
    %1965 = vmatpush.msra.mxu0 %v1113
    %1966 = vmatpush.msra.mxu0 %v1112
    %1967 = vmatmul.f32.gmra.mxu0 %v1946
    %v1968 = vpop.f32.mrf.mxu0
    %v1969 = vadd.f32 %v1943, %v1968
    %1970 = vmatmul.f32.gmra.mxu0 %v1949
    %v1971 = vpop.f32.mrf.mxu0
    %v1972 = vadd.f32 %v1943, %v1971
    %1973 = vdwg.mxu0
    %v1974 = vmul.f32 %v1969, 0.5
    %v1975 = vmul.f32 %v1972, 0.5
    %v1976 = vmul.f32 %v1969, 0.044715
    %v1977 = vmul.f32 %v1972, 0.044715
    %v1978 = vmul.f32 %v1976, %v1969
    %v1979 = vmul.f32 %v1977, %v1972
    %v1980 = vmul.f32 %v1978, %v1969
    %v1981 = vmul.f32 %v1979, %v1972
    %v1982 = vadd.f32 %v1969, %v1980
    %v1983 = vadd.f32 %v1972, %v1981
    %v1984 = vmul.f32 %v1982, 0.7978846
    %v1985 = vmul.f32 %v1983, 0.7978846
    %v1986 = vtanh.pop %v1984
    %v1987 = vtanh.pop %v1985
    %v1988 = vadd.f32 %v1986, 1.0
    %v1989 = vadd.f32 %v1987, 1.0
    %v1990 = vmul.f32 %v1974, %v1988
    %v1991 = vmul.f32 %v1975, %v1989
    %v1993 = vperm.slane %v1128, 0
    %v1996 = vsel %vm1013, %v1990, 0
    %v1999 = vsel %vm1013, %v1991, 0
    %2001 = vmatpush.msra.mxu0 0.0
    %2002 = vmatpush.msra.mxu0 0.0
    %2003 = vmatpush.msra.mxu0 0.0
    %2004 = vmatpush.msra.mxu0 0.0
    %2005 = vmatpush.msra.mxu0 0.0
    %2006 = vmatpush.msra.mxu0 0.0
    %2007 = vmatpush.msra.mxu0 0.0
    %2008 = vmatpush.msra.mxu0 0.0
    %2009 = vmatpush.msra.mxu0 %v1126
    %2010 = vmatpush.msra.mxu0 %v1125
    %2011 = vmatpush.msra.mxu0 %v1124
    %2012 = vmatpush.msra.mxu0 %v1123
    %2013 = vmatpush.msra.mxu0 %v1122
    %2014 = vmatpush.msra.mxu0 %v1121
    %2015 = vmatpush.msra.mxu0 %v1120
    %2016 = vmatpush.msra.mxu0 %v1119
    %2017 = vmatmul.f32.gmra.mxu0 %v1996
    %v2018 = vpop.f32.mrf.mxu0
    %v2019 = vadd.f32 %v1993, %v2018
    %2020 = vmatmul.f32.gmra.mxu0 %v1999
    %v2021 = vpop.f32.mrf.mxu0
    %v2022 = vadd.f32 %v1993, %v2021
    %2023 = vdwg.mxu0
    %v2024 = vadd.f32 %v2019, %v1940
    %v2025 = vadd.f32 %v2022, %v1941
    %v2026 = vsel %vm60, %v2024, 0.0
    %2027 = vadd.xlane.f32.xlu0 %v2026
    %v2028 = vpop.xlane.xlu0 %2027
    %v2029 = vsel %vm60, %v2025, 0.0
    %2030 = vadd.xlane.f32.xlu0 %v2029
    %v2031 = vpop.xlane.xlu0 %2030
    %v2032 = vmul.f32 %v2028, %v73
    %v2033 = vmul.f32 %v2031, %v73
    %v2034 = vsub.f32 %v2024, %v2032
    %v2035 = vsub.f32 %v2025, %v2033
    %v2036 = vmul.f32 %v2034, %v2034
    %v2037 = vmul.f32 %v2035, %v2035
    %v2038 = vsel %vm60, %v2036, 0.0
    %2039 = vadd.xlane.f32.xlu0 %v2038
    %v2040 = vpop.xlane.xlu0 %2039
    %v2041 = vsel %vm60, %v2037, 0.0
    %2042 = vadd.xlane.f32.xlu0 %v2041
    %v2043 = vpop.xlane.xlu0 %2042
    %v2044 = vmul.f32 %v2040, %v73
    %v2045 = vmul.f32 %v2043, %v73
    %v2046 = vadd.f32 %v2044, 1e-12
    %v2047 = vadd.f32 %v2045, 1e-12
    %v2048 = vrsqrt.pop %v2046
    %v2049 = vmul.f32 %v2048, %v2046
    %v2050 = vmul.f32 %v2049, %v2048
    %v2051 = vmul.f32 0.5, %v2050
    %v2052 = vsub.f32 1.5, %v2051
    %v2053 = vmul.f32 %v2048, %v2052
    %vm2054 = vweird.f32 %v2046
    %vm2055 = vweird.f32 %v2048
    %vm2056 = vmor %vm2054, %vm2055
    %v2057 = vsel %vm2056, %v2048, %v2053
    %v2058 = vrsqrt.pop %v2047
    %v2059 = vmul.f32 %v2058, %v2047
    %v2060 = vmul.f32 %v2059, %v2058
    %v2061 = vmul.f32 0.5, %v2060
    %v2062 = vsub.f32 1.5, %v2061
    %v2063 = vmul.f32 %v2058, %v2062
    %vm2064 = vweird.f32 %v2047
    %vm2065 = vweird.f32 %v2058
    %vm2066 = vmor %vm2064, %vm2065
    %v2067 = vsel %vm2066, %v2058, %v2063
    %v2068 = vmul.f32 %v2034, %v2057
    %v2069 = vmul.f32 %v2035, %v2067
    %v2070 = vperm.slane %v1130, 0
    %v2071 = vmul.f32 %v2068, %v2070
    %v2072 = vmul.f32 %v2069, %v2070
    %v2073 = vperm.slane %v1130, 1
    %v2074 = vadd.f32 %v2071, %v2073
    %v2075 = vadd.f32 %v2072, %v2073
    %v2076 = vld [vmem:[%s13] sm:$0xff]
    %v2077 = vld [vmem:[%s13 + $0x8] sm:$0xff]
    %v2078 = vld [vmem:[%s13 + $0x10] sm:$0xff]
    %v2079 = vld [vmem:[%s13 + $0x18] sm:$0xff]
    %v2080 = vld [vmem:[%s14] sm:$0x1]
    %v2082 = vperm.slane %v2080, 0
    %v2085 = vsel %vm60, %v2074, 0
    %v2088 = vsel %vm60, %v2075, 0
    %2090 = vmatpush.msra.mxu0 0.0
    %2091 = vmatpush.msra.mxu0 0.0
    %2092 = vmatpush.msra.mxu0 0.0
    %2093 = vmatpush.msra.mxu0 0.0
    %2094 = vmatpush.msra.mxu0 0.0
    %2095 = vmatpush.msra.mxu0 0.0
    %2096 = vmatpush.msra.mxu0 0.0
    %2097 = vmatpush.msra.mxu0 0.0
    %2098 = vmatpush.msra.mxu0 0.0
    %2099 = vmatpush.msra.mxu0 0.0
    %2100 = vmatpush.msra.mxu0 0.0
    %2101 = vmatpush.msra.mxu0 0.0
    %2102 = vmatpush.msra.mxu0 %v2079
    %2103 = vmatpush.msra.mxu0 %v2078
    %2104 = vmatpush.msra.mxu0 %v2077
    %2105 = vmatpush.msra.mxu0 %v2076
    %2106 = vmatmul.f32.gmra.mxu0 %v2085
    %v2107 = vpop.f32.mrf.mxu0
    %v2108 = vadd.f32 %v2082, %v2107
    %2109 = vmatmul.f32.gmra.mxu0 %v2088
    %v2110 = vpop.f32.mrf.mxu0
    %v2111 = vadd.f32 %v2082, %v2110
    %2112 = vdwg.mxu0
    %v2113 = vtanh.pop %v2108
    %v2114 = vtanh.pop %v2111
    %v2115 = vld [vmem:[%s15] sm:$0xff]
    %v2116 = vld [vmem:[%s15 + $0x8] sm:$0xff]
    %v2117 = vld [vmem:[%s15 + $0x10] sm:$0xff]
    %v2118 = vld [vmem:[%s15 + $0x18] sm:$0xff]
    %v2119 = vld [vmem:[%s16] sm:$0x1]
    %v2121 = vperm.slane %v2119, 0
    %v2124 = vsel %vm60, %v2113, 0
    %v2127 = vsel %vm60, %v2114, 0
    %2129 = vmatpush.msra.mxu0 0.0
    %2130 = vmatpush.msra.mxu0 0.0
    %2131 = vmatpush.msra.mxu0 0.0
    %2132 = vmatpush.msra.mxu0 0.0
    %2133 = vmatpush.msra.mxu0 0.0
    %2134 = vmatpush.msra.mxu0 0.0
    %2135 = vmatpush.msra.mxu0 0.0
    %2136 = vmatpush.msra.mxu0 0.0
    %2137 = vmatpush.msra.mxu0 0.0
    %2138 = vmatpush.msra.mxu0 0.0
    %2139 = vmatpush.msra.mxu0 0.0
    %2140 = vmatpush.msra.mxu0 0.0
    %2141 = vmatpush.msra.mxu0 %v2118
    %2142 = vmatpush.msra.mxu0 %v2117
    %2143 = vmatpush.msra.mxu0 %v2116
    %2144 = vmatpush.msra.mxu0 %v2115
    %2145 = vmatmul.f32.gmra.mxu0 %v2124
    %v2146 = vpop.f32.mrf.mxu0
    %v2147 = vadd.f32 %v2121, %v2146
    %2148 = vmatmul.f32.gmra.mxu0 %v2127
    %v2149 = vpop.f32.mrf.mxu0
    %v2150 = vadd.f32 %v2121, %v2149
    %2151 = vdwg.mxu0
    %2152 = vst [vmem:[#allocation2] sm:$0x1] %v2147
    %2153 = vst [vmem:[#allocation2 + $0x1] sm:$0x1] %v2150
    // Predicated region
    $region70: #{roberta_classifier_forward.1} parent=1 // pred_check
      _
    $region71: #{roberta_classifier_forward.1} parent=1 // pred_check_branch
      %2155 = sbr.rel (0) target = $region73
    $region72: #{roberta_classifier_forward.1} parent=1 // pred_region
      %2157 = vsyncadd [#allocation3], 0
      %s2159 = sshll.u32 [#allocation2], 4
      %s2160 = int_to_ptr.vmem [resolvable:$true] %s2159
      %s2161 = sshll.u32 %s17, 4
      %s2162 = int_to_ptr.hbm [resolvable:$true] %s2161
      %2164 = dma.vmem_to_hbm [thread:$0]  %s2160, 32, %s2162, [#allocation3]
    $region73: #{roberta_classifier_forward.1} parent=1 // pred_fallthru
      _
    // Predicated region
    $region74: #{roberta_classifier_forward.1} parent=1 // pred_check
      _
    $region75: #{roberta_classifier_forward.1} parent=1 // pred_check_branch
      %2166 = sbr.rel (0) target = $region77
    $region76: #{roberta_classifier_forward.1} parent=1 // pred_region
      %2168 = dma.done [#allocation3], 32
    $region77: #{roberta_classifier_forward.1} parent=1 // pred_fallthru
      _
    %2169 = vsyncpa [#allocation3], 1

</llo_original>
